<compile_context>
chip_gen: v5e
topology: v5e:2x2
jax: 0.10.0
libtpu: 0.0.40
codegen_flags: <defaults>
</compile_context>

<pallas_src>
import math
import numpy as np
import jax
import jax.numpy as jnp
from jax.experimental import pallas as pl
from jax.experimental.pallas import tpu as pltpu

# ------------------------- problem sizes (small demo) ------------------------
B = 2
H = W = 8
N = H * W                       # sequence length (module requires N = H*W)
BN = B * N
C_IN = 16                       # in_features
HID = 32                        # hidden_features
C_OUT = C_IN                    # out_features (module default)
C_PAD = 128                     # lane-dense padded output width
GSZ = 4                         # GroupNorm / grouped-conv channels per group
NTAP = 9                        # 3x3 conv taps
NVEC = 9                        # packed bias / gamma / beta rows
EPS = 1e-5                      # torch GroupNorm default eps

_PREC = jax.lax.Precision.HIGHEST   # fp32 MXU path, per dot

# flat-row shift per tap t = ky*3+kx: output pixel n reads h[n - TAP_SHIFT[t]]
TAP_SHIFT = tuple((1 - (t // 3)) * W + (1 - (t % 3)) for t in range(NTAP))
NCHUNK = (NTAP + 3) // 4        # 4 taps per 128-lane chunk -> 3 chunks (128,128,32)

assert N % 8 == 0 and HID % GSZ == 0 and C_OUT % GSZ == 0


# ----------------------------- in-kernel helpers -----------------------------
def _erf(z):
    # TODO(synk): lax.erf has no guaranteed Mosaic lowering; exact-GELU's erf is
    # evaluated with a float32-accurate erfc rational polynomial (|err| ~ 1e-7).
    a = jnp.abs(z)
    t = 1.0 / (1.0 + 0.5 * a)
    poly = -1.26551223 + t * (1.00002368 + t * (0.37409196 + t * (0.09678418
           + t * (-0.18628806 + t * (0.27886807 + t * (-1.13520398
           + t * (1.48851587 + t * (-0.82215223 + t * 0.17087277))))))))
    erfc_a = t * jnp.exp(-a * a + poly)
    return jnp.where(z >= 0.0, 1.0 - erfc_a, erfc_a - 1.0)


def _gelu_exact(x):
    return 0.5 * x * (1.0 + _erf(x * (1.0 / math.sqrt(2.0))))


def _group_norm(h, avg, gamma, beta):
    # h: (N, C) = one sample.  Per-sample GroupNorm over (spatial, group of 4).
    # Row sums via XLU sublane reductions; the 4-channel group average via one
    # tiny matmul against the block-diagonal averaging matrix (1/(N*GSZ)).
    s1 = jnp.sum(h, axis=0, keepdims=True)                         # (1, C)
    s2 = jnp.sum(h * h, axis=0, keepdims=True)                     # (1, C)
    stats = jnp.concatenate([s1, s2], axis=0)                      # (2, C)
    mm = jnp.dot(stats, avg, preferred_element_type=jnp.float32,
                 precision=_PREC)                                  # (2, C): mean, E[x^2]
    mean = mm[0:1]
    ex2 = mm[1:2]
    inv = jax.lax.rsqrt(ex2 - mean * mean + EPS)                   # biased var (torch GN)
    return (h - mean) * inv * gamma + beta


# ---------------------------------- kernel -----------------------------------
def _mlp_kernel(x_ref, w1_ref, wc_ref, w2_ref, vec_ref, avgh_ref, avgo_ref,
                mask_ref, o_ref):
    x = x_ref[...]                                                 # (N, C_IN)

    vecs = vec_ref[...]                                            # (NVEC, C_PAD)
    b1, g1, be1 = vecs[0:1, :HID], vecs[1:2, :HID], vecs[2:3, :HID]
    bdw, g2, be2 = vecs[3:4, :HID], vecs[4:5, :HID], vecs[5:6, :HID]
    b2, g3, be3 = vecs[6:7, :], vecs[7:8, :], vecs[8:9, :]         # padded to C_PAD
    avg_h = avgh_ref[...]                                          # (HID, HID)
    avg_o = avgo_ref[...]                                          # (C_PAD, C_PAD)

    # fc1 (1x1 conv == channel matmul) + GroupNorm1   (linear=False => no ReLU)
    h = jnp.dot(x, w1_ref[...], preferred_element_type=jnp.float32,
                precision=_PREC) + b1
    h = _group_norm(h, avg_h, g1, be1)

    # grouped 3x3 conv (stride 1, pad 1, groups = HID//GSZ).
    # Per-tap shift = pltpu.roll along sublanes (rows wrapped across the sample
    # are exactly the rows the precomputed edge mask zeroes); 4 taps are packed
    # per 128-lane chunk in registers and contracted with the matching sublane
    # slice of the fused block-diagonal weight, accumulating over chunks.
    acc = None
    for c in range(NCHUNK):
        taps = list(range(c * 4, min(c * 4 + 4, NTAP)))
        pieces = []
        for t in taps:
            s = TAP_SHIFT[t]
            pieces.append(h if s == 0 else pltpu.roll(h, s % N, 0))
        chunk = pieces[0] if len(pieces) == 1 else jnp.concatenate(pieces, axis=1)
        lo = c * 4 * HID
        width = len(taps) * HID
        chunk = chunk * mask_ref[:, lo:lo + width]                 # zero edge / wrapped rows
        part = jnp.dot(chunk, wc_ref[lo:lo + width, :],
                       preferred_element_type=jnp.float32, precision=_PREC)
        acc = part if acc is None else acc + part
    h = acc + bdw                                                  # (N, HID)

    # GroupNorm2 + exact GELU   (Dropout p=0.0 is identity)
    h = _group_norm(h, avg_h, g2, be2)
    h = _gelu_exact(h)

    # fc2 (1x1 conv, zero-padded to C_PAD lanes -> unmasked lane-dense store)
    o = jnp.dot(h, w2_ref[...], preferred_element_type=jnp.float32,
                precision=_PREC) + b2                              # (N, C_PAD)
    o = _group_norm(o, avg_o, g3, be3)                             # padded cols stay 0
    o_ref[...] = o.astype(o_ref.dtype)


# --------------------------------- wrapper -----------------------------------
_FLOPS = 2 * BN * (C_IN * HID + NTAP * HID * HID + HID * C_PAD)
_TRANS = 2 * BN * HID
_BYTES = 4 * (BN * C_IN + C_IN * HID + NTAP * HID * HID + HID * C_PAD
              + NVEC * C_PAD + HID * HID + C_PAD * C_PAD + N * NTAP * HID
              + BN * C_PAD)


def mlp_pallas(x, p):
    xf = x.reshape(BN, C_IN)                                       # channels-last slab
    out = pl.pallas_call(
        _mlp_kernel,
        grid=(B,),                                                 # one sample per step
        in_specs=[
            pl.BlockSpec((N, C_IN), lambda b: (b, 0)),             # x (per sample)
            pl.BlockSpec((C_IN, HID), lambda b: (0, 0)),           # fc1 weight
            pl.BlockSpec((NTAP * HID, HID), lambda b: (0, 0)),     # fused grouped-conv w
            pl.BlockSpec((HID, C_PAD), lambda b: (0, 0)),          # fc2 weight (padded)
            pl.BlockSpec((NVEC, C_PAD), lambda b: (0, 0)),         # packed biases / affines
            pl.BlockSpec((HID, HID), lambda b: (0, 0)),            # GN group-avg (hidden)
            pl.BlockSpec((C_PAD, C_PAD), lambda b: (0, 0)),        # GN group-avg (output)
            pl.BlockSpec((N, NTAP * HID), lambda b: (0, 0)),       # 3x3 edge masks
        ],
        out_specs=pl.BlockSpec((N, C_PAD), lambda b: (b, 0)),
        out_shape=jax.ShapeDtypeStruct((BN, C_PAD), jnp.float32),
        compiler_params=pltpu.CompilerParams(dimension_semantics=("parallel",)),
        cost_estimate=pl.CostEstimate(flops=_FLOPS, transcendentals=_TRANS,
                                      bytes_accessed=_BYTES),
    )(xf, p["w1_mat"], p["wdw_fused"], p["w2_mat_pad"], p["vec_pack"],
      p["avg_h"], p["avg_o"], p["tap_mask"])
    return out.reshape(B, N, C_PAD)[:, :, :C_OUT]


# ----------------------- deterministic parameter setup -----------------------
def _avg_mat_np(c):
    a = np.zeros((c, c), np.float32)
    for i in range(c):
        a[i, (i // GSZ) * GSZ:(i // GSZ) * GSZ + GSZ] = 1.0 / (N * GSZ)
    return a


def make_params(key):
    k1, k2, k3 = jax.random.split(key, 3)
    # torch _init_weights for Conv2d: normal(0, sqrt(2/fan_out)), bias = 0
    w1 = jax.random.normal(k1, (HID, C_IN, 1, 1), jnp.float32) * math.sqrt(2.0 / HID)
    fan_out_dw = 3 * 3 * HID // (HID // GSZ)                       # = 36
    wdw = jax.random.normal(k2, (HID, GSZ, 3, 3), jnp.float32) * math.sqrt(2.0 / fan_out_dw)
    w2 = jax.random.normal(k3, (C_OUT, HID, 1, 1), jnp.float32) * math.sqrt(2.0 / C_OUT)
    b1 = jnp.zeros((HID,), jnp.float32)
    bdw = jnp.zeros((HID,), jnp.float32)
    b2 = jnp.zeros((C_OUT,), jnp.float32)
    gn1_w, gn1_b = jnp.ones((HID,), jnp.float32), jnp.zeros((HID,), jnp.float32)
    gn2_w, gn2_b = jnp.ones((HID,), jnp.float32), jnp.zeros((HID,), jnp.float32)
    gn3_w, gn3_b = jnp.ones((C_OUT,), jnp.float32), jnp.zeros((C_OUT,), jnp.float32)

    # fused block-diagonal grouped-conv weight: row = tap*HID + ci, col = co,
    # nonzero iff group(ci) == group(co)
    wdw_np = np.asarray(wdw)
    wfused = np.zeros((NTAP * HID, HID), np.float32)
    for co in range(HID):
        gidx = co // GSZ
        for cil in range(GSZ):
            ci = gidx * GSZ + cil
            for ky in range(3):
                for kx in range(3):
                    wfused[(ky * 3 + kx) * HID + ci, co] = wdw_np[co, cil, ky, kx]

    # fc2 weight zero-padded to C_PAD output lanes (lane-dense store)
    w2m = np.zeros((HID, C_PAD), np.float32)
    w2m[:, :C_OUT] = np.asarray(w2[:, :, 0, 0]).T

    # 3x3 validity mask per tap, broadcast over HID channels: (N, 9*HID)
    tap_mask = np.zeros((N, NTAP * HID), np.float32)
    for t in range(NTAP):
        dy, dx = 1 - (t // 3), 1 - (t % 3)
        for n in range(N):
            r, c = n // W, n % W
            if 0 <= r - dy < H and 0 <= c - dx < W:
                tap_mask[n, t * HID:(t + 1) * HID] = 1.0

    def _pad_row(v):
        out = np.zeros((C_PAD,), np.float32)
        out[: v.shape[0]] = np.asarray(v)
        return out

    vec_pack = np.stack([
        _pad_row(b1), _pad_row(gn1_w), _pad_row(gn1_b),
        _pad_row(bdw), _pad_row(gn2_w), _pad_row(gn2_b),
        _pad_row(b2), _pad_row(gn3_w), _pad_row(gn3_b)])           # (9, C_PAD)

    return dict(
        w1=w1, b1=b1, wdw=wdw, bdw=bdw, w2=w2, b2=b2,
        gn1_w=gn1_w, gn1_b=gn1_b, gn2_w=gn2_w, gn2_b=gn2_b,
        gn3_w=gn3_w, gn3_b=gn3_b,
        # kernel-ready forms
        w1_mat=jnp.transpose(w1[:, :, 0, 0]),        # (C_IN, HID)
        w2_mat_pad=jnp.asarray(w2m),                 # (HID, C_PAD)
        wdw_fused=jnp.asarray(wfused),               # (9*HID, HID)
        vec_pack=jnp.asarray(vec_pack),              # (9, C_PAD)
        avg_h=jnp.asarray(_avg_mat_np(HID)),         # (HID, HID)
        avg_o=jnp.asarray(_avg_mat_np(C_PAD)),       # (C_PAD, C_PAD)
        tap_mask=jnp.asarray(tap_mask),              # (N, 9*HID)
    )


# --------------------------- pure-JAX reference -------------------------------
def group_norm_ref(x, num_groups, gamma, beta):
    Bb, Nn, Cc = x.shape
    g = x.reshape(Bb, Nn, num_groups, Cc // num_groups)
    mean = g.mean(axis=(1, 3), keepdims=True)
    var = ((g - mean) ** 2).mean(axis=(1, 3), keepdims=True)
    g = (g - mean) * jax.lax.rsqrt(var + EPS)
    return g.reshape(Bb, Nn, Cc) * gamma.reshape(1, 1, Cc) + beta.reshape(1, 1, Cc)


def reference_forward(x, p):
    P = jax.lax.Precision.HIGHEST
    h = jnp.einsum("bnc,oc->bno", x, p["w1"][:, :, 0, 0], precision=P) + p["b1"]
    h = group_norm_ref(h, HID // GSZ, p["gn1_w"], p["gn1_b"])
    h2 = h.reshape(B, H, W, HID)
    h2 = jax.lax.conv_general_dilated(
        h2, jnp.transpose(p["wdw"], (2, 3, 1, 0)),
        window_strides=(1, 1), padding=((1, 1), (1, 1)),
        dimension_numbers=("NHWC", "HWIO", "NHWC"),
        feature_group_count=HID // GSZ, precision=P) + p["bdw"]
    h = h2.reshape(B, N, HID)
    h = group_norm_ref(h, HID // GSZ, p["gn2_w"], p["gn2_b"])
    h = jax.nn.gelu(h, approximate=False)
    o = jnp.einsum("bnc,oc->bno", h, p["w2"][:, :, 0, 0], precision=P) + p["b2"]
    o = group_norm_ref(o, C_OUT // GSZ, p["gn3_w"], p["gn3_b"])
    return o


# ----------------------------------- main -------------------------------------
if __name__ == "__main__":
    key = jax.random.PRNGKey(0)
    kp, kx = jax.random.split(key)
    params = make_params(kp)
    x = jax.random.normal(kx, (B, N, C_IN), jnp.float32)   # (batch, N=H*W, C_IN)

    out = jax.block_until_ready(mlp_pallas(x, params))
    ref = jax.block_until_ready(reference_forward(x, params))

    assert out.shape == (B, N, C_OUT), out.shape
    np.testing.assert_allclose(np.asarray(out), np.asarray(ref), rtol=2e-3, atol=2e-3)
    print("KERNEL_OK")
</pallas_src>

<mosaic_0001>
module attributes {stable_mosaic.version = 11 : i64} {
  func.func @_mlp_kernel(%arg0: i32, %arg1: memref<64x16xf32, #tpu.memory_space<vmem>>, %arg2: memref<16x32xf32, #tpu.memory_space<vmem>>, %arg3: memref<288x32xf32, #tpu.memory_space<vmem>>, %arg4: memref<32x128xf32, #tpu.memory_space<vmem>>, %arg5: memref<9x128xf32, #tpu.memory_space<vmem>>, %arg6: memref<32x32xf32, #tpu.memory_space<vmem>>, %arg7: memref<128x128xf32, #tpu.memory_space<vmem>>, %arg8: memref<64x288xf32, #tpu.memory_space<vmem>>, %arg9: memref<64x128xf32, #tpu.memory_space<vmem>>) attributes {dimension_semantics = [#tpu.dimension_semantics<parallel>], iteration_bounds = array<i64: 2>, scalar_prefetch = 0 : i64, scratch_operands = 0 : i64, tpu.core_type = #tpu.core_type<tc>, window_params = [{transform_indices = @transform_0, window_bounds = array<i64: 64, 16>}, {pipeline_mode = #tpu.pipeline_mode<synchronous>, transform_indices = @transform_1, window_bounds = array<i64: 16, 32>}, {pipeline_mode = #tpu.pipeline_mode<synchronous>, transform_indices = @transform_2, window_bounds = array<i64: 288, 32>}, {pipeline_mode = #tpu.pipeline_mode<synchronous>, transform_indices = @transform_3, window_bounds = array<i64: 32, 128>}, {pipeline_mode = #tpu.pipeline_mode<synchronous>, transform_indices = @transform_4, window_bounds = array<i64: 9, 128>}, {pipeline_mode = #tpu.pipeline_mode<synchronous>, transform_indices = @transform_5, window_bounds = array<i64: 32, 32>}, {pipeline_mode = #tpu.pipeline_mode<synchronous>, transform_indices = @transform_6, window_bounds = array<i64: 128, 128>}, {pipeline_mode = #tpu.pipeline_mode<synchronous>, transform_indices = @transform_7, window_bounds = array<i64: 64, 288>}, {transform_indices = @transform_8, window_bounds = array<i64: 64, 128>}]} {
    %c0 = arith.constant 0 : index
    %c0_0 = arith.constant 0 : index
    %0 = vector.load %arg1[%c0, %c0_0] : memref<64x16xf32, #tpu.memory_space<vmem>>, vector<64x16xf32>
    %c0_1 = arith.constant 0 : index
    %c0_2 = arith.constant 0 : index
    %1 = vector.load %arg5[%c0_1, %c0_2] : memref<9x128xf32, #tpu.memory_space<vmem>>, vector<9x128xf32>
    %2 = vector.extract_strided_slice %1 {offsets = [0, 0], sizes = [1, 32], strides = [1, 1]} : vector<9x128xf32> to vector<1x32xf32>
    %3 = vector.extract_strided_slice %1 {offsets = [1, 0], sizes = [1, 32], strides = [1, 1]} : vector<9x128xf32> to vector<1x32xf32>
    %4 = vector.extract_strided_slice %1 {offsets = [2, 0], sizes = [1, 32], strides = [1, 1]} : vector<9x128xf32> to vector<1x32xf32>
    %5 = vector.extract_strided_slice %1 {offsets = [3, 0], sizes = [1, 32], strides = [1, 1]} : vector<9x128xf32> to vector<1x32xf32>
    %6 = vector.extract_strided_slice %1 {offsets = [4, 0], sizes = [1, 32], strides = [1, 1]} : vector<9x128xf32> to vector<1x32xf32>
    %7 = vector.extract_strided_slice %1 {offsets = [5, 0], sizes = [1, 32], strides = [1, 1]} : vector<9x128xf32> to vector<1x32xf32>
    %8 = vector.extract_strided_slice %1 {offsets = [6, 0], sizes = [1, 128], strides = [1, 1]} : vector<9x128xf32> to vector<1x128xf32>
    %9 = vector.extract_strided_slice %1 {offsets = [7, 0], sizes = [1, 128], strides = [1, 1]} : vector<9x128xf32> to vector<1x128xf32>
    %10 = vector.extract_strided_slice %1 {offsets = [8, 0], sizes = [1, 128], strides = [1, 1]} : vector<9x128xf32> to vector<1x128xf32>
    %c0_3 = arith.constant 0 : index
    %c0_4 = arith.constant 0 : index
    %11 = vector.load %arg6[%c0_3, %c0_4] : memref<32x32xf32, #tpu.memory_space<vmem>>, vector<32x32xf32>
    %c0_5 = arith.constant 0 : index
    %c0_6 = arith.constant 0 : index
    %12 = vector.load %arg7[%c0_5, %c0_6] : memref<128x128xf32, #tpu.memory_space<vmem>>, vector<128x128xf32>
    %c0_7 = arith.constant 0 : index
    %c0_8 = arith.constant 0 : index
    %13 = vector.load %arg2[%c0_7, %c0_8] : memref<16x32xf32, #tpu.memory_space<vmem>>, vector<16x32xf32>
    %cst = arith.constant dense<0.000000e+00> : vector<64x32xf32>
    %14 = tpu.matmul %0, %13, %cst {dimension_numbers = #tpu.dot_dimension_numbers<[1], [0], [0], [1], [0, 0, 1, 1], [], []>, precision = #tpu.contract_precision<fp32>} : vector<64x16xf32>, vector<16x32xf32>, vector<64x32xf32> -> vector<64x32xf32>
    %15 = vector.broadcast %2 : vector<1x32xf32> to vector<64x32xf32>
    %16 = arith.addf %14, %15 : vector<64x32xf32>
    %cst_9 = arith.constant dense<0.000000e+00> : vector<32xf32>
    %17 = vector.multi_reduction <add>, %16, %cst_9 [0] : vector<64x32xf32> to vector<32xf32>
    %18 = vector.shape_cast %17 : vector<32xf32> to vector<1x32xf32>
    %19 = arith.mulf %16, %16 : vector<64x32xf32>
    %cst_10 = arith.constant dense<0.000000e+00> : vector<32xf32>
    %20 = vector.multi_reduction <add>, %19, %cst_10 [0] : vector<64x32xf32> to vector<32xf32>
    %21 = vector.shape_cast %20 : vector<32xf32> to vector<1x32xf32>
    %22 = tpu.concatenate %18, %21 in 0 : vector<1x32xf32>, vector<1x32xf32> -> vector<2x32xf32>
    %cst_11 = arith.constant dense<0.000000e+00> : vector<2x32xf32>
    %23 = tpu.matmul %22, %11, %cst_11 {dimension_numbers = #tpu.dot_dimension_numbers<[1], [0], [0], [1], [0, 0, 1, 1], [], []>, precision = #tpu.contract_precision<fp32>} : vector<2x32xf32>, vector<32x32xf32>, vector<2x32xf32> -> vector<2x32xf32>
    %24 = vector.extract_strided_slice %23 {offsets = [0, 0], sizes = [1, 32], strides = [1, 1]} : vector<2x32xf32> to vector<1x32xf32>
    %25 = vector.extract_strided_slice %23 {offsets = [1, 0], sizes = [1, 32], strides = [1, 1]} : vector<2x32xf32> to vector<1x32xf32>
    %26 = arith.mulf %24, %24 : vector<1x32xf32>
    %27 = arith.subf %25, %26 : vector<1x32xf32>
    %cst_12 = arith.constant 9.99999974E-6 : f32
    %28 = vector.broadcast %cst_12 : f32 to vector<1x32xf32>
    %29 = arith.addf %27, %28 : vector<1x32xf32>
    %30 = math.rsqrt %29 : vector<1x32xf32>
    %31 = vector.broadcast %24 : vector<1x32xf32> to vector<64x32xf32>
    %32 = arith.subf %16, %31 : vector<64x32xf32>
    %33 = vector.broadcast %30 : vector<1x32xf32> to vector<64x32xf32>
    %34 = arith.mulf %32, %33 : vector<64x32xf32>
    %35 = vector.broadcast %3 : vector<1x32xf32> to vector<64x32xf32>
    %36 = arith.mulf %34, %35 : vector<64x32xf32>
    %37 = vector.broadcast %4 : vector<1x32xf32> to vector<64x32xf32>
    %38 = arith.addf %36, %37 : vector<64x32xf32>
    %c9_i32 = arith.constant 9 : i32
    %39 = tpu.dynamic_rotate %38 by %c9_i32 dim 0 : vector<64x32xf32>, i32 -> vector<64x32xf32>
    %c8_i32 = arith.constant 8 : i32
    %40 = tpu.dynamic_rotate %38 by %c8_i32 dim 0 : vector<64x32xf32>, i32 -> vector<64x32xf32>
    %c7_i32 = arith.constant 7 : i32
    %41 = tpu.dynamic_rotate %38 by %c7_i32 dim 0 : vector<64x32xf32>, i32 -> vector<64x32xf32>
    %c1_i32 = arith.constant 1 : i32
    %42 = tpu.dynamic_rotate %38 by %c1_i32 dim 0 : vector<64x32xf32>, i32 -> vector<64x32xf32>
    %43 = tpu.concatenate %39, %40, %41, %42 in 1 : vector<64x32xf32>, vector<64x32xf32>, vector<64x32xf32>, vector<64x32xf32> -> vector<64x128xf32>
    %c0_13 = arith.constant 0 : index
    %c0_14 = arith.constant 0 : index
    %44 = vector.load %arg8[%c0_13, %c0_14] : memref<64x288xf32, #tpu.memory_space<vmem>>, vector<64x128xf32>
    %45 = arith.mulf %43, %44 : vector<64x128xf32>
    %c0_15 = arith.constant 0 : index
    %c0_16 = arith.constant 0 : index
    %46 = vector.load %arg3[%c0_15, %c0_16] : memref<288x32xf32, #tpu.memory_space<vmem>>, vector<128x32xf32>
    %cst_17 = arith.constant dense<0.000000e+00> : vector<64x32xf32>
    %47 = tpu.matmul %45, %46, %cst_17 {dimension_numbers = #tpu.dot_dimension_numbers<[1], [0], [0], [1], [0, 0, 1, 1], [], []>, precision = #tpu.contract_precision<fp32>} : vector<64x128xf32>, vector<128x32xf32>, vector<64x32xf32> -> vector<64x32xf32>
    %c63_i32 = arith.constant 63 : i32
    %48 = tpu.dynamic_rotate %38 by %c63_i32 dim 0 : vector<64x32xf32>, i32 -> vector<64x32xf32>
    %c57_i32 = arith.constant 57 : i32
    %49 = tpu.dynamic_rotate %38 by %c57_i32 dim 0 : vector<64x32xf32>, i32 -> vector<64x32xf32>
    %c56_i32 = arith.constant 56 : i32
    %50 = tpu.dynamic_rotate %38 by %c56_i32 dim 0 : vector<64x32xf32>, i32 -> vector<64x32xf32>
    %51 = tpu.concatenate %38, %48, %49, %50 in 1 : vector<64x32xf32>, vector<64x32xf32>, vector<64x32xf32>, vector<64x32xf32> -> vector<64x128xf32>
    %c0_18 = arith.constant 0 : index
    %c128 = arith.constant 128 : index
    %52 = vector.load %arg8[%c0_18, %c128] : memref<64x288xf32, #tpu.memory_space<vmem>>, vector<64x128xf32>
    %53 = arith.mulf %51, %52 : vector<64x128xf32>
    %c128_19 = arith.constant 128 : index
    %c0_20 = arith.constant 0 : index
    %54 = vector.load %arg3[%c128_19, %c0_20] : memref<288x32xf32, #tpu.memory_space<vmem>>, vector<128x32xf32>
    %cst_21 = arith.constant dense<0.000000e+00> : vector<64x32xf32>
    %55 = tpu.matmul %53, %54, %cst_21 {dimension_numbers = #tpu.dot_dimension_numbers<[1], [0], [0], [1], [0, 0, 1, 1], [], []>, precision = #tpu.contract_precision<fp32>} : vector<64x128xf32>, vector<128x32xf32>, vector<64x32xf32> -> vector<64x32xf32>
    %56 = arith.addf %47, %55 : vector<64x32xf32>
    %c55_i32 = arith.constant 55 : i32
    %57 = tpu.dynamic_rotate %38 by %c55_i32 dim 0 : vector<64x32xf32>, i32 -> vector<64x32xf32>
    %c0_22 = arith.constant 0 : index
    %c256 = arith.constant 256 : index
    %58 = vector.load %arg8[%c0_22, %c256] : memref<64x288xf32, #tpu.memory_space<vmem>>, vector<64x32xf32>
    %59 = arith.mulf %57, %58 : vector<64x32xf32>
    %c256_23 = arith.constant 256 : index
    %c0_24 = arith.constant 0 : index
    %60 = vector.load %arg3[%c256_23, %c0_24] : memref<288x32xf32, #tpu.memory_space<vmem>>, vector<32x32xf32>
    %cst_25 = arith.constant dense<0.000000e+00> : vector<64x32xf32>
    %61 = tpu.matmul %59, %60, %cst_25 {dimension_numbers = #tpu.dot_dimension_numbers<[1], [0], [0], [1], [0, 0, 1, 1], [], []>, precision = #tpu.contract_precision<fp32>} : vector<64x32xf32>, vector<32x32xf32>, vector<64x32xf32> -> vector<64x32xf32>
    %62 = arith.addf %56, %61 : vector<64x32xf32>
    %63 = vector.broadcast %5 : vector<1x32xf32> to vector<64x32xf32>
    %64 = arith.addf %62, %63 : vector<64x32xf32>
    %cst_26 = arith.constant dense<0.000000e+00> : vector<32xf32>
    %65 = vector.multi_reduction <add>, %64, %cst_26 [0] : vector<64x32xf32> to vector<32xf32>
    %66 = vector.shape_cast %65 : vector<32xf32> to vector<1x32xf32>
    %67 = arith.mulf %64, %64 : vector<64x32xf32>
    %cst_27 = arith.constant dense<0.000000e+00> : vector<32xf32>
    %68 = vector.multi_reduction <add>, %67, %cst_27 [0] : vector<64x32xf32> to vector<32xf32>
    %69 = vector.shape_cast %68 : vector<32xf32> to vector<1x32xf32>
    %70 = tpu.concatenate %66, %69 in 0 : vector<1x32xf32>, vector<1x32xf32> -> vector<2x32xf32>
    %cst_28 = arith.constant dense<0.000000e+00> : vector<2x32xf32>
    %71 = tpu.matmul %70, %11, %cst_28 {dimension_numbers = #tpu.dot_dimension_numbers<[1], [0], [0], [1], [0, 0, 1, 1], [], []>, precision = #tpu.contract_precision<fp32>} : vector<2x32xf32>, vector<32x32xf32>, vector<2x32xf32> -> vector<2x32xf32>
    %72 = vector.extract_strided_slice %71 {offsets = [0, 0], sizes = [1, 32], strides = [1, 1]} : vector<2x32xf32> to vector<1x32xf32>
    %73 = vector.extract_strided_slice %71 {offsets = [1, 0], sizes = [1, 32], strides = [1, 1]} : vector<2x32xf32> to vector<1x32xf32>
    %74 = arith.mulf %72, %72 : vector<1x32xf32>
    %75 = arith.subf %73, %74 : vector<1x32xf32>
    %cst_29 = arith.constant 9.99999974E-6 : f32
    %76 = vector.broadcast %cst_29 : f32 to vector<1x32xf32>
    %77 = arith.addf %75, %76 : vector<1x32xf32>
    %78 = math.rsqrt %77 : vector<1x32xf32>
    %79 = vector.broadcast %72 : vector<1x32xf32> to vector<64x32xf32>
    %80 = arith.subf %64, %79 : vector<64x32xf32>
    %81 = vector.broadcast %78 : vector<1x32xf32> to vector<64x32xf32>
    %82 = arith.mulf %80, %81 : vector<64x32xf32>
    %83 = vector.broadcast %6 : vector<1x32xf32> to vector<64x32xf32>
    %84 = arith.mulf %82, %83 : vector<64x32xf32>
    %85 = vector.broadcast %7 : vector<1x32xf32> to vector<64x32xf32>
    %86 = arith.addf %84, %85 : vector<64x32xf32>
    %cst_30 = arith.constant 5.000000e-01 : f32
    %87 = vector.broadcast %cst_30 : f32 to vector<64x32xf32>
    %88 = arith.mulf %87, %86 : vector<64x32xf32>
    %cst_31 = arith.constant 0.707106769 : f32
    %89 = vector.broadcast %cst_31 : f32 to vector<64x32xf32>
    %90 = arith.mulf %86, %89 : vector<64x32xf32>
    %91 = math.absf %90 : vector<64x32xf32>
    %cst_32 = arith.constant 5.000000e-01 : f32
    %92 = vector.broadcast %cst_32 : f32 to vector<64x32xf32>
    %93 = arith.mulf %92, %91 : vector<64x32xf32>
    %cst_33 = arith.constant 1.000000e+00 : f32
    %94 = vector.broadcast %cst_33 : f32 to vector<64x32xf32>
    %95 = arith.addf %94, %93 : vector<64x32xf32>
    %cst_34 = arith.constant 1.000000e+00 : f32
    %96 = vector.broadcast %cst_34 : f32 to vector<64x32xf32>
    %97 = arith.divf %96, %95 : vector<64x32xf32>
    %cst_35 = arith.constant 0.170872763 : f32
    %98 = vector.broadcast %cst_35 : f32 to vector<64x32xf32>
    %99 = arith.mulf %97, %98 : vector<64x32xf32>
    %cst_36 = arith.constant -0.822152256 : f32
    %100 = vector.broadcast %cst_36 : f32 to vector<64x32xf32>
    %101 = arith.addf %100, %99 : vector<64x32xf32>
    %102 = arith.mulf %97, %101 : vector<64x32xf32>
    %cst_37 = arith.constant 1.48851585 : f32
    %103 = vector.broadcast %cst_37 : f32 to vector<64x32xf32>
    %104 = arith.addf %103, %102 : vector<64x32xf32>
    %105 = arith.mulf %97, %104 : vector<64x32xf32>
    %cst_38 = arith.constant -1.13520396 : f32
    %106 = vector.broadcast %cst_38 : f32 to vector<64x32xf32>
    %107 = arith.addf %106, %105 : vector<64x32xf32>
    %108 = arith.mulf %97, %107 : vector<64x32xf32>
    %cst_39 = arith.constant 0.278868079 : f32
    %109 = vector.broadcast %cst_39 : f32 to vector<64x32xf32>
    %110 = arith.addf %109, %108 : vector<64x32xf32>
    %111 = arith.mulf %97, %110 : vector<64x32xf32>
    %cst_40 = arith.constant -0.186288059 : f32
    %112 = vector.broadcast %cst_40 : f32 to vector<64x32xf32>
    %113 = arith.addf %112, %111 : vector<64x32xf32>
    %114 = arith.mulf %97, %113 : vector<64x32xf32>
    %cst_41 = arith.constant 0.0967841818 : f32
    %115 = vector.broadcast %cst_41 : f32 to vector<64x32xf32>
    %116 = arith.addf %115, %114 : vector<64x32xf32>
    %117 = arith.mulf %97, %116 : vector<64x32xf32>
    %cst_42 = arith.constant 0.374091953 : f32
    %118 = vector.broadcast %cst_42 : f32 to vector<64x32xf32>
    %119 = arith.addf %118, %117 : vector<64x32xf32>
    %120 = arith.mulf %97, %119 : vector<64x32xf32>
    %cst_43 = arith.constant 1.00002372 : f32
    %121 = vector.broadcast %cst_43 : f32 to vector<64x32xf32>
    %122 = arith.addf %121, %120 : vector<64x32xf32>
    %123 = arith.mulf %97, %122 : vector<64x32xf32>
    %cst_44 = arith.constant -1.26551223 : f32
    %124 = vector.broadcast %cst_44 : f32 to vector<64x32xf32>
    %125 = arith.addf %124, %123 : vector<64x32xf32>
    %cst_45 = arith.constant 0.000000e+00 : f32
    %126 = vector.broadcast %cst_45 : f32 to vector<64x32xf32>
    %127 = arith.subf %126, %91 : vector<64x32xf32>
    %128 = arith.mulf %127, %91 : vector<64x32xf32>
    %129 = arith.addf %128, %125 : vector<64x32xf32>
    %130 = math.exp %129 : vector<64x32xf32>
    %131 = arith.mulf %97, %130 : vector<64x32xf32>
    %cst_46 = arith.constant 0.000000e+00 : f32
    %132 = vector.broadcast %cst_46 : f32 to vector<64x32xf32>
    %133 = arith.cmpf oge, %90, %132 : vector<64x32xf32>
    %cst_47 = arith.constant 1.000000e+00 : f32
    %134 = vector.broadcast %cst_47 : f32 to vector<64x32xf32>
    %135 = arith.subf %134, %131 : vector<64x32xf32>
    %cst_48 = arith.constant 1.000000e+00 : f32
    %136 = vector.broadcast %cst_48 : f32 to vector<64x32xf32>
    %137 = arith.subf %131, %136 : vector<64x32xf32>
    %138 = arith.select %133, %135, %137 : vector<64x32xi1>, vector<64x32xf32>
    %cst_49 = arith.constant 1.000000e+00 : f32
    %139 = vector.broadcast %cst_49 : f32 to vector<64x32xf32>
    %140 = arith.addf %139, %138 : vector<64x32xf32>
    %141 = arith.mulf %88, %140 : vector<64x32xf32>
    %c0_50 = arith.constant 0 : index
    %c0_51 = arith.constant 0 : index
    %142 = vector.load %arg4[%c0_50, %c0_51] : memref<32x128xf32, #tpu.memory_space<vmem>>, vector<32x128xf32>
    %cst_52 = arith.constant dense<0.000000e+00> : vector<64x128xf32>
    %143 = tpu.matmul %141, %142, %cst_52 {dimension_numbers = #tpu.dot_dimension_numbers<[1], [0], [0], [1], [0, 0, 1, 1], [], []>, precision = #tpu.contract_precision<fp32>} : vector<64x32xf32>, vector<32x128xf32>, vector<64x128xf32> -> vector<64x128xf32>
    %144 = vector.broadcast %8 : vector<1x128xf32> to vector<64x128xf32>
    %145 = arith.addf %143, %144 : vector<64x128xf32>
    %cst_53 = arith.constant dense<0.000000e+00> : vector<128xf32>
    %146 = vector.multi_reduction <add>, %145, %cst_53 [0] : vector<64x128xf32> to vector<128xf32>
    %147 = vector.shape_cast %146 : vector<128xf32> to vector<1x128xf32>
    %148 = arith.mulf %145, %145 : vector<64x128xf32>
    %cst_54 = arith.constant dense<0.000000e+00> : vector<128xf32>
    %149 = vector.multi_reduction <add>, %148, %cst_54 [0] : vector<64x128xf32> to vector<128xf32>
    %150 = vector.shape_cast %149 : vector<128xf32> to vector<1x128xf32>
    %151 = tpu.concatenate %147, %150 in 0 : vector<1x128xf32>, vector<1x128xf32> -> vector<2x128xf32>
    %cst_55 = arith.constant dense<0.000000e+00> : vector<2x128xf32>
    %152 = tpu.matmul %151, %12, %cst_55 {dimension_numbers = #tpu.dot_dimension_numbers<[1], [0], [0], [1], [0, 0, 1, 1], [], []>, precision = #tpu.contract_precision<fp32>} : vector<2x128xf32>, vector<128x128xf32>, vector<2x128xf32> -> vector<2x128xf32>
    %153 = vector.extract_strided_slice %152 {offsets = [0, 0], sizes = [1, 128], strides = [1, 1]} : vector<2x128xf32> to vector<1x128xf32>
    %154 = vector.extract_strided_slice %152 {offsets = [1, 0], sizes = [1, 128], strides = [1, 1]} : vector<2x128xf32> to vector<1x128xf32>
    %155 = arith.mulf %153, %153 : vector<1x128xf32>
    %156 = arith.subf %154, %155 : vector<1x128xf32>
    %cst_56 = arith.constant 9.99999974E-6 : f32
    %157 = vector.broadcast %cst_56 : f32 to vector<1x128xf32>
    %158 = arith.addf %156, %157 : vector<1x128xf32>
    %159 = math.rsqrt %158 : vector<1x128xf32>
    %160 = vector.broadcast %153 : vector<1x128xf32> to vector<64x128xf32>
    %161 = arith.subf %145, %160 : vector<64x128xf32>
    %162 = vector.broadcast %159 : vector<1x128xf32> to vector<64x128xf32>
    %163 = arith.mulf %161, %162 : vector<64x128xf32>
    %164 = vector.broadcast %9 : vector<1x128xf32> to vector<64x128xf32>
    %165 = arith.mulf %163, %164 : vector<64x128xf32>
    %166 = vector.broadcast %10 : vector<1x128xf32> to vector<64x128xf32>
    %167 = arith.addf %165, %166 : vector<64x128xf32>
    %c0_57 = arith.constant 0 : index
    %c0_58 = arith.constant 0 : index
    %168 = vector.load %arg9[%c0_57, %c0_58] : memref<64x128xf32, #tpu.memory_space<vmem>>, vector<64x128xf32>
    tpu.vector_store %arg9[%c0_57, %c0_58], %167 {strides = array<i32>} : memref<64x128xf32, #tpu.memory_space<vmem>>, vector<64x128xf32>,
    return
  }
  func.func @transform_0(%arg0: i32) -> (i32, i32) {
    %c0_i32 = arith.constant 0 : i32
    %c0_i32_0 = arith.constant 0 : i32
    return %arg0, %c0_i32 : i32, i32
  }
  func.func @transform_1(%arg0: i32) -> (i32, i32) {
    %c0_i32 = arith.constant 0 : i32
    %c0_i32_0 = arith.constant 0 : i32
    %c0_i32_1 = arith.constant 0 : i32
    return %c0_i32, %c0_i32_0 : i32, i32
  }
  func.func @transform_2(%arg0: i32) -> (i32, i32) {
    %c0_i32 = arith.constant 0 : i32
    %c0_i32_0 = arith.constant 0 : i32
    %c0_i32_1 = arith.constant 0 : i32
    return %c0_i32, %c0_i32_0 : i32, i32
  }
  func.func @transform_3(%arg0: i32) -> (i32, i32) {
    %c0_i32 = arith.constant 0 : i32
    %c0_i32_0 = arith.constant 0 : i32
    %c0_i32_1 = arith.constant 0 : i32
    return %c0_i32, %c0_i32_0 : i32, i32
  }
  func.func @transform_4(%arg0: i32) -> (i32, i32) {
    %c0_i32 = arith.constant 0 : i32
    %c0_i32_0 = arith.constant 0 : i32
    %c0_i32_1 = arith.constant 0 : i32
    return %c0_i32, %c0_i32_0 : i32, i32
  }
  func.func @transform_5(%arg0: i32) -> (i32, i32) {
    %c0_i32 = arith.constant 0 : i32
    %c0_i32_0 = arith.constant 0 : i32
    %c0_i32_1 = arith.constant 0 : i32
    return %c0_i32, %c0_i32_0 : i32, i32
  }
  func.func @transform_6(%arg0: i32) -> (i32, i32) {
    %c0_i32 = arith.constant 0 : i32
    %c0_i32_0 = arith.constant 0 : i32
    %c0_i32_1 = arith.constant 0 : i32
    return %c0_i32, %c0_i32_0 : i32, i32
  }
  func.func @transform_7(%arg0: i32) -> (i32, i32) {
    %c0_i32 = arith.constant 0 : i32
    %c0_i32_0 = arith.constant 0 : i32
    %c0_i32_1 = arith.constant 0 : i32
    return %c0_i32, %c0_i32_0 : i32, i32
  }
  func.func @transform_8(%arg0: i32) -> (i32, i32) {
    %c0_i32 = arith.constant 0 : i32
    %c0_i32_0 = arith.constant 0 : i32
    return %arg0, %c0_i32 : i32, i32
  }
}

</mosaic_0001>

<llo_original>
// kernel: tpu_custom_call.1
$region0: #{tpu_custom_call.1}
  #allocation0 [shape = 'u32[]', space=smem, size = 0x4, offset = 0x4, fixed_abs, tag = 'smem constant byte address 0x4 - core index']
  #allocation1 [shape = 'u32[72,128]{1,0:T(1,128)}', space=vmem, size = 0x9000, scoped, tag = 'internal scratch']
  %s0 = inlined_call_operand.vmem [shape: f32[128,16], index: 0, kind: input, shape index: {}]
  %s1 = inlined_call_operand.vmem [shape: f32[16,32], index: 1, kind: input, shape index: {}]
  %s2 = inlined_call_operand.vmem [shape: f32[288,32], index: 2, kind: input, shape index: {}]
  %s3 = inlined_call_operand.vmem [shape: f32[32,128], index: 3, kind: input, shape index: {}]
  %s4 = inlined_call_operand.vmem [shape: f32[9,128], index: 4, kind: input, shape index: {}]
  %s5 = inlined_call_operand.vmem [shape: f32[32,32], index: 5, kind: input, shape index: {}]
  %s6 = inlined_call_operand.vmem [shape: f32[128,128], index: 6, kind: input, shape index: {}]
  %s7 = inlined_call_operand.vmem [shape: f32[64,288], index: 7, kind: input, shape index: {}]
  %s8 = inlined_call_operand.hbm [shape: f32[128,128], index: 8, kind: output, shape index: {}]
  %s9 = sld [smem:[#allocation0]]
  $region65: #{tpu_custom_call.1} parent=0
    _
  %s11 = ssub.s32 1, %s9
  %s12 = scalar_select 0, %s11, %s9
  $region1: #{tpu_custom_call.1} parent=0
    #allocation2 [shape = 'u8[65536]{0}', space=vmem, size = 0x10000, scoped, tag = 'output window, operand 0']
    #allocation3 [shape = 's32[2]{0}', space=sflag, size = 0x8, scoped, tag = 'scoped memory for tpu_custom_call.1']
    %13 = vsyncpa [#allocation3], 0
    %s14 = scalar_lea.sflag [#allocation3], 1
    %15 = vsyncpa %s14, 0
    loop: start=0, step=1, limit=4
    $region2: #{tpu_custom_call.1} parent=1 // loop_pre_header
      _
    $region3: #{tpu_custom_call.1} parent=1 // loop_header
      %s17 = sphi 0, %s21
      %p18 = scmp.ge.s32.totalorder %s17, 4
      %s27 = sphi 0, %s29
      %s30 = sphi 0, %s27
      %s31 = sphi 0, %s30
      %s47 = sphi 0, %s31
      %s51 = sphi 0, %s51
      %s53 = sphi 0, %s51
      %s54 = sphi 0, %s53
      %s68 = sphi 0, %s54
      %s72 = sphi 0, %s72
      %s74 = sphi 0, %s72
      %s75 = sphi 0, %s74
      %s89 = sphi 0, %s75
      %s93 = sphi 0, %s93
      %s95 = sphi 0, %s93
      %s96 = sphi 0, %s95
      %s110 = sphi 0, %s96
      %s114 = sphi 0, %s114
      %s116 = sphi 0, %s114
      %s117 = sphi 0, %s116
      %s131 = sphi 0, %s117
      %s135 = sphi 0, %s135
      %s137 = sphi 0, %s135
      %s138 = sphi 0, %s137
      %s152 = sphi 0, %s138
      %s156 = sphi 0, %s156
      %s158 = sphi 0, %s156
      %s159 = sphi 0, %s158
      %s173 = sphi 0, %s159
      %s177 = sphi 0, %s177
      %s179 = sphi 0, %s177
      %s180 = sphi 0, %s179
      %s194 = sphi 0, %s180
      %s200 = sphi 0, %s202
      %s203 = sphi 0, %s200
      %s204 = sphi 0, %s203
      %s220 = sphi 0, %s204
    $region4: #{tpu_custom_call.1} parent=1 // loop_header_branch
      %20 = sbr.rel (%p18) target = $region8
    $region5: #{tpu_custom_call.1} parent=1 // loop_body
      %s22 = ssub.s32 %s17, 1
      %s23 = ssub.s32 %s17, 2
      %s24 = sadd.s32 %s17, 1
      %s25 = ssub.s32 %s17, %s24
      %p26 = scmp.eq.s32.totalorder %s25, 0
      %s28 = sadd.s32 %s27, 1
      %s29 = scalar_select %p26, %s27, %s28
      %p32 = pneg %p26
      %p33 = scmp.eq.s32.totalorder %s17, 1
      %p34 = por %p32, %p33
      %p35 = scmp.ne.s32.totalorder %s27, %s30
      %p36 = scmp.eq.s32.totalorder %s17, 0
      %p37 = por %p35, %p36
      %p38 = scmp.ne.s32.totalorder %s27, %s30
      %p39 = scmp.eq.s32.totalorder %s22, 1
      %p40 = por %p38, %p39
      %p41 = scmp.ne.s32.totalorder %s30, %s31
      %p42 = scmp.eq.s32.totalorder %s22, 0
      %p43 = por %p41, %p42
      %p44 = scmp.ne.s32.totalorder %s30, %s31
      %p45 = scmp.eq.s32.totalorder %s23, 1
      %p46 = por %p44, %p45
      %p48 = scmp.ne.s32.totalorder %s31, %s47
      %p49 = scmp.eq.s32.totalorder %s23, 0
      %p50 = por %p48, %p49
      %s52 = sadd.s32 %s51, 1
      %p55 = scmp.eq.s32.totalorder %s17, 1
      %p56 = scmp.ne.s32.totalorder %s51, %s53
      %p57 = scmp.eq.s32.totalorder %s17, 0
      %p58 = por %p56, %p57
      %p59 = scmp.ne.s32.totalorder %s51, %s53
      %p60 = scmp.eq.s32.totalorder %s22, 1
      %p61 = por %p59, %p60
      %p62 = scmp.ne.s32.totalorder %s53, %s54
      %p63 = scmp.eq.s32.totalorder %s22, 0
      %p64 = por %p62, %p63
      %p65 = scmp.ne.s32.totalorder %s53, %s54
      %p66 = scmp.eq.s32.totalorder %s23, 1
      %p67 = por %p65, %p66
      %p69 = scmp.ne.s32.totalorder %s54, %s68
      %p70 = scmp.eq.s32.totalorder %s23, 0
      %p71 = por %p69, %p70
      %s73 = sadd.s32 %s72, 1
      %p76 = scmp.eq.s32.totalorder %s17, 1
      %p77 = scmp.ne.s32.totalorder %s72, %s74
      %p78 = scmp.eq.s32.totalorder %s17, 0
      %p79 = por %p77, %p78
      %p80 = scmp.ne.s32.totalorder %s72, %s74
      %p81 = scmp.eq.s32.totalorder %s22, 1
      %p82 = por %p80, %p81
      %p83 = scmp.ne.s32.totalorder %s74, %s75
      %p84 = scmp.eq.s32.totalorder %s22, 0
      %p85 = por %p83, %p84
      %p86 = scmp.ne.s32.totalorder %s74, %s75
      %p87 = scmp.eq.s32.totalorder %s23, 1
      %p88 = por %p86, %p87
      %p90 = scmp.ne.s32.totalorder %s75, %s89
      %p91 = scmp.eq.s32.totalorder %s23, 0
      %p92 = por %p90, %p91
      %s94 = sadd.s32 %s93, 1
      %p97 = scmp.eq.s32.totalorder %s17, 1
      %p98 = scmp.ne.s32.totalorder %s93, %s95
      %p99 = scmp.eq.s32.totalorder %s17, 0
      %p100 = por %p98, %p99
      %p101 = scmp.ne.s32.totalorder %s93, %s95
      %p102 = scmp.eq.s32.totalorder %s22, 1
      %p103 = por %p101, %p102
      %p104 = scmp.ne.s32.totalorder %s95, %s96
      %p105 = scmp.eq.s32.totalorder %s22, 0
      %p106 = por %p104, %p105
      %p107 = scmp.ne.s32.totalorder %s95, %s96
      %p108 = scmp.eq.s32.totalorder %s23, 1
      %p109 = por %p107, %p108
      %p111 = scmp.ne.s32.totalorder %s96, %s110
      %p112 = scmp.eq.s32.totalorder %s23, 0
      %p113 = por %p111, %p112
      %s115 = sadd.s32 %s114, 1
      %p118 = scmp.eq.s32.totalorder %s17, 1
      %p119 = scmp.ne.s32.totalorder %s114, %s116
      %p120 = scmp.eq.s32.totalorder %s17, 0
      %p121 = por %p119, %p120
      %p122 = scmp.ne.s32.totalorder %s114, %s116
      %p123 = scmp.eq.s32.totalorder %s22, 1
      %p124 = por %p122, %p123
      %p125 = scmp.ne.s32.totalorder %s116, %s117
      %p126 = scmp.eq.s32.totalorder %s22, 0
      %p127 = por %p125, %p126
      %p128 = scmp.ne.s32.totalorder %s116, %s117
      %p129 = scmp.eq.s32.totalorder %s23, 1
      %p130 = por %p128, %p129
      %p132 = scmp.ne.s32.totalorder %s117, %s131
      %p133 = scmp.eq.s32.totalorder %s23, 0
      %p134 = por %p132, %p133
      %s136 = sadd.s32 %s135, 1
      %p139 = scmp.eq.s32.totalorder %s17, 1
      %p140 = scmp.ne.s32.totalorder %s135, %s137
      %p141 = scmp.eq.s32.totalorder %s17, 0
      %p142 = por %p140, %p141
      %p143 = scmp.ne.s32.totalorder %s135, %s137
      %p144 = scmp.eq.s32.totalorder %s22, 1
      %p145 = por %p143, %p144
      %p146 = scmp.ne.s32.totalorder %s137, %s138
      %p147 = scmp.eq.s32.totalorder %s22, 0
      %p148 = por %p146, %p147
      %p149 = scmp.ne.s32.totalorder %s137, %s138
      %p150 = scmp.eq.s32.totalorder %s23, 1
      %p151 = por %p149, %p150
      %p153 = scmp.ne.s32.totalorder %s138, %s152
      %p154 = scmp.eq.s32.totalorder %s23, 0
      %p155 = por %p153, %p154
      %s157 = sadd.s32 %s156, 1
      %p160 = scmp.eq.s32.totalorder %s17, 1
      %p161 = scmp.ne.s32.totalorder %s156, %s158
      %p162 = scmp.eq.s32.totalorder %s17, 0
      %p163 = por %p161, %p162
      %p164 = scmp.ne.s32.totalorder %s156, %s158
      %p165 = scmp.eq.s32.totalorder %s22, 1
      %p166 = por %p164, %p165
      %p167 = scmp.ne.s32.totalorder %s158, %s159
      %p168 = scmp.eq.s32.totalorder %s22, 0
      %p169 = por %p167, %p168
      %p170 = scmp.ne.s32.totalorder %s158, %s159
      %p171 = scmp.eq.s32.totalorder %s23, 1
      %p172 = por %p170, %p171
      %p174 = scmp.ne.s32.totalorder %s159, %s173
      %p175 = scmp.eq.s32.totalorder %s23, 0
      %p176 = por %p174, %p175
      %s178 = sadd.s32 %s177, 1
      %p181 = scmp.eq.s32.totalorder %s17, 1
      %p182 = scmp.ne.s32.totalorder %s177, %s179
      %p183 = scmp.eq.s32.totalorder %s17, 0
      %p184 = por %p182, %p183
      %p185 = scmp.ne.s32.totalorder %s177, %s179
      %p186 = scmp.eq.s32.totalorder %s22, 1
      %p187 = por %p185, %p186
      %p188 = scmp.ne.s32.totalorder %s179, %s180
      %p189 = scmp.eq.s32.totalorder %s22, 0
      %p190 = por %p188, %p189
      %p191 = scmp.ne.s32.totalorder %s179, %s180
      %p192 = scmp.eq.s32.totalorder %s23, 1
      %p193 = por %p191, %p192
      %p195 = scmp.ne.s32.totalorder %s180, %s194
      %p196 = scmp.eq.s32.totalorder %s23, 0
      %p197 = por %p195, %p196
      %s198 = ssub.s32 %s17, %s24
      %p199 = scmp.eq.s32.totalorder %s198, 0
      %s201 = sadd.s32 %s200, 1
      %s202 = scalar_select %p199, %s200, %s201
      %p205 = pneg %p199
      %p206 = scmp.eq.s32.totalorder %s17, 1
      %p207 = por %p205, %p206
      %p208 = scmp.ne.s32.totalorder %s200, %s203
      %p209 = scmp.eq.s32.totalorder %s17, 0
      %p210 = por %p208, %p209
      %p211 = scmp.ne.s32.totalorder %s200, %s203
      %p212 = scmp.eq.s32.totalorder %s22, 1
      %p213 = por %p211, %p212
      %p214 = scmp.ne.s32.totalorder %s203, %s204
      %p215 = scmp.eq.s32.totalorder %s22, 0
      %p216 = por %p214, %p215
      %p217 = scmp.ne.s32.totalorder %s203, %s204
      %p218 = scmp.eq.s32.totalorder %s23, 1
      %p219 = por %p217, %p218
      %p221 = scmp.ne.s32.totalorder %s204, %s220
      %p222 = scmp.eq.s32.totalorder %s23, 0
      %p223 = por %p221, %p222
      %p224 = scmp.le.s32.totalorder 1, %s17
      %p225 = scmp.lt.s32.totalorder %s17, 3
      %p226 = pnand %p224, %p225
      %p227 = pneg %p226
      // Predicated region
      $region9: #{tpu_custom_call.1} parent=5 // pred_check
        _
      $region10: #{tpu_custom_call.1} parent=5 // pred_check_branch
        %229 = sbr.rel (%p226) target = $region12
      $region11: #{tpu_custom_call.1} parent=5 // pred_region
        %s230 = ssub.s32 %s17, 1
        // Predicated region
        $region13: #{tpu_custom_call.1} parent=11 // pred_check
          %p231 = pneg %p64
        $region14: #{tpu_custom_call.1} parent=11 // pred_check_branch
          %233 = sbr.rel (%p231) target = $region16
        $region15: #{tpu_custom_call.1} parent=11 // pred_region
          _
        $region16: #{tpu_custom_call.1} parent=11 // pred_fallthru
          _
        // Predicated region
        $region17: #{tpu_custom_call.1} parent=11 // pred_check
          %p234 = pneg %p85
        $region18: #{tpu_custom_call.1} parent=11 // pred_check_branch
          %236 = sbr.rel (%p234) target = $region20
        $region19: #{tpu_custom_call.1} parent=11 // pred_region
          _
        $region20: #{tpu_custom_call.1} parent=11 // pred_fallthru
          _
        // Predicated region
        $region21: #{tpu_custom_call.1} parent=11 // pred_check
          %p237 = pneg %p106
        $region22: #{tpu_custom_call.1} parent=11 // pred_check_branch
          %239 = sbr.rel (%p237) target = $region24
        $region23: #{tpu_custom_call.1} parent=11 // pred_region
          _
        $region24: #{tpu_custom_call.1} parent=11 // pred_fallthru
          _
        // Predicated region
        $region25: #{tpu_custom_call.1} parent=11 // pred_check
          %p240 = pneg %p127
        $region26: #{tpu_custom_call.1} parent=11 // pred_check_branch
          %242 = sbr.rel (%p240) target = $region28
        $region27: #{tpu_custom_call.1} parent=11 // pred_region
          _
        $region28: #{tpu_custom_call.1} parent=11 // pred_fallthru
          _
        // Predicated region
        $region29: #{tpu_custom_call.1} parent=11 // pred_check
          %p243 = pneg %p148
        $region30: #{tpu_custom_call.1} parent=11 // pred_check_branch
          %245 = sbr.rel (%p243) target = $region32
        $region31: #{tpu_custom_call.1} parent=11 // pred_region
          _
        $region32: #{tpu_custom_call.1} parent=11 // pred_fallthru
          _
        // Predicated region
        $region33: #{tpu_custom_call.1} parent=11 // pred_check
          %p246 = pneg %p169
        $region34: #{tpu_custom_call.1} parent=11 // pred_check_branch
          %248 = sbr.rel (%p246) target = $region36
        $region35: #{tpu_custom_call.1} parent=11 // pred_region
          _
        $region36: #{tpu_custom_call.1} parent=11 // pred_fallthru
          _
        // Predicated region
        $region37: #{tpu_custom_call.1} parent=11 // pred_check
          %p249 = pneg %p190
        $region38: #{tpu_custom_call.1} parent=11 // pred_check_branch
          %251 = sbr.rel (%p249) target = $region40
        $region39: #{tpu_custom_call.1} parent=11 // pred_region
          _
        $region40: #{tpu_custom_call.1} parent=11 // pred_fallthru
          _
      $region12: #{tpu_custom_call.1} parent=5 // pred_fallthru
        _
      %p252 = scmp.lt.s32.totalorder %s17, 2
      // Predicated region
      $region41: #{tpu_custom_call.1} parent=5 // pred_check
        %p253 = pneg %p252
      $region42: #{tpu_custom_call.1} parent=5 // pred_check_branch
        %255 = sbr.rel (%p253) target = $region44
      $region43: #{tpu_custom_call.1} parent=5 // pred_region
        // Predicated region
        $region45: #{tpu_custom_call.1} parent=43 // pred_check
          %p256 = pneg %p37
        $region46: #{tpu_custom_call.1} parent=43 // pred_check_branch
          %258 = sbr.rel (%p256) target = $region48
        $region47: #{tpu_custom_call.1} parent=43 // pred_region
          %s259 = smul.u32 8, %s17
          %p260 = scmp.lt.s32.totalorder %s259, 15
          %s261 = scalar_select %p260, %s259, 15
          %s262 = smul.addr %s261, 8
          %s263 = scalar_lea.vmem %s0, %s262
          %s264 = smul.u32 8, %s17
        $region48: #{tpu_custom_call.1} parent=43 // pred_fallthru
          _
      $region44: #{tpu_custom_call.1} parent=5 // pred_fallthru
        _
      %p265 = scmp.le.s32.totalorder 1, %s17
      %p266 = scmp.lt.s32.totalorder %s17, 3
      %p267 = pnand %p265, %p266
      %p268 = pneg %p267
      // Predicated region
      $region49: #{tpu_custom_call.1} parent=5 // pred_check
        _
      $region50: #{tpu_custom_call.1} parent=5 // pred_check_branch
        %270 = sbr.rel (%p267) target = $region52
      $region51: #{tpu_custom_call.1} parent=5 // pred_region
        %s271 = ssub.s32 %s17, 1
        %s272 = smul.u32 8, %s22
        %p273 = scmp.lt.s32.totalorder %s272, 15
        %s274 = scalar_select %p273, %s272, 15
        %s275 = smul.addr %s274, 8
        %s276 = scalar_lea.vmem %s0, %s275
        %p277 = pneg %p43
        %p278 = pneg %p40
        %p279 = pneg %p64
        %p280 = pneg %p61
        %p281 = pneg %p85
        %p282 = pneg %p82
        %p283 = pneg %p106
        %p284 = pneg %p103
        %p285 = pneg %p127
        %p286 = pneg %p124
        %p287 = pneg %p148
        %p288 = pneg %p145
        %p289 = pneg %p169
        %p290 = pneg %p166
        %p291 = pneg %p190
        %p292 = pneg %p187
        %p293 = pneg %p216
        %p294 = pneg %p213
        %s295 = sand.u32 %s203, 1
        %s296 = scalar_lea.sflag [#allocation3], %s295
        %s297 = sand.u32 %s203, 1
        %s298 = smul.addr %s297, 64
        %s299 = scalar_lea.vmem [#allocation2], %s298
        %s300 = smul.u32 8, %s22
        %p301 = scmp.lt.s32.totalorder %s300, 15
        %s302 = scalar_select %p301, %s300, 15
        %s303 = smul.addr %s302, 8
        %s304 = scalar_lea.vmem %s0, %s303
        %s305 = smul.u32 8, %s22
        %s306 = smul.u32 8, %s22
        %v307 = vld [vmem:[%s304] sm:$0xff]
        %v308 = vld [vmem:[%s304 + $0x8] sm:$0xff]
        %v309 = vld [vmem:[%s304 + $0x10] sm:$0xff]
        %v310 = vld [vmem:[%s304 + $0x18] sm:$0xff]
        %v311 = vld [vmem:[%s304 + $0x20] sm:$0xff]
        %v312 = vld [vmem:[%s304 + $0x28] sm:$0xff]
        %v313 = vld [vmem:[%s304 + $0x30] sm:$0xff]
        %v314 = vld [vmem:[%s304 + $0x38] sm:$0xff]
        %v315 = vld [vmem:[%s4] sm:$0xff]
        %v316 = vld [vmem:[%s4 + $0x8] sm:$0x1]
        %v317 = vld [vmem:[%s5] sm:$0xff]
        %v318 = vld [vmem:[%s5 + $0x8] sm:$0xff]
        %v319 = vld [vmem:[%s5 + $0x10] sm:$0xff]
        %v320 = vld [vmem:[%s5 + $0x18] sm:$0xff]
        %v321 = vld [vmem:[%s6] sm:$0xff]
        %v322 = vld [vmem:[%s6 + $0x8] sm:$0xff]
        %v323 = vld [vmem:[%s6 + $0x10] sm:$0xff]
        %v324 = vld [vmem:[%s6 + $0x18] sm:$0xff]
        %v325 = vld [vmem:[%s6 + $0x20] sm:$0xff]
        %v326 = vld [vmem:[%s6 + $0x28] sm:$0xff]
        %v327 = vld [vmem:[%s6 + $0x30] sm:$0xff]
        %v328 = vld [vmem:[%s6 + $0x38] sm:$0xff]
        %v329 = vld [vmem:[%s6 + $0x40] sm:$0xff]
        %v330 = vld [vmem:[%s6 + $0x48] sm:$0xff]
        %v331 = vld [vmem:[%s6 + $0x50] sm:$0xff]
        %v332 = vld [vmem:[%s6 + $0x58] sm:$0xff]
        %v333 = vld [vmem:[%s6 + $0x60] sm:$0xff]
        %v334 = vld [vmem:[%s6 + $0x68] sm:$0xff]
        %v335 = vld [vmem:[%s6 + $0x70] sm:$0xff]
        %v336 = vld [vmem:[%s6 + $0x78] sm:$0xff]
        %v337 = vld [vmem:[%s1] sm:$0xff]
        %v338 = vld [vmem:[%s1 + $0x8] sm:$0xff]
        %v339 = vperm.slane %v315, 0
        %vm340 = vcmask 130048
        %v342 = vsel %vm340, %v307, 0
        %v345 = vsel %vm340, %v308, 0
        %v348 = vsel %vm340, %v309, 0
        %v351 = vsel %vm340, %v310, 0
        %v354 = vsel %vm340, %v311, 0
        %v357 = vsel %vm340, %v312, 0
        %v360 = vsel %vm340, %v313, 0
        %v363 = vsel %vm340, %v314, 0
        %365 = vmatpush.msra.mxu0 0.0
        %366 = vmatpush.msra.mxu0 0.0
        %367 = vmatpush.msra.mxu0 0.0
        %368 = vmatpush.msra.mxu0 0.0
        %369 = vmatpush.msra.mxu0 0.0
        %370 = vmatpush.msra.mxu0 0.0
        %371 = vmatpush.msra.mxu0 0.0
        %372 = vmatpush.msra.mxu0 0.0
        %373 = vmatpush.msra.mxu0 0.0
        %374 = vmatpush.msra.mxu0 0.0
        %375 = vmatpush.msra.mxu0 0.0
        %376 = vmatpush.msra.mxu0 0.0
        %377 = vmatpush.msra.mxu0 0.0
        %378 = vmatpush.msra.mxu0 0.0
        %v379 = vand.u32 %v338, 4294901760
        %380 = vmatpush.msra.mxu0 %v379
        %v381 = vand.u32 %v337, 4294901760
        %382 = vmatpush.msra.mxu0 %v381
        %v383 = vand.u32 %v342, 4294901760
        %v384 = vsub.f32 %v342, %v383
        %v385 = vand.u32 %v384, 4294901760
        %v386 = vsub.f32 %v384, %v385
        %v387 = vand.u32 %v386, 4294901760
        %388 = vmatmul.f32.gmra.mxu0 %v387
        %v389 = vpop.f32.mrf.mxu0
        %v390 = vadd.f32 %v339, %v389
        %v391 = vand.u32 %v345, 4294901760
        %v392 = vsub.f32 %v345, %v391
        %v393 = vand.u32 %v392, 4294901760
        %v394 = vsub.f32 %v392, %v393
        %v395 = vand.u32 %v394, 4294901760
        %396 = vmatmul.f32.gmra.mxu0 %v395
        %v397 = vpop.f32.mrf.mxu0
        %v398 = vadd.f32 %v339, %v397
        %v399 = vand.u32 %v348, 4294901760
        %v400 = vsub.f32 %v348, %v399
        %v401 = vand.u32 %v400, 4294901760
        %v402 = vsub.f32 %v400, %v401
        %v403 = vand.u32 %v402, 4294901760
        %404 = vmatmul.f32.gmra.mxu0 %v403
        %v405 = vpop.f32.mrf.mxu0
        %v406 = vadd.f32 %v339, %v405
        %v407 = vand.u32 %v351, 4294901760
        %v408 = vsub.f32 %v351, %v407
        %v409 = vand.u32 %v408, 4294901760
        %v410 = vsub.f32 %v408, %v409
        %v411 = vand.u32 %v410, 4294901760
        %412 = vmatmul.f32.gmra.mxu0 %v411
        %v413 = vpop.f32.mrf.mxu0
        %v414 = vadd.f32 %v339, %v413
        %v415 = vand.u32 %v354, 4294901760
        %v416 = vsub.f32 %v354, %v415
        %v417 = vand.u32 %v416, 4294901760
        %v418 = vsub.f32 %v416, %v417
        %v419 = vand.u32 %v418, 4294901760
        %420 = vmatmul.f32.gmra.mxu0 %v419
        %v421 = vpop.f32.mrf.mxu0
        %v422 = vadd.f32 %v339, %v421
        %v423 = vand.u32 %v357, 4294901760
        %v424 = vsub.f32 %v357, %v423
        %v425 = vand.u32 %v424, 4294901760
        %v426 = vsub.f32 %v424, %v425
        %v427 = vand.u32 %v426, 4294901760
        %428 = vmatmul.f32.gmra.mxu0 %v427
        %v429 = vpop.f32.mrf.mxu0
        %v430 = vadd.f32 %v339, %v429
        %v431 = vand.u32 %v360, 4294901760
        %v432 = vsub.f32 %v360, %v431
        %v433 = vand.u32 %v432, 4294901760
        %v434 = vsub.f32 %v432, %v433
        %v435 = vand.u32 %v434, 4294901760
        %436 = vmatmul.f32.gmra.mxu0 %v435
        %v437 = vpop.f32.mrf.mxu0
        %v438 = vadd.f32 %v339, %v437
        %v439 = vand.u32 %v363, 4294901760
        %v440 = vsub.f32 %v363, %v439
        %v441 = vand.u32 %v440, 4294901760
        %v442 = vsub.f32 %v440, %v441
        %v443 = vand.u32 %v442, 4294901760
        %444 = vmatmul.f32.gmra.mxu0 %v443
        %v445 = vpop.f32.mrf.mxu0
        %v446 = vadd.f32 %v339, %v445
        %447 = vdwg.mxu0
        %448 = vmatpush.msra.mxu0 0.0
        %449 = vmatpush.msra.mxu0 0.0
        %450 = vmatpush.msra.mxu0 0.0
        %451 = vmatpush.msra.mxu0 0.0
        %452 = vmatpush.msra.mxu0 0.0
        %453 = vmatpush.msra.mxu0 0.0
        %454 = vmatpush.msra.mxu0 0.0
        %455 = vmatpush.msra.mxu0 0.0
        %456 = vmatpush.msra.mxu0 0.0
        %457 = vmatpush.msra.mxu0 0.0
        %458 = vmatpush.msra.mxu0 0.0
        %459 = vmatpush.msra.mxu0 0.0
        %460 = vmatpush.msra.mxu0 0.0
        %461 = vmatpush.msra.mxu0 0.0
        %v462 = vand.u32 %v338, 4294901760
        %v463 = vsub.f32 %v338, %v462
        %v464 = vand.u32 %v463, 4294901760
        %v465 = vsub.f32 %v463, %v464
        %v466 = vand.u32 %v465, 4294901760
        %467 = vmatpush.msra.mxu0 %v466
        %v468 = vand.u32 %v337, 4294901760
        %v469 = vsub.f32 %v337, %v468
        %v470 = vand.u32 %v469, 4294901760
        %v471 = vsub.f32 %v469, %v470
        %v472 = vand.u32 %v471, 4294901760
        %473 = vmatpush.msra.mxu0 %v472
        %v474 = vand.u32 %v342, 4294901760
        %475 = vmatmul.f32.gmra.mxu0 %v474
        %v476 = vpop.f32.mrf.mxu0
        %v477 = vadd.f32 %v390, %v476
        %v478 = vand.u32 %v345, 4294901760
        %479 = vmatmul.f32.gmra.mxu0 %v478
        %v480 = vpop.f32.mrf.mxu0
        %v481 = vadd.f32 %v398, %v480
        %v482 = vand.u32 %v348, 4294901760
        %483 = vmatmul.f32.gmra.mxu0 %v482
        %v484 = vpop.f32.mrf.mxu0
        %v485 = vadd.f32 %v406, %v484
        %v486 = vand.u32 %v351, 4294901760
        %487 = vmatmul.f32.gmra.mxu0 %v486
        %v488 = vpop.f32.mrf.mxu0
        %v489 = vadd.f32 %v414, %v488
        %v490 = vand.u32 %v354, 4294901760
        %491 = vmatmul.f32.gmra.mxu0 %v490
        %v492 = vpop.f32.mrf.mxu0
        %v493 = vadd.f32 %v422, %v492
        %v494 = vand.u32 %v357, 4294901760
        %495 = vmatmul.f32.gmra.mxu0 %v494
        %v496 = vpop.f32.mrf.mxu0
        %v497 = vadd.f32 %v430, %v496
        %v498 = vand.u32 %v360, 4294901760
        %499 = vmatmul.f32.gmra.mxu0 %v498
        %v500 = vpop.f32.mrf.mxu0
        %v501 = vadd.f32 %v438, %v500
        %v502 = vand.u32 %v363, 4294901760
        %503 = vmatmul.f32.gmra.mxu0 %v502
        %v504 = vpop.f32.mrf.mxu0
        %v505 = vadd.f32 %v446, %v504
        %506 = vdwg.mxu0
        %507 = vmatpush.msra.mxu0 0.0
        %508 = vmatpush.msra.mxu0 0.0
        %509 = vmatpush.msra.mxu0 0.0
        %510 = vmatpush.msra.mxu0 0.0
        %511 = vmatpush.msra.mxu0 0.0
        %512 = vmatpush.msra.mxu0 0.0
        %513 = vmatpush.msra.mxu0 0.0
        %514 = vmatpush.msra.mxu0 0.0
        %515 = vmatpush.msra.mxu0 0.0
        %516 = vmatpush.msra.mxu0 0.0
        %517 = vmatpush.msra.mxu0 0.0
        %518 = vmatpush.msra.mxu0 0.0
        %519 = vmatpush.msra.mxu0 0.0
        %520 = vmatpush.msra.mxu0 0.0
        %v521 = vand.u32 %v338, 4294901760
        %v522 = vsub.f32 %v338, %v521
        %523 = vmatpush.msra.mxu0 %v522
        %v524 = vand.u32 %v337, 4294901760
        %v525 = vsub.f32 %v337, %v524
        %526 = vmatpush.msra.mxu0 %v525
        %v527 = vand.u32 %v342, 4294901760
        %v528 = vsub.f32 %v342, %v527
        %529 = vmatmul.f32.gmra.mxu0 %v528
        %v530 = vpop.f32.mrf.mxu0
        %v531 = vadd.f32 %v477, %v530
        %v532 = vand.u32 %v345, 4294901760
        %v533 = vsub.f32 %v345, %v532
        %534 = vmatmul.f32.gmra.mxu0 %v533
        %v535 = vpop.f32.mrf.mxu0
        %v536 = vadd.f32 %v481, %v535
        %v537 = vand.u32 %v348, 4294901760
        %v538 = vsub.f32 %v348, %v537
        %539 = vmatmul.f32.gmra.mxu0 %v538
        %v540 = vpop.f32.mrf.mxu0
        %v541 = vadd.f32 %v485, %v540
        %v542 = vand.u32 %v351, 4294901760
        %v543 = vsub.f32 %v351, %v542
        %544 = vmatmul.f32.gmra.mxu0 %v543
        %v545 = vpop.f32.mrf.mxu0
        %v546 = vadd.f32 %v489, %v545
        %v547 = vand.u32 %v354, 4294901760
        %v548 = vsub.f32 %v354, %v547
        %549 = vmatmul.f32.gmra.mxu0 %v548
        %v550 = vpop.f32.mrf.mxu0
        %v551 = vadd.f32 %v493, %v550
        %v552 = vand.u32 %v357, 4294901760
        %v553 = vsub.f32 %v357, %v552
        %554 = vmatmul.f32.gmra.mxu0 %v553
        %v555 = vpop.f32.mrf.mxu0
        %v556 = vadd.f32 %v497, %v555
        %v557 = vand.u32 %v360, 4294901760
        %v558 = vsub.f32 %v360, %v557
        %559 = vmatmul.f32.gmra.mxu0 %v558
        %v560 = vpop.f32.mrf.mxu0
        %v561 = vadd.f32 %v501, %v560
        %v562 = vand.u32 %v363, 4294901760
        %v563 = vsub.f32 %v363, %v562
        %564 = vmatmul.f32.gmra.mxu0 %v563
        %v565 = vpop.f32.mrf.mxu0
        %v566 = vadd.f32 %v505, %v565
        %567 = vdwg.mxu0
        %568 = vmatpush.msra.mxu0 0.0
        %569 = vmatpush.msra.mxu0 0.0
        %570 = vmatpush.msra.mxu0 0.0
        %571 = vmatpush.msra.mxu0 0.0
        %572 = vmatpush.msra.mxu0 0.0
        %573 = vmatpush.msra.mxu0 0.0
        %574 = vmatpush.msra.mxu0 0.0
        %575 = vmatpush.msra.mxu0 0.0
        %576 = vmatpush.msra.mxu0 0.0
        %577 = vmatpush.msra.mxu0 0.0
        %578 = vmatpush.msra.mxu0 0.0
        %579 = vmatpush.msra.mxu0 0.0
        %580 = vmatpush.msra.mxu0 0.0
        %581 = vmatpush.msra.mxu0 0.0
        %v582 = vand.u32 %v338, 4294901760
        %583 = vmatpush.msra.mxu0 %v582
        %v584 = vand.u32 %v337, 4294901760
        %585 = vmatpush.msra.mxu0 %v584
        %v586 = vand.u32 %v342, 4294901760
        %v587 = vsub.f32 %v342, %v586
        %v588 = vand.u32 %v587, 4294901760
        %589 = vmatmul.f32.gmra.mxu0 %v588
        %v590 = vpop.f32.mrf.mxu0
        %v591 = vadd.f32 %v531, %v590
        %v592 = vand.u32 %v345, 4294901760
        %v593 = vsub.f32 %v345, %v592
        %v594 = vand.u32 %v593, 4294901760
        %595 = vmatmul.f32.gmra.mxu0 %v594
        %v596 = vpop.f32.mrf.mxu0
        %v597 = vadd.f32 %v536, %v596
        %v598 = vand.u32 %v348, 4294901760
        %v599 = vsub.f32 %v348, %v598
        %v600 = vand.u32 %v599, 4294901760
        %601 = vmatmul.f32.gmra.mxu0 %v600
        %v602 = vpop.f32.mrf.mxu0
        %v603 = vadd.f32 %v541, %v602
        %v604 = vand.u32 %v351, 4294901760
        %v605 = vsub.f32 %v351, %v604
        %v606 = vand.u32 %v605, 4294901760
        %607 = vmatmul.f32.gmra.mxu0 %v606
        %v608 = vpop.f32.mrf.mxu0
        %v609 = vadd.f32 %v546, %v608
        %v610 = vand.u32 %v354, 4294901760
        %v611 = vsub.f32 %v354, %v610
        %v612 = vand.u32 %v611, 4294901760
        %613 = vmatmul.f32.gmra.mxu0 %v612
        %v614 = vpop.f32.mrf.mxu0
        %v615 = vadd.f32 %v551, %v614
        %v616 = vand.u32 %v357, 4294901760
        %v617 = vsub.f32 %v357, %v616
        %v618 = vand.u32 %v617, 4294901760
        %619 = vmatmul.f32.gmra.mxu0 %v618
        %v620 = vpop.f32.mrf.mxu0
        %v621 = vadd.f32 %v556, %v620
        %v622 = vand.u32 %v360, 4294901760
        %v623 = vsub.f32 %v360, %v622
        %v624 = vand.u32 %v623, 4294901760
        %625 = vmatmul.f32.gmra.mxu0 %v624
        %v626 = vpop.f32.mrf.mxu0
        %v627 = vadd.f32 %v561, %v626
        %v628 = vand.u32 %v363, 4294901760
        %v629 = vsub.f32 %v363, %v628
        %v630 = vand.u32 %v629, 4294901760
        %631 = vmatmul.f32.gmra.mxu0 %v630
        %v632 = vpop.f32.mrf.mxu0
        %v633 = vadd.f32 %v566, %v632
        %634 = vdwg.mxu0
        %635 = vmatpush.msra.mxu0 0.0
        %636 = vmatpush.msra.mxu0 0.0
        %637 = vmatpush.msra.mxu0 0.0
        %638 = vmatpush.msra.mxu0 0.0
        %639 = vmatpush.msra.mxu0 0.0
        %640 = vmatpush.msra.mxu0 0.0
        %641 = vmatpush.msra.mxu0 0.0
        %642 = vmatpush.msra.mxu0 0.0
        %643 = vmatpush.msra.mxu0 0.0
        %644 = vmatpush.msra.mxu0 0.0
        %645 = vmatpush.msra.mxu0 0.0
        %646 = vmatpush.msra.mxu0 0.0
        %647 = vmatpush.msra.mxu0 0.0
        %648 = vmatpush.msra.mxu0 0.0
        %v649 = vand.u32 %v338, 4294901760
        %v650 = vsub.f32 %v338, %v649
        %v651 = vand.u32 %v650, 4294901760
        %652 = vmatpush.msra.mxu0 %v651
        %v653 = vand.u32 %v337, 4294901760
        %v654 = vsub.f32 %v337, %v653
        %v655 = vand.u32 %v654, 4294901760
        %656 = vmatpush.msra.mxu0 %v655
        %v657 = vand.u32 %v342, 4294901760
        %658 = vmatmul.f32.gmra.mxu0 %v657
        %v659 = vpop.f32.mrf.mxu0
        %v660 = vadd.f32 %v591, %v659
        %v661 = vand.u32 %v345, 4294901760
        %662 = vmatmul.f32.gmra.mxu0 %v661
        %v663 = vpop.f32.mrf.mxu0
        %v664 = vadd.f32 %v597, %v663
        %v665 = vand.u32 %v348, 4294901760
        %666 = vmatmul.f32.gmra.mxu0 %v665
        %v667 = vpop.f32.mrf.mxu0
        %v668 = vadd.f32 %v603, %v667
        %v669 = vand.u32 %v351, 4294901760
        %670 = vmatmul.f32.gmra.mxu0 %v669
        %v671 = vpop.f32.mrf.mxu0
        %v672 = vadd.f32 %v609, %v671
        %v673 = vand.u32 %v354, 4294901760
        %674 = vmatmul.f32.gmra.mxu0 %v673
        %v675 = vpop.f32.mrf.mxu0
        %v676 = vadd.f32 %v615, %v675
        %v677 = vand.u32 %v357, 4294901760
        %678 = vmatmul.f32.gmra.mxu0 %v677
        %v679 = vpop.f32.mrf.mxu0
        %v680 = vadd.f32 %v621, %v679
        %v681 = vand.u32 %v360, 4294901760
        %682 = vmatmul.f32.gmra.mxu0 %v681
        %v683 = vpop.f32.mrf.mxu0
        %v684 = vadd.f32 %v627, %v683
        %v685 = vand.u32 %v363, 4294901760
        %686 = vmatmul.f32.gmra.mxu0 %v685
        %v687 = vpop.f32.mrf.mxu0
        %v688 = vadd.f32 %v633, %v687
        %689 = vdwg.mxu0
        %690 = vmatpush.msra.mxu0 0.0
        %691 = vmatpush.msra.mxu0 0.0
        %692 = vmatpush.msra.mxu0 0.0
        %693 = vmatpush.msra.mxu0 0.0
        %694 = vmatpush.msra.mxu0 0.0
        %695 = vmatpush.msra.mxu0 0.0
        %696 = vmatpush.msra.mxu0 0.0
        %697 = vmatpush.msra.mxu0 0.0
        %698 = vmatpush.msra.mxu0 0.0
        %699 = vmatpush.msra.mxu0 0.0
        %700 = vmatpush.msra.mxu0 0.0
        %701 = vmatpush.msra.mxu0 0.0
        %702 = vmatpush.msra.mxu0 0.0
        %703 = vmatpush.msra.mxu0 0.0
        %v704 = vand.u32 %v338, 4294901760
        %705 = vmatpush.msra.mxu0 %v704
        %v706 = vand.u32 %v337, 4294901760
        %707 = vmatpush.msra.mxu0 %v706
        %v708 = vand.u32 %v342, 4294901760
        %709 = vmatmul.f32.gmra.mxu0 %v708
        %v710 = vpop.f32.mrf.mxu0
        %v711 = vadd.f32 %v660, %v710
        %v712 = vand.u32 %v345, 4294901760
        %713 = vmatmul.f32.gmra.mxu0 %v712
        %v714 = vpop.f32.mrf.mxu0
        %v715 = vadd.f32 %v664, %v714
        %v716 = vand.u32 %v348, 4294901760
        %717 = vmatmul.f32.gmra.mxu0 %v716
        %v718 = vpop.f32.mrf.mxu0
        %v719 = vadd.f32 %v668, %v718
        %v720 = vand.u32 %v351, 4294901760
        %721 = vmatmul.f32.gmra.mxu0 %v720
        %v722 = vpop.f32.mrf.mxu0
        %v723 = vadd.f32 %v672, %v722
        %v724 = vand.u32 %v354, 4294901760
        %725 = vmatmul.f32.gmra.mxu0 %v724
        %v726 = vpop.f32.mrf.mxu0
        %v727 = vadd.f32 %v676, %v726
        %v728 = vand.u32 %v357, 4294901760
        %729 = vmatmul.f32.gmra.mxu0 %v728
        %v730 = vpop.f32.mrf.mxu0
        %v731 = vadd.f32 %v680, %v730
        %v732 = vand.u32 %v360, 4294901760
        %733 = vmatmul.f32.gmra.mxu0 %v732
        %v734 = vpop.f32.mrf.mxu0
        %v735 = vadd.f32 %v684, %v734
        %v736 = vand.u32 %v363, 4294901760
        %737 = vmatmul.f32.gmra.mxu0 %v736
        %v738 = vpop.f32.mrf.mxu0
        %v739 = vadd.f32 %v688, %v738
        %740 = vdwg.mxu0
        %vm741 = vcmask 261120
        %v742 = vsel %vm741, %v711, 0.0
        %v743 = vsel %vm741, %v715, 0.0
        %v744 = vadd.f32 %v742, %v743
        %v745 = vsel %vm741, %v719, 0.0
        %v746 = vadd.f32 %v744, %v745
        %v747 = vsel %vm741, %v723, 0.0
        %v748 = vadd.f32 %v746, %v747
        %v749 = vsel %vm741, %v727, 0.0
        %v750 = vadd.f32 %v748, %v749
        %v751 = vsel %vm741, %v731, 0.0
        %v752 = vadd.f32 %v750, %v751
        %v753 = vsel %vm741, %v735, 0.0
        %v754 = vadd.f32 %v752, %v753
        %v755 = vsel %vm741, %v739, 0.0
        %v756 = vadd.f32 %v754, %v755
        %v757 = vrot.slane %v756, 4
        %v758 = vadd.f32 %v756, %v757
        %v759 = vrot.slane %v758, 2
        %v760 = vadd.f32 %v758, %v759
        %v761 = vrot.slane %v760, 1
        %v762 = vadd.f32 %v760, %v761
        %v763 = vmul.f32 %v711, %v711
        %v764 = vmul.f32 %v715, %v715
        %v765 = vmul.f32 %v719, %v719
        %v766 = vmul.f32 %v723, %v723
        %v767 = vmul.f32 %v727, %v727
        %v768 = vmul.f32 %v731, %v731
        %v769 = vmul.f32 %v735, %v735
        %v770 = vmul.f32 %v739, %v739
        %v771 = vsel %vm741, %v763, 0.0
        %v772 = vsel %vm741, %v764, 0.0
        %v773 = vadd.f32 %v771, %v772
        %v774 = vsel %vm741, %v765, 0.0
        %v775 = vadd.f32 %v773, %v774
        %v776 = vsel %vm741, %v766, 0.0
        %v777 = vadd.f32 %v775, %v776
        %v778 = vsel %vm741, %v767, 0.0
        %v779 = vadd.f32 %v777, %v778
        %v780 = vsel %vm741, %v768, 0.0
        %v781 = vadd.f32 %v779, %v780
        %v782 = vsel %vm741, %v769, 0.0
        %v783 = vadd.f32 %v781, %v782
        %v784 = vsel %vm741, %v770, 0.0
        %v785 = vadd.f32 %v783, %v784
        %v786 = vrot.slane %v785, 4
        %v787 = vadd.f32 %v785, %v786
        %v788 = vrot.slane %v787, 2
        %v789 = vadd.f32 %v787, %v788
        %v790 = vrot.slane %v789, 1
        %v791 = vadd.f32 %v789, %v790
        %vm792 = vcmask 1040384
        %v793 = vsel %vm792, %v762, %v791
        %v795 = vsel %vm741, %v793, 0
        %797 = vmatpush.msra.mxu0 0.0
        %798 = vmatpush.msra.mxu0 0.0
        %799 = vmatpush.msra.mxu0 0.0
        %800 = vmatpush.msra.mxu0 0.0
        %801 = vmatpush.msra.mxu0 0.0
        %802 = vmatpush.msra.mxu0 0.0
        %803 = vmatpush.msra.mxu0 0.0
        %804 = vmatpush.msra.mxu0 0.0
        %805 = vmatpush.msra.mxu0 0.0
        %806 = vmatpush.msra.mxu0 0.0
        %807 = vmatpush.msra.mxu0 0.0
        %808 = vmatpush.msra.mxu0 0.0
        %v809 = vand.u32 %v320, 4294901760
        %810 = vmatpush.msra.mxu0 %v809
        %v811 = vand.u32 %v319, 4294901760
        %812 = vmatpush.msra.mxu0 %v811
        %v813 = vand.u32 %v318, 4294901760
        %814 = vmatpush.msra.mxu0 %v813
        %v815 = vand.u32 %v317, 4294901760
        %816 = vmatpush.msra.mxu0 %v815
        %v817 = vand.u32 %v795, 4294901760
        %v818 = vsub.f32 %v795, %v817
        %v819 = vand.u32 %v818, 4294901760
        %v820 = vsub.f32 %v818, %v819
        %v821 = vand.u32 %v820, 4294901760
        %822 = vmatmul.f32.gmra.mxu0 %v821
        %v823 = vpop.f32.mrf.mxu0
        %v824 = vadd.f32 0.0, %v823
        %825 = vdwg.mxu0
        %826 = vmatpush.msra.mxu0 0.0
        %827 = vmatpush.msra.mxu0 0.0
        %828 = vmatpush.msra.mxu0 0.0
        %829 = vmatpush.msra.mxu0 0.0
        %830 = vmatpush.msra.mxu0 0.0
        %831 = vmatpush.msra.mxu0 0.0
        %832 = vmatpush.msra.mxu0 0.0
        %833 = vmatpush.msra.mxu0 0.0
        %834 = vmatpush.msra.mxu0 0.0
        %835 = vmatpush.msra.mxu0 0.0
        %836 = vmatpush.msra.mxu0 0.0
        %837 = vmatpush.msra.mxu0 0.0
        %v838 = vand.u32 %v320, 4294901760
        %v839 = vsub.f32 %v320, %v838
        %v840 = vand.u32 %v839, 4294901760
        %v841 = vsub.f32 %v839, %v840
        %v842 = vand.u32 %v841, 4294901760
        %843 = vmatpush.msra.mxu0 %v842
        %v844 = vand.u32 %v319, 4294901760
        %v845 = vsub.f32 %v319, %v844
        %v846 = vand.u32 %v845, 4294901760
        %v847 = vsub.f32 %v845, %v846
        %v848 = vand.u32 %v847, 4294901760
        %849 = vmatpush.msra.mxu0 %v848
        %v850 = vand.u32 %v318, 4294901760
        %v851 = vsub.f32 %v318, %v850
        %v852 = vand.u32 %v851, 4294901760
        %v853 = vsub.f32 %v851, %v852
        %v854 = vand.u32 %v853, 4294901760
        %855 = vmatpush.msra.mxu0 %v854
        %v856 = vand.u32 %v317, 4294901760
        %v857 = vsub.f32 %v317, %v856
        %v858 = vand.u32 %v857, 4294901760
        %v859 = vsub.f32 %v857, %v858
        %v860 = vand.u32 %v859, 4294901760
        %861 = vmatpush.msra.mxu0 %v860
        %v862 = vand.u32 %v795, 4294901760
        %863 = vmatmul.f32.gmra.mxu0 %v862
        %v864 = vpop.f32.mrf.mxu0
        %v865 = vadd.f32 %v824, %v864
        %866 = vdwg.mxu0
        %867 = vmatpush.msra.mxu0 0.0
        %868 = vmatpush.msra.mxu0 0.0
        %869 = vmatpush.msra.mxu0 0.0
        %870 = vmatpush.msra.mxu0 0.0
        %871 = vmatpush.msra.mxu0 0.0
        %872 = vmatpush.msra.mxu0 0.0
        %873 = vmatpush.msra.mxu0 0.0
        %874 = vmatpush.msra.mxu0 0.0
        %875 = vmatpush.msra.mxu0 0.0
        %876 = vmatpush.msra.mxu0 0.0
        %877 = vmatpush.msra.mxu0 0.0
        %878 = vmatpush.msra.mxu0 0.0
        %v879 = vand.u32 %v320, 4294901760
        %v880 = vsub.f32 %v320, %v879
        %881 = vmatpush.msra.mxu0 %v880
        %v882 = vand.u32 %v319, 4294901760
        %v883 = vsub.f32 %v319, %v882
        %884 = vmatpush.msra.mxu0 %v883
        %v885 = vand.u32 %v318, 4294901760
        %v886 = vsub.f32 %v318, %v885
        %887 = vmatpush.msra.mxu0 %v886
        %v888 = vand.u32 %v317, 4294901760
        %v889 = vsub.f32 %v317, %v888
        %890 = vmatpush.msra.mxu0 %v889
        %v891 = vand.u32 %v795, 4294901760
        %v892 = vsub.f32 %v795, %v891
        %893 = vmatmul.f32.gmra.mxu0 %v892
        %v894 = vpop.f32.mrf.mxu0
        %v895 = vadd.f32 %v865, %v894
        %896 = vdwg.mxu0
        %897 = vmatpush.msra.mxu0 0.0
        %898 = vmatpush.msra.mxu0 0.0
        %899 = vmatpush.msra.mxu0 0.0
        %900 = vmatpush.msra.mxu0 0.0
        %901 = vmatpush.msra.mxu0 0.0
        %902 = vmatpush.msra.mxu0 0.0
        %903 = vmatpush.msra.mxu0 0.0
        %904 = vmatpush.msra.mxu0 0.0
        %905 = vmatpush.msra.mxu0 0.0
        %906 = vmatpush.msra.mxu0 0.0
        %907 = vmatpush.msra.mxu0 0.0
        %908 = vmatpush.msra.mxu0 0.0
        %v909 = vand.u32 %v320, 4294901760
        %910 = vmatpush.msra.mxu0 %v909
        %v911 = vand.u32 %v319, 4294901760
        %912 = vmatpush.msra.mxu0 %v911
        %v913 = vand.u32 %v318, 4294901760
        %914 = vmatpush.msra.mxu0 %v913
        %v915 = vand.u32 %v317, 4294901760
        %916 = vmatpush.msra.mxu0 %v915
        %v917 = vand.u32 %v795, 4294901760
        %v918 = vsub.f32 %v795, %v917
        %v919 = vand.u32 %v918, 4294901760
        %920 = vmatmul.f32.gmra.mxu0 %v919
        %v921 = vpop.f32.mrf.mxu0
        %v922 = vadd.f32 %v895, %v921
        %923 = vdwg.mxu0
        %924 = vmatpush.msra.mxu0 0.0
        %925 = vmatpush.msra.mxu0 0.0
        %926 = vmatpush.msra.mxu0 0.0
        %927 = vmatpush.msra.mxu0 0.0
        %928 = vmatpush.msra.mxu0 0.0
        %929 = vmatpush.msra.mxu0 0.0
        %930 = vmatpush.msra.mxu0 0.0
        %931 = vmatpush.msra.mxu0 0.0
        %932 = vmatpush.msra.mxu0 0.0
        %933 = vmatpush.msra.mxu0 0.0
        %934 = vmatpush.msra.mxu0 0.0
        %935 = vmatpush.msra.mxu0 0.0
        %v936 = vand.u32 %v320, 4294901760
        %v937 = vsub.f32 %v320, %v936
        %v938 = vand.u32 %v937, 4294901760
        %939 = vmatpush.msra.mxu0 %v938
        %v940 = vand.u32 %v319, 4294901760
        %v941 = vsub.f32 %v319, %v940
        %v942 = vand.u32 %v941, 4294901760
        %943 = vmatpush.msra.mxu0 %v942
        %v944 = vand.u32 %v318, 4294901760
        %v945 = vsub.f32 %v318, %v944
        %v946 = vand.u32 %v945, 4294901760
        %947 = vmatpush.msra.mxu0 %v946
        %v948 = vand.u32 %v317, 4294901760
        %v949 = vsub.f32 %v317, %v948
        %v950 = vand.u32 %v949, 4294901760
        %951 = vmatpush.msra.mxu0 %v950
        %v952 = vand.u32 %v795, 4294901760
        %953 = vmatmul.f32.gmra.mxu0 %v952
        %v954 = vpop.f32.mrf.mxu0
        %v955 = vadd.f32 %v922, %v954
        %956 = vdwg.mxu0
        %957 = vmatpush.msra.mxu0 0.0
        %958 = vmatpush.msra.mxu0 0.0
        %959 = vmatpush.msra.mxu0 0.0
        %960 = vmatpush.msra.mxu0 0.0
        %961 = vmatpush.msra.mxu0 0.0
        %962 = vmatpush.msra.mxu0 0.0
        %963 = vmatpush.msra.mxu0 0.0
        %964 = vmatpush.msra.mxu0 0.0
        %965 = vmatpush.msra.mxu0 0.0
        %966 = vmatpush.msra.mxu0 0.0
        %967 = vmatpush.msra.mxu0 0.0
        %968 = vmatpush.msra.mxu0 0.0
        %v969 = vand.u32 %v320, 4294901760
        %970 = vmatpush.msra.mxu0 %v969
        %v971 = vand.u32 %v319, 4294901760
        %972 = vmatpush.msra.mxu0 %v971
        %v973 = vand.u32 %v318, 4294901760
        %974 = vmatpush.msra.mxu0 %v973
        %v975 = vand.u32 %v317, 4294901760
        %976 = vmatpush.msra.mxu0 %v975
        %v977 = vand.u32 %v795, 4294901760
        %978 = vmatmul.f32.gmra.mxu0 %v977
        %v979 = vpop.f32.mrf.mxu0
        %v980 = vadd.f32 %v955, %v979
        %981 = vdwg.mxu0
        %v982 = vmul.f32 %v980, %v980
        %v984 = vrot.slane %v982, 7
        %v986 = vsub.f32 %v980, %v984
        %v987 = vadd.f32 %v986, 1e-05
        %v988 = vrsqrt.pop %v987
        %v989 = vmul.f32 %v988, %v987
        %v990 = vmul.f32 %v989, %v988
        %v991 = vmul.f32 0.5, %v990
        %v992 = vsub.f32 1.5, %v991
        %v993 = vmul.f32 %v988, %v992
        %vm994 = vweird.f32 %v987
        %vm995 = vweird.f32 %v988
        %vm996 = vmor %vm994, %vm995
        %v997 = vsel %vm996, %v988, %v993
        %v998 = vperm.slane %v980, 0
        %v999 = vsub.f32 %v711, %v998
        %v1000 = vsub.f32 %v715, %v998
        %v1001 = vsub.f32 %v719, %v998
        %v1002 = vsub.f32 %v723, %v998
        %v1003 = vsub.f32 %v727, %v998
        %v1004 = vsub.f32 %v731, %v998
        %v1005 = vsub.f32 %v735, %v998
        %v1006 = vsub.f32 %v739, %v998
        %v1007 = vperm.slane %v997, 1
        %v1008 = vmul.f32 %v999, %v1007
        %v1009 = vmul.f32 %v1000, %v1007
        %v1010 = vmul.f32 %v1001, %v1007
        %v1011 = vmul.f32 %v1002, %v1007
        %v1012 = vmul.f32 %v1003, %v1007
        %v1013 = vmul.f32 %v1004, %v1007
        %v1014 = vmul.f32 %v1005, %v1007
        %v1015 = vmul.f32 %v1006, %v1007
        %v1016 = vperm.slane %v315, 1
        %v1017 = vmul.f32 %v1008, %v1016
        %v1018 = vmul.f32 %v1009, %v1016
        %v1019 = vmul.f32 %v1010, %v1016
        %v1020 = vmul.f32 %v1011, %v1016
        %v1021 = vmul.f32 %v1012, %v1016
        %v1022 = vmul.f32 %v1013, %v1016
        %v1023 = vmul.f32 %v1014, %v1016
        %v1024 = vmul.f32 %v1015, %v1016
        %v1025 = vperm.slane %v315, 2
        %v1026 = vadd.f32 %v1017, %v1025
        %v1027 = vadd.f32 %v1018, %v1025
        %v1028 = vadd.f32 %v1019, %v1025
        %v1029 = vadd.f32 %v1020, %v1025
        %v1030 = vadd.f32 %v1021, %v1025
        %v1031 = vadd.f32 %v1022, %v1025
        %v1032 = vadd.f32 %v1023, %v1025
        %v1033 = vadd.f32 %v1024, %v1025
        %v1034 = vrot.slane %v1026, 7
        %v1035 = vrot.slane %v1027, 7
        %v1036 = vrot.slane %v1028, 7
        %v1037 = vrot.slane %v1029, 7
        %v1038 = vrot.slane %v1030, 7
        %v1039 = vrot.slane %v1031, 7
        %v1040 = vrot.slane %v1032, 7
        %v1041 = vrot.slane %v1033, 7
        %v1042 = vlaneseq
        %v1043 = vshrl.u32 %v1042, 7
        %vm1044 = vcmp.lt.s32.totalorder %v1043, 1
        %v1045 = vsel %vm1044, %v1040, %v1041
        %v1046 = vsel %vm1044, %v1039, %v1040
        %v1047 = vsel %vm1044, %v1038, %v1039
        %v1048 = vsel %vm1044, %v1037, %v1038
        %v1049 = vsel %vm1044, %v1036, %v1037
        %v1050 = vsel %vm1044, %v1035, %v1036
        %v1051 = vsel %vm1044, %v1034, %v1035
        %v1052 = vsel %vm1044, %v1041, %v1034
        %v1053 = vrot.slane %v1026, 1
        %v1054 = vrot.slane %v1027, 1
        %v1055 = vrot.slane %v1028, 1
        %v1056 = vrot.slane %v1029, 1
        %v1057 = vrot.slane %v1030, 1
        %v1058 = vrot.slane %v1031, 1
        %v1059 = vrot.slane %v1032, 1
        %v1060 = vrot.slane %v1033, 1
        %vm1061 = vcmp.lt.s32.totalorder %v1043, 7
        %v1062 = vsel %vm1061, %v1059, %v1060
        %v1063 = vsel %vm1061, %v1058, %v1059
        %v1064 = vsel %vm1061, %v1057, %v1058
        %v1065 = vsel %vm1061, %v1056, %v1057
        %v1066 = vsel %vm1061, %v1055, %v1056
        %v1067 = vsel %vm1061, %v1054, %v1055
        %v1068 = vsel %vm1061, %v1053, %v1054
        %v1069 = vsel %vm1061, %v1060, %v1053
        %1078 = vrot.lane.b32.xlu0 %v1033, 32
        %v1079 = vpop.permute.xlu0 %1078
        %1080 = vrot.lane.b32.xlu0 %v1026, 32
        %v1081 = vpop.permute.xlu0 %1080
        %1082 = vrot.lane.b32.xlu0 %v1027, 32
        %v1083 = vpop.permute.xlu0 %1082
        %1084 = vrot.lane.b32.xlu0 %v1028, 32
        %v1085 = vpop.permute.xlu0 %1084
        %1086 = vrot.lane.b32.xlu0 %v1029, 32
        %v1087 = vpop.permute.xlu0 %1086
        %1088 = vrot.lane.b32.xlu0 %v1030, 32
        %v1089 = vpop.permute.xlu0 %1088
        %1090 = vrot.lane.b32.xlu0 %v1031, 32
        %v1091 = vpop.permute.xlu0 %1090
        %1092 = vrot.lane.b32.xlu0 %v1032, 32
        %v1093 = vpop.permute.xlu0 %1092
        %1110 = vrot.lane.b32.xlu0 %v1069, 64
        %v1111 = vpop.permute.xlu0 %1110
        %1112 = vrot.lane.b32.xlu0 %v1068, 64
        %v1113 = vpop.permute.xlu0 %1112
        %1114 = vrot.lane.b32.xlu0 %v1067, 64
        %v1115 = vpop.permute.xlu0 %1114
        %1116 = vrot.lane.b32.xlu0 %v1066, 64
        %v1117 = vpop.permute.xlu0 %1116
        %1118 = vrot.lane.b32.xlu0 %v1065, 64
        %v1119 = vpop.permute.xlu0 %1118
        %1120 = vrot.lane.b32.xlu0 %v1064, 64
        %v1121 = vpop.permute.xlu0 %1120
        %1122 = vrot.lane.b32.xlu0 %v1063, 64
        %v1123 = vpop.permute.xlu0 %1122
        %1124 = vrot.lane.b32.xlu0 %v1062, 64
        %v1125 = vpop.permute.xlu0 %1124
        %1142 = vrot.lane.b32.xlu0 %v1052, 96
        %v1143 = vpop.permute.xlu0 %1142
        %1144 = vrot.lane.b32.xlu0 %v1051, 96
        %v1145 = vpop.permute.xlu0 %1144
        %1146 = vrot.lane.b32.xlu0 %v1050, 96
        %v1147 = vpop.permute.xlu0 %1146
        %1148 = vrot.lane.b32.xlu0 %v1049, 96
        %v1149 = vpop.permute.xlu0 %1148
        %1150 = vrot.lane.b32.xlu0 %v1048, 96
        %v1151 = vpop.permute.xlu0 %1150
        %1152 = vrot.lane.b32.xlu0 %v1047, 96
        %v1153 = vpop.permute.xlu0 %1152
        %1154 = vrot.lane.b32.xlu0 %v1046, 96
        %v1155 = vpop.permute.xlu0 %1154
        %1156 = vrot.lane.b32.xlu0 %v1045, 96
        %v1157 = vpop.permute.xlu0 %1156
        %v1166 = vsel %vm741, %v1045, %v1079
        %v1167 = vsel %vm741, %v1052, %v1081
        %v1168 = vsel %vm741, %v1051, %v1083
        %v1169 = vsel %vm741, %v1050, %v1085
        %v1170 = vsel %vm741, %v1049, %v1087
        %v1171 = vsel %vm741, %v1048, %v1089
        %v1172 = vsel %vm741, %v1047, %v1091
        %v1173 = vsel %vm741, %v1046, %v1093
        %vm1174 = vcmask 523264
        %v1175 = vsel %vm1174, %v1166, %v1111
        %v1176 = vsel %vm1174, %v1167, %v1113
        %v1177 = vsel %vm1174, %v1168, %v1115
        %v1178 = vsel %vm1174, %v1169, %v1117
        %v1179 = vsel %vm1174, %v1170, %v1119
        %v1180 = vsel %vm1174, %v1171, %v1121
        %v1181 = vsel %vm1174, %v1172, %v1123
        %v1182 = vsel %vm1174, %v1173, %v1125
        %vm1183 = vcmask 785408
        %v1184 = vsel %vm1183, %v1175, %v1143
        %v1185 = vsel %vm1183, %v1176, %v1145
        %v1186 = vsel %vm1183, %v1177, %v1147
        %v1187 = vsel %vm1183, %v1178, %v1149
        %v1188 = vsel %vm1183, %v1179, %v1151
        %v1189 = vsel %vm1183, %v1180, %v1153
        %v1190 = vsel %vm1183, %v1181, %v1155
        %v1191 = vsel %vm1183, %v1182, %v1157
        %v1192 = vld [vmem:[%s7] sm:$0xff]
        %v1193 = vld [vmem:[%s7 + $0x18] sm:$0xff]
        %v1194 = vld [vmem:[%s7 + $0x30] sm:$0xff]
        %v1195 = vld [vmem:[%s7 + $0x48] sm:$0xff]
        %v1196 = vld [vmem:[%s7 + $0x60] sm:$0xff]
        %v1197 = vld [vmem:[%s7 + $0x78] sm:$0xff]
        %v1198 = vld [vmem:[%s7 + $0x90] sm:$0xff]
        %v1199 = vld [vmem:[%s7 + $0xa8] sm:$0xff]
        %v1200 = vmul.f32 %v1184, %v1192
        %v1201 = vmul.f32 %v1185, %v1193
        %v1202 = vmul.f32 %v1186, %v1194
        %v1203 = vmul.f32 %v1187, %v1195
        %v1204 = vmul.f32 %v1188, %v1196
        %v1205 = vmul.f32 %v1189, %v1197
        %v1206 = vmul.f32 %v1190, %v1198
        %v1207 = vmul.f32 %v1191, %v1199
        %v1208 = vld [vmem:[%s2] sm:$0xff]
        %v1209 = vld [vmem:[%s2 + $0x8] sm:$0xff]
        %v1210 = vld [vmem:[%s2 + $0x10] sm:$0xff]
        %v1211 = vld [vmem:[%s2 + $0x18] sm:$0xff]
        %v1212 = vld [vmem:[%s2 + $0x20] sm:$0xff]
        %v1213 = vld [vmem:[%s2 + $0x28] sm:$0xff]
        %v1214 = vld [vmem:[%s2 + $0x30] sm:$0xff]
        %v1215 = vld [vmem:[%s2 + $0x38] sm:$0xff]
        %v1216 = vld [vmem:[%s2 + $0x40] sm:$0xff]
        %v1217 = vld [vmem:[%s2 + $0x48] sm:$0xff]
        %v1218 = vld [vmem:[%s2 + $0x50] sm:$0xff]
        %v1219 = vld [vmem:[%s2 + $0x58] sm:$0xff]
        %v1220 = vld [vmem:[%s2 + $0x60] sm:$0xff]
        %v1221 = vld [vmem:[%s2 + $0x68] sm:$0xff]
        %v1222 = vld [vmem:[%s2 + $0x70] sm:$0xff]
        %v1223 = vld [vmem:[%s2 + $0x78] sm:$0xff]
        %1224 = vrot.lane.b32.xlu0 %v1068, 32
        %v1225 = vpop.permute.xlu0 %1224
        %1226 = vrot.lane.b32.xlu0 %v1067, 32
        %v1227 = vpop.permute.xlu0 %1226
        %1228 = vrot.lane.b32.xlu0 %v1066, 32
        %v1229 = vpop.permute.xlu0 %1228
        %1230 = vrot.lane.b32.xlu0 %v1065, 32
        %v1231 = vpop.permute.xlu0 %1230
        %1232 = vrot.lane.b32.xlu0 %v1064, 32
        %v1233 = vpop.permute.xlu0 %1232
        %1234 = vrot.lane.b32.xlu0 %v1063, 32
        %v1235 = vpop.permute.xlu0 %1234
        %1236 = vrot.lane.b32.xlu0 %v1062, 32
        %v1237 = vpop.permute.xlu0 %1236
        %1238 = vrot.lane.b32.xlu0 %v1069, 32
        %v1239 = vpop.permute.xlu0 %1238
        %1248 = vrot.lane.b32.xlu0 %v1051, 64
        %v1249 = vpop.permute.xlu0 %1248
        %1250 = vrot.lane.b32.xlu0 %v1050, 64
        %v1251 = vpop.permute.xlu0 %1250
        %1252 = vrot.lane.b32.xlu0 %v1049, 64
        %v1253 = vpop.permute.xlu0 %1252
        %1254 = vrot.lane.b32.xlu0 %v1048, 64
        %v1255 = vpop.permute.xlu0 %1254
        %1256 = vrot.lane.b32.xlu0 %v1047, 64
        %v1257 = vpop.permute.xlu0 %1256
        %1258 = vrot.lane.b32.xlu0 %v1046, 64
        %v1259 = vpop.permute.xlu0 %1258
        %1260 = vrot.lane.b32.xlu0 %v1045, 64
        %v1261 = vpop.permute.xlu0 %1260
        %1262 = vrot.lane.b32.xlu0 %v1052, 64
        %v1263 = vpop.permute.xlu0 %1262
        %1272 = vrot.lane.b32.xlu0 %v1027, 96
        %v1273 = vpop.permute.xlu0 %1272
        %1274 = vrot.lane.b32.xlu0 %v1028, 96
        %v1275 = vpop.permute.xlu0 %1274
        %1276 = vrot.lane.b32.xlu0 %v1029, 96
        %v1277 = vpop.permute.xlu0 %1276
        %1278 = vrot.lane.b32.xlu0 %v1030, 96
        %v1279 = vpop.permute.xlu0 %1278
        %1280 = vrot.lane.b32.xlu0 %v1031, 96
        %v1281 = vpop.permute.xlu0 %1280
        %1282 = vrot.lane.b32.xlu0 %v1032, 96
        %v1283 = vpop.permute.xlu0 %1282
        %1284 = vrot.lane.b32.xlu0 %v1033, 96
        %v1285 = vpop.permute.xlu0 %1284
        %1286 = vrot.lane.b32.xlu0 %v1026, 96
        %v1287 = vpop.permute.xlu0 %1286
        %v1296 = vsel %vm741, %v1026, %v1225
        %v1297 = vsel %vm741, %v1027, %v1227
        %v1298 = vsel %vm741, %v1028, %v1229
        %v1299 = vsel %vm741, %v1029, %v1231
        %v1300 = vsel %vm741, %v1030, %v1233
        %v1301 = vsel %vm741, %v1031, %v1235
        %v1302 = vsel %vm741, %v1032, %v1237
        %v1303 = vsel %vm741, %v1033, %v1239
        %v1304 = vsel %vm1174, %v1296, %v1249
        %v1305 = vsel %vm1174, %v1297, %v1251
        %v1306 = vsel %vm1174, %v1298, %v1253
        %v1307 = vsel %vm1174, %v1299, %v1255
        %v1308 = vsel %vm1174, %v1300, %v1257
        %v1309 = vsel %vm1174, %v1301, %v1259
        %v1310 = vsel %vm1174, %v1302, %v1261
        %v1311 = vsel %vm1174, %v1303, %v1263
        %v1312 = vsel %vm1183, %v1304, %v1273
        %v1313 = vsel %vm1183, %v1305, %v1275
        %v1314 = vsel %vm1183, %v1306, %v1277
        %v1315 = vsel %vm1183, %v1307, %v1279
        %v1316 = vsel %vm1183, %v1308, %v1281
        %v1317 = vsel %vm1183, %v1309, %v1283
        %v1318 = vsel %vm1183, %v1310, %v1285
        %v1319 = vsel %vm1183, %v1311, %v1287
        %v1320 = vld [vmem:[%s7 + $0x8] sm:$0xff]
        %v1321 = vld [vmem:[%s7 + $0x20] sm:$0xff]
        %v1322 = vld [vmem:[%s7 + $0x38] sm:$0xff]
        %v1323 = vld [vmem:[%s7 + $0x50] sm:$0xff]
        %v1324 = vld [vmem:[%s7 + $0x68] sm:$0xff]
        %v1325 = vld [vmem:[%s7 + $0x80] sm:$0xff]
        %v1326 = vld [vmem:[%s7 + $0x98] sm:$0xff]
        %v1327 = vld [vmem:[%s7 + $0xb0] sm:$0xff]
        %v1328 = vmul.f32 %v1312, %v1320
        %v1329 = vmul.f32 %v1313, %v1321
        %v1330 = vmul.f32 %v1314, %v1322
        %v1331 = vmul.f32 %v1315, %v1323
        %v1332 = vmul.f32 %v1316, %v1324
        %v1333 = vmul.f32 %v1317, %v1325
        %v1334 = vmul.f32 %v1318, %v1326
        %v1335 = vmul.f32 %v1319, %v1327
        %v1336 = vld [vmem:[%s2 + $0x80] sm:$0xff]
        %v1337 = vld [vmem:[%s2 + $0x88] sm:$0xff]
        %v1338 = vld [vmem:[%s2 + $0x90] sm:$0xff]
        %v1339 = vld [vmem:[%s2 + $0x98] sm:$0xff]
        %v1340 = vld [vmem:[%s2 + $0xa0] sm:$0xff]
        %v1341 = vld [vmem:[%s2 + $0xa8] sm:$0xff]
        %v1342 = vld [vmem:[%s2 + $0xb0] sm:$0xff]
        %v1343 = vld [vmem:[%s2 + $0xb8] sm:$0xff]
        %v1344 = vld [vmem:[%s2 + $0xc0] sm:$0xff]
        %v1345 = vld [vmem:[%s2 + $0xc8] sm:$0xff]
        %v1346 = vld [vmem:[%s2 + $0xd0] sm:$0xff]
        %v1347 = vld [vmem:[%s2 + $0xd8] sm:$0xff]
        %v1348 = vld [vmem:[%s2 + $0xe0] sm:$0xff]
        %v1349 = vld [vmem:[%s2 + $0xe8] sm:$0xff]
        %v1350 = vld [vmem:[%s2 + $0xf0] sm:$0xff]
        %v1351 = vld [vmem:[%s2 + $0xf8] sm:$0xff]
        %v1352 = vand.u32 %v1351, 4294901760
        %1353 = vmatpush.msra.mxu0 %v1352
        %v1354 = vand.u32 %v1350, 4294901760
        %1355 = vmatpush.msra.mxu0 %v1354
        %v1356 = vand.u32 %v1349, 4294901760
        %1357 = vmatpush.msra.mxu0 %v1356
        %v1358 = vand.u32 %v1348, 4294901760
        %1359 = vmatpush.msra.mxu0 %v1358
        %v1360 = vand.u32 %v1347, 4294901760
        %1361 = vmatpush.msra.mxu0 %v1360
        %v1362 = vand.u32 %v1346, 4294901760
        %1363 = vmatpush.msra.mxu0 %v1362
        %v1364 = vand.u32 %v1345, 4294901760
        %1365 = vmatpush.msra.mxu0 %v1364
        %v1366 = vand.u32 %v1344, 4294901760
        %1367 = vmatpush.msra.mxu0 %v1366
        %v1368 = vand.u32 %v1343, 4294901760
        %1369 = vmatpush.msra.mxu0 %v1368
        %v1370 = vand.u32 %v1342, 4294901760
        %1371 = vmatpush.msra.mxu0 %v1370
        %v1372 = vand.u32 %v1341, 4294901760
        %1373 = vmatpush.msra.mxu0 %v1372
        %v1374 = vand.u32 %v1340, 4294901760
        %1375 = vmatpush.msra.mxu0 %v1374
        %v1376 = vand.u32 %v1339, 4294901760
        %1377 = vmatpush.msra.mxu0 %v1376
        %v1378 = vand.u32 %v1338, 4294901760
        %1379 = vmatpush.msra.mxu0 %v1378
        %v1380 = vand.u32 %v1337, 4294901760
        %1381 = vmatpush.msra.mxu0 %v1380
        %v1382 = vand.u32 %v1336, 4294901760
        %1383 = vmatpush.msra.mxu0 %v1382
        %v1384 = vand.u32 %v1328, 4294901760
        %v1385 = vsub.f32 %v1328, %v1384
        %v1386 = vand.u32 %v1385, 4294901760
        %v1387 = vsub.f32 %v1385, %v1386
        %v1388 = vand.u32 %v1387, 4294901760
        %1389 = vmatmul.f32.gmra.mxu0 %v1388
        %v1390 = vpop.f32.mrf.mxu0
        %v1391 = vadd.f32 0.0, %v1390
        %v1392 = vand.u32 %v1329, 4294901760
        %v1393 = vsub.f32 %v1329, %v1392
        %v1394 = vand.u32 %v1393, 4294901760
        %v1395 = vsub.f32 %v1393, %v1394
        %v1396 = vand.u32 %v1395, 4294901760
        %1397 = vmatmul.f32.gmra.mxu0 %v1396
        %v1398 = vpop.f32.mrf.mxu0
        %v1399 = vadd.f32 0.0, %v1398
        %v1400 = vand.u32 %v1330, 4294901760
        %v1401 = vsub.f32 %v1330, %v1400
        %v1402 = vand.u32 %v1401, 4294901760
        %v1403 = vsub.f32 %v1401, %v1402
        %v1404 = vand.u32 %v1403, 4294901760
        %1405 = vmatmul.f32.gmra.mxu0 %v1404
        %v1406 = vpop.f32.mrf.mxu0
        %v1407 = vadd.f32 0.0, %v1406
        %v1408 = vand.u32 %v1331, 4294901760
        %v1409 = vsub.f32 %v1331, %v1408
        %v1410 = vand.u32 %v1409, 4294901760
        %v1411 = vsub.f32 %v1409, %v1410
        %v1412 = vand.u32 %v1411, 4294901760
        %1413 = vmatmul.f32.gmra.mxu0 %v1412
        %v1414 = vpop.f32.mrf.mxu0
        %v1415 = vadd.f32 0.0, %v1414
        %v1416 = vand.u32 %v1332, 4294901760
        %v1417 = vsub.f32 %v1332, %v1416
        %v1418 = vand.u32 %v1417, 4294901760
        %v1419 = vsub.f32 %v1417, %v1418
        %v1420 = vand.u32 %v1419, 4294901760
        %1421 = vmatmul.f32.gmra.mxu0 %v1420
        %v1422 = vpop.f32.mrf.mxu0
        %v1423 = vadd.f32 0.0, %v1422
        %v1424 = vand.u32 %v1333, 4294901760
        %v1425 = vsub.f32 %v1333, %v1424
        %v1426 = vand.u32 %v1425, 4294901760
        %v1427 = vsub.f32 %v1425, %v1426
        %v1428 = vand.u32 %v1427, 4294901760
        %1429 = vmatmul.f32.gmra.mxu0 %v1428
        %v1430 = vpop.f32.mrf.mxu0
        %v1431 = vadd.f32 0.0, %v1430
        %v1432 = vand.u32 %v1334, 4294901760
        %v1433 = vsub.f32 %v1334, %v1432
        %v1434 = vand.u32 %v1433, 4294901760
        %v1435 = vsub.f32 %v1433, %v1434
        %v1436 = vand.u32 %v1435, 4294901760
        %1437 = vmatmul.f32.gmra.mxu0 %v1436
        %v1438 = vpop.f32.mrf.mxu0
        %v1439 = vadd.f32 0.0, %v1438
        %v1440 = vand.u32 %v1335, 4294901760
        %v1441 = vsub.f32 %v1335, %v1440
        %v1442 = vand.u32 %v1441, 4294901760
        %v1443 = vsub.f32 %v1441, %v1442
        %v1444 = vand.u32 %v1443, 4294901760
        %1445 = vmatmul.f32.gmra.mxu0 %v1444
        %v1446 = vpop.f32.mrf.mxu0
        %v1447 = vadd.f32 0.0, %v1446
        %1448 = vdwg.mxu0
        %v1449 = vand.u32 %v1351, 4294901760
        %v1450 = vsub.f32 %v1351, %v1449
        %v1451 = vand.u32 %v1450, 4294901760
        %v1452 = vsub.f32 %v1450, %v1451
        %v1453 = vand.u32 %v1452, 4294901760
        %1454 = vmatpush.msra.mxu0 %v1453
        %v1455 = vand.u32 %v1350, 4294901760
        %v1456 = vsub.f32 %v1350, %v1455
        %v1457 = vand.u32 %v1456, 4294901760
        %v1458 = vsub.f32 %v1456, %v1457
        %v1459 = vand.u32 %v1458, 4294901760
        %1460 = vmatpush.msra.mxu0 %v1459
        %v1461 = vand.u32 %v1349, 4294901760
        %v1462 = vsub.f32 %v1349, %v1461
        %v1463 = vand.u32 %v1462, 4294901760
        %v1464 = vsub.f32 %v1462, %v1463
        %v1465 = vand.u32 %v1464, 4294901760
        %1466 = vmatpush.msra.mxu0 %v1465
        %v1467 = vand.u32 %v1348, 4294901760
        %v1468 = vsub.f32 %v1348, %v1467
        %v1469 = vand.u32 %v1468, 4294901760
        %v1470 = vsub.f32 %v1468, %v1469
        %v1471 = vand.u32 %v1470, 4294901760
        %1472 = vmatpush.msra.mxu0 %v1471
        %v1473 = vand.u32 %v1347, 4294901760
        %v1474 = vsub.f32 %v1347, %v1473
        %v1475 = vand.u32 %v1474, 4294901760
        %v1476 = vsub.f32 %v1474, %v1475
        %v1477 = vand.u32 %v1476, 4294901760
        %1478 = vmatpush.msra.mxu0 %v1477
        %v1479 = vand.u32 %v1346, 4294901760
        %v1480 = vsub.f32 %v1346, %v1479
        %v1481 = vand.u32 %v1480, 4294901760
        %v1482 = vsub.f32 %v1480, %v1481
        %v1483 = vand.u32 %v1482, 4294901760
        %1484 = vmatpush.msra.mxu0 %v1483
        %v1485 = vand.u32 %v1345, 4294901760
        %v1486 = vsub.f32 %v1345, %v1485
        %v1487 = vand.u32 %v1486, 4294901760
        %v1488 = vsub.f32 %v1486, %v1487
        %v1489 = vand.u32 %v1488, 4294901760
        %1490 = vmatpush.msra.mxu0 %v1489
        %v1491 = vand.u32 %v1344, 4294901760
        %v1492 = vsub.f32 %v1344, %v1491
        %v1493 = vand.u32 %v1492, 4294901760
        %v1494 = vsub.f32 %v1492, %v1493
        %v1495 = vand.u32 %v1494, 4294901760
        %1496 = vmatpush.msra.mxu0 %v1495
        %v1497 = vand.u32 %v1343, 4294901760
        %v1498 = vsub.f32 %v1343, %v1497
        %v1499 = vand.u32 %v1498, 4294901760
        %v1500 = vsub.f32 %v1498, %v1499
        %v1501 = vand.u32 %v1500, 4294901760
        %1502 = vmatpush.msra.mxu0 %v1501
        %v1503 = vand.u32 %v1342, 4294901760
        %v1504 = vsub.f32 %v1342, %v1503
        %v1505 = vand.u32 %v1504, 4294901760
        %v1506 = vsub.f32 %v1504, %v1505
        %v1507 = vand.u32 %v1506, 4294901760
        %1508 = vmatpush.msra.mxu0 %v1507
        %v1509 = vand.u32 %v1341, 4294901760
        %v1510 = vsub.f32 %v1341, %v1509
        %v1511 = vand.u32 %v1510, 4294901760
        %v1512 = vsub.f32 %v1510, %v1511
        %v1513 = vand.u32 %v1512, 4294901760
        %1514 = vmatpush.msra.mxu0 %v1513
        %v1515 = vand.u32 %v1340, 4294901760
        %v1516 = vsub.f32 %v1340, %v1515
        %v1517 = vand.u32 %v1516, 4294901760
        %v1518 = vsub.f32 %v1516, %v1517
        %v1519 = vand.u32 %v1518, 4294901760
        %1520 = vmatpush.msra.mxu0 %v1519
        %v1521 = vand.u32 %v1339, 4294901760
        %v1522 = vsub.f32 %v1339, %v1521
        %v1523 = vand.u32 %v1522, 4294901760
        %v1524 = vsub.f32 %v1522, %v1523
        %v1525 = vand.u32 %v1524, 4294901760
        %1526 = vmatpush.msra.mxu0 %v1525
        %v1527 = vand.u32 %v1338, 4294901760
        %v1528 = vsub.f32 %v1338, %v1527
        %v1529 = vand.u32 %v1528, 4294901760
        %v1530 = vsub.f32 %v1528, %v1529
        %v1531 = vand.u32 %v1530, 4294901760
        %1532 = vmatpush.msra.mxu0 %v1531
        %v1533 = vand.u32 %v1337, 4294901760
        %v1534 = vsub.f32 %v1337, %v1533
        %v1535 = vand.u32 %v1534, 4294901760
        %v1536 = vsub.f32 %v1534, %v1535
        %v1537 = vand.u32 %v1536, 4294901760
        %1538 = vmatpush.msra.mxu0 %v1537
        %v1539 = vand.u32 %v1336, 4294901760
        %v1540 = vsub.f32 %v1336, %v1539
        %v1541 = vand.u32 %v1540, 4294901760
        %v1542 = vsub.f32 %v1540, %v1541
        %v1543 = vand.u32 %v1542, 4294901760
        %1544 = vmatpush.msra.mxu0 %v1543
        %v1545 = vand.u32 %v1328, 4294901760
        %1546 = vmatmul.f32.gmra.mxu0 %v1545
        %v1547 = vpop.f32.mrf.mxu0
        %v1548 = vadd.f32 %v1391, %v1547
        %v1549 = vand.u32 %v1329, 4294901760
        %1550 = vmatmul.f32.gmra.mxu0 %v1549
        %v1551 = vpop.f32.mrf.mxu0
        %v1552 = vadd.f32 %v1399, %v1551
        %v1553 = vand.u32 %v1330, 4294901760
        %1554 = vmatmul.f32.gmra.mxu0 %v1553
        %v1555 = vpop.f32.mrf.mxu0
        %v1556 = vadd.f32 %v1407, %v1555
        %v1557 = vand.u32 %v1331, 4294901760
        %1558 = vmatmul.f32.gmra.mxu0 %v1557
        %v1559 = vpop.f32.mrf.mxu0
        %v1560 = vadd.f32 %v1415, %v1559
        %v1561 = vand.u32 %v1332, 4294901760
        %1562 = vmatmul.f32.gmra.mxu0 %v1561
        %v1563 = vpop.f32.mrf.mxu0
        %v1564 = vadd.f32 %v1423, %v1563
        %v1565 = vand.u32 %v1333, 4294901760
        %1566 = vmatmul.f32.gmra.mxu0 %v1565
        %v1567 = vpop.f32.mrf.mxu0
        %v1568 = vadd.f32 %v1431, %v1567
        %v1569 = vand.u32 %v1334, 4294901760
        %1570 = vmatmul.f32.gmra.mxu0 %v1569
        %v1571 = vpop.f32.mrf.mxu0
        %v1572 = vadd.f32 %v1439, %v1571
        %v1573 = vand.u32 %v1335, 4294901760
        %1574 = vmatmul.f32.gmra.mxu0 %v1573
        %v1575 = vpop.f32.mrf.mxu0
        %v1576 = vadd.f32 %v1447, %v1575
        %1577 = vdwg.mxu0
        %v1578 = vand.u32 %v1351, 4294901760
        %v1579 = vsub.f32 %v1351, %v1578
        %1580 = vmatpush.msra.mxu0 %v1579
        %v1581 = vand.u32 %v1350, 4294901760
        %v1582 = vsub.f32 %v1350, %v1581
        %1583 = vmatpush.msra.mxu0 %v1582
        %v1584 = vand.u32 %v1349, 4294901760
        %v1585 = vsub.f32 %v1349, %v1584
        %1586 = vmatpush.msra.mxu0 %v1585
        %v1587 = vand.u32 %v1348, 4294901760
        %v1588 = vsub.f32 %v1348, %v1587
        %1589 = vmatpush.msra.mxu0 %v1588
        %v1590 = vand.u32 %v1347, 4294901760
        %v1591 = vsub.f32 %v1347, %v1590
        %1592 = vmatpush.msra.mxu0 %v1591
        %v1593 = vand.u32 %v1346, 4294901760
        %v1594 = vsub.f32 %v1346, %v1593
        %1595 = vmatpush.msra.mxu0 %v1594
        %v1596 = vand.u32 %v1345, 4294901760
        %v1597 = vsub.f32 %v1345, %v1596
        %1598 = vmatpush.msra.mxu0 %v1597
        %v1599 = vand.u32 %v1344, 4294901760
        %v1600 = vsub.f32 %v1344, %v1599
        %1601 = vmatpush.msra.mxu0 %v1600
        %v1602 = vand.u32 %v1343, 4294901760
        %v1603 = vsub.f32 %v1343, %v1602
        %1604 = vmatpush.msra.mxu0 %v1603
        %v1605 = vand.u32 %v1342, 4294901760
        %v1606 = vsub.f32 %v1342, %v1605
        %1607 = vmatpush.msra.mxu0 %v1606
        %v1608 = vand.u32 %v1341, 4294901760
        %v1609 = vsub.f32 %v1341, %v1608
        %1610 = vmatpush.msra.mxu0 %v1609
        %v1611 = vand.u32 %v1340, 4294901760
        %v1612 = vsub.f32 %v1340, %v1611
        %1613 = vmatpush.msra.mxu0 %v1612
        %v1614 = vand.u32 %v1339, 4294901760
        %v1615 = vsub.f32 %v1339, %v1614
        %1616 = vmatpush.msra.mxu0 %v1615
        %v1617 = vand.u32 %v1338, 4294901760
        %v1618 = vsub.f32 %v1338, %v1617
        %1619 = vmatpush.msra.mxu0 %v1618
        %v1620 = vand.u32 %v1337, 4294901760
        %v1621 = vsub.f32 %v1337, %v1620
        %1622 = vmatpush.msra.mxu0 %v1621
        %v1623 = vand.u32 %v1336, 4294901760
        %v1624 = vsub.f32 %v1336, %v1623
        %1625 = vmatpush.msra.mxu0 %v1624
        %v1626 = vand.u32 %v1328, 4294901760
        %v1627 = vsub.f32 %v1328, %v1626
        %1628 = vmatmul.f32.gmra.mxu0 %v1627
        %v1629 = vpop.f32.mrf.mxu0
        %v1630 = vadd.f32 %v1548, %v1629
        %v1631 = vand.u32 %v1329, 4294901760
        %v1632 = vsub.f32 %v1329, %v1631
        %1633 = vmatmul.f32.gmra.mxu0 %v1632
        %v1634 = vpop.f32.mrf.mxu0
        %v1635 = vadd.f32 %v1552, %v1634
        %v1636 = vand.u32 %v1330, 4294901760
        %v1637 = vsub.f32 %v1330, %v1636
        %1638 = vmatmul.f32.gmra.mxu0 %v1637
        %v1639 = vpop.f32.mrf.mxu0
        %v1640 = vadd.f32 %v1556, %v1639
        %v1641 = vand.u32 %v1331, 4294901760
        %v1642 = vsub.f32 %v1331, %v1641
        %1643 = vmatmul.f32.gmra.mxu0 %v1642
        %v1644 = vpop.f32.mrf.mxu0
        %v1645 = vadd.f32 %v1560, %v1644
        %v1646 = vand.u32 %v1332, 4294901760
        %v1647 = vsub.f32 %v1332, %v1646
        %1648 = vmatmul.f32.gmra.mxu0 %v1647
        %v1649 = vpop.f32.mrf.mxu0
        %v1650 = vadd.f32 %v1564, %v1649
        %v1651 = vand.u32 %v1333, 4294901760
        %v1652 = vsub.f32 %v1333, %v1651
        %1653 = vmatmul.f32.gmra.mxu0 %v1652
        %v1654 = vpop.f32.mrf.mxu0
        %v1655 = vadd.f32 %v1568, %v1654
        %v1656 = vand.u32 %v1334, 4294901760
        %v1657 = vsub.f32 %v1334, %v1656
        %1658 = vmatmul.f32.gmra.mxu0 %v1657
        %v1659 = vpop.f32.mrf.mxu0
        %v1660 = vadd.f32 %v1572, %v1659
        %v1661 = vand.u32 %v1335, 4294901760
        %v1662 = vsub.f32 %v1335, %v1661
        %1663 = vmatmul.f32.gmra.mxu0 %v1662
        %v1664 = vpop.f32.mrf.mxu0
        %v1665 = vadd.f32 %v1576, %v1664
        %1666 = vdwg.mxu0
        %v1667 = vand.u32 %v1351, 4294901760
        %1668 = vmatpush.msra.mxu0 %v1667
        %v1669 = vand.u32 %v1350, 4294901760
        %1670 = vmatpush.msra.mxu0 %v1669
        %v1671 = vand.u32 %v1349, 4294901760
        %1672 = vmatpush.msra.mxu0 %v1671
        %v1673 = vand.u32 %v1348, 4294901760
        %1674 = vmatpush.msra.mxu0 %v1673
        %v1675 = vand.u32 %v1347, 4294901760
        %1676 = vmatpush.msra.mxu0 %v1675
        %v1677 = vand.u32 %v1346, 4294901760
        %1678 = vmatpush.msra.mxu0 %v1677
        %v1679 = vand.u32 %v1345, 4294901760
        %1680 = vmatpush.msra.mxu0 %v1679
        %v1681 = vand.u32 %v1344, 4294901760
        %1682 = vmatpush.msra.mxu0 %v1681
        %v1683 = vand.u32 %v1343, 4294901760
        %1684 = vmatpush.msra.mxu0 %v1683
        %v1685 = vand.u32 %v1342, 4294901760
        %1686 = vmatpush.msra.mxu0 %v1685
        %v1687 = vand.u32 %v1341, 4294901760
        %1688 = vmatpush.msra.mxu0 %v1687
        %v1689 = vand.u32 %v1340, 4294901760
        %1690 = vmatpush.msra.mxu0 %v1689
        %v1691 = vand.u32 %v1339, 4294901760
        %1692 = vmatpush.msra.mxu0 %v1691
        %v1693 = vand.u32 %v1338, 4294901760
        %1694 = vmatpush.msra.mxu0 %v1693
        %v1695 = vand.u32 %v1337, 4294901760
        %1696 = vmatpush.msra.mxu0 %v1695
        %v1697 = vand.u32 %v1336, 4294901760
        %1698 = vmatpush.msra.mxu0 %v1697
        %v1699 = vand.u32 %v1328, 4294901760
        %v1700 = vsub.f32 %v1328, %v1699
        %v1701 = vand.u32 %v1700, 4294901760
        %1702 = vmatmul.f32.gmra.mxu0 %v1701
        %v1703 = vpop.f32.mrf.mxu0
        %v1704 = vadd.f32 %v1630, %v1703
        %v1705 = vand.u32 %v1329, 4294901760
        %v1706 = vsub.f32 %v1329, %v1705
        %v1707 = vand.u32 %v1706, 4294901760
        %1708 = vmatmul.f32.gmra.mxu0 %v1707
        %v1709 = vpop.f32.mrf.mxu0
        %v1710 = vadd.f32 %v1635, %v1709
        %v1711 = vand.u32 %v1330, 4294901760
        %v1712 = vsub.f32 %v1330, %v1711
        %v1713 = vand.u32 %v1712, 4294901760
        %1714 = vmatmul.f32.gmra.mxu0 %v1713
        %v1715 = vpop.f32.mrf.mxu0
        %v1716 = vadd.f32 %v1640, %v1715
        %v1717 = vand.u32 %v1331, 4294901760
        %v1718 = vsub.f32 %v1331, %v1717
        %v1719 = vand.u32 %v1718, 4294901760
        %1720 = vmatmul.f32.gmra.mxu0 %v1719
        %v1721 = vpop.f32.mrf.mxu0
        %v1722 = vadd.f32 %v1645, %v1721
        %v1723 = vand.u32 %v1332, 4294901760
        %v1724 = vsub.f32 %v1332, %v1723
        %v1725 = vand.u32 %v1724, 4294901760
        %1726 = vmatmul.f32.gmra.mxu0 %v1725
        %v1727 = vpop.f32.mrf.mxu0
        %v1728 = vadd.f32 %v1650, %v1727
        %v1729 = vand.u32 %v1333, 4294901760
        %v1730 = vsub.f32 %v1333, %v1729
        %v1731 = vand.u32 %v1730, 4294901760
        %1732 = vmatmul.f32.gmra.mxu0 %v1731
        %v1733 = vpop.f32.mrf.mxu0
        %v1734 = vadd.f32 %v1655, %v1733
        %v1735 = vand.u32 %v1334, 4294901760
        %v1736 = vsub.f32 %v1334, %v1735
        %v1737 = vand.u32 %v1736, 4294901760
        %1738 = vmatmul.f32.gmra.mxu0 %v1737
        %v1739 = vpop.f32.mrf.mxu0
        %v1740 = vadd.f32 %v1660, %v1739
        %v1741 = vand.u32 %v1335, 4294901760
        %v1742 = vsub.f32 %v1335, %v1741
        %v1743 = vand.u32 %v1742, 4294901760
        %1744 = vmatmul.f32.gmra.mxu0 %v1743
        %v1745 = vpop.f32.mrf.mxu0
        %v1746 = vadd.f32 %v1665, %v1745
        %1747 = vdwg.mxu0
        %v1748 = vand.u32 %v1351, 4294901760
        %v1749 = vsub.f32 %v1351, %v1748
        %v1750 = vand.u32 %v1749, 4294901760
        %1751 = vmatpush.msra.mxu0 %v1750
        %v1752 = vand.u32 %v1350, 4294901760
        %v1753 = vsub.f32 %v1350, %v1752
        %v1754 = vand.u32 %v1753, 4294901760
        %1755 = vmatpush.msra.mxu0 %v1754
        %v1756 = vand.u32 %v1349, 4294901760
        %v1757 = vsub.f32 %v1349, %v1756
        %v1758 = vand.u32 %v1757, 4294901760
        %1759 = vmatpush.msra.mxu0 %v1758
        %v1760 = vand.u32 %v1348, 4294901760
        %v1761 = vsub.f32 %v1348, %v1760
        %v1762 = vand.u32 %v1761, 4294901760
        %1763 = vmatpush.msra.mxu0 %v1762
        %v1764 = vand.u32 %v1347, 4294901760
        %v1765 = vsub.f32 %v1347, %v1764
        %v1766 = vand.u32 %v1765, 4294901760
        %1767 = vmatpush.msra.mxu0 %v1766
        %v1768 = vand.u32 %v1346, 4294901760
        %v1769 = vsub.f32 %v1346, %v1768
        %v1770 = vand.u32 %v1769, 4294901760
        %1771 = vmatpush.msra.mxu0 %v1770
        %v1772 = vand.u32 %v1345, 4294901760
        %v1773 = vsub.f32 %v1345, %v1772
        %v1774 = vand.u32 %v1773, 4294901760
        %1775 = vmatpush.msra.mxu0 %v1774
        %v1776 = vand.u32 %v1344, 4294901760
        %v1777 = vsub.f32 %v1344, %v1776
        %v1778 = vand.u32 %v1777, 4294901760
        %1779 = vmatpush.msra.mxu0 %v1778
        %v1780 = vand.u32 %v1343, 4294901760
        %v1781 = vsub.f32 %v1343, %v1780
        %v1782 = vand.u32 %v1781, 4294901760
        %1783 = vmatpush.msra.mxu0 %v1782
        %v1784 = vand.u32 %v1342, 4294901760
        %v1785 = vsub.f32 %v1342, %v1784
        %v1786 = vand.u32 %v1785, 4294901760
        %1787 = vmatpush.msra.mxu0 %v1786
        %v1788 = vand.u32 %v1341, 4294901760
        %v1789 = vsub.f32 %v1341, %v1788
        %v1790 = vand.u32 %v1789, 4294901760
        %1791 = vmatpush.msra.mxu0 %v1790
        %v1792 = vand.u32 %v1340, 4294901760
        %v1793 = vsub.f32 %v1340, %v1792
        %v1794 = vand.u32 %v1793, 4294901760
        %1795 = vmatpush.msra.mxu0 %v1794
        %v1796 = vand.u32 %v1339, 4294901760
        %v1797 = vsub.f32 %v1339, %v1796
        %v1798 = vand.u32 %v1797, 4294901760
        %1799 = vmatpush.msra.mxu0 %v1798
        %v1800 = vand.u32 %v1338, 4294901760
        %v1801 = vsub.f32 %v1338, %v1800
        %v1802 = vand.u32 %v1801, 4294901760
        %1803 = vmatpush.msra.mxu0 %v1802
        %v1804 = vand.u32 %v1337, 4294901760
        %v1805 = vsub.f32 %v1337, %v1804
        %v1806 = vand.u32 %v1805, 4294901760
        %1807 = vmatpush.msra.mxu0 %v1806
        %v1808 = vand.u32 %v1336, 4294901760
        %v1809 = vsub.f32 %v1336, %v1808
        %v1810 = vand.u32 %v1809, 4294901760
        %1811 = vmatpush.msra.mxu0 %v1810
        %v1812 = vand.u32 %v1328, 4294901760
        %1813 = vmatmul.f32.gmra.mxu0 %v1812
        %v1814 = vpop.f32.mrf.mxu0
        %v1815 = vadd.f32 %v1704, %v1814
        %v1816 = vand.u32 %v1329, 4294901760
        %1817 = vmatmul.f32.gmra.mxu0 %v1816
        %v1818 = vpop.f32.mrf.mxu0
        %v1819 = vadd.f32 %v1710, %v1818
        %v1820 = vand.u32 %v1330, 4294901760
        %1821 = vmatmul.f32.gmra.mxu0 %v1820
        %v1822 = vpop.f32.mrf.mxu0
        %v1823 = vadd.f32 %v1716, %v1822
        %v1824 = vand.u32 %v1331, 4294901760
        %1825 = vmatmul.f32.gmra.mxu0 %v1824
        %v1826 = vpop.f32.mrf.mxu0
        %v1827 = vadd.f32 %v1722, %v1826
        %v1828 = vand.u32 %v1332, 4294901760
        %1829 = vmatmul.f32.gmra.mxu0 %v1828
        %v1830 = vpop.f32.mrf.mxu0
        %v1831 = vadd.f32 %v1728, %v1830
        %v1832 = vand.u32 %v1333, 4294901760
        %1833 = vmatmul.f32.gmra.mxu0 %v1832
        %v1834 = vpop.f32.mrf.mxu0
        %v1835 = vadd.f32 %v1734, %v1834
        %v1836 = vand.u32 %v1334, 4294901760
        %1837 = vmatmul.f32.gmra.mxu0 %v1836
        %v1838 = vpop.f32.mrf.mxu0
        %v1839 = vadd.f32 %v1740, %v1838
        %v1840 = vand.u32 %v1335, 4294901760
        %1841 = vmatmul.f32.gmra.mxu0 %v1840
        %v1842 = vpop.f32.mrf.mxu0
        %v1843 = vadd.f32 %v1746, %v1842
        %1844 = vdwg.mxu0
        %v1845 = vand.u32 %v1351, 4294901760
        %1846 = vmatpush.msra.mxu0 %v1845
        %v1847 = vand.u32 %v1350, 4294901760
        %1848 = vmatpush.msra.mxu0 %v1847
        %v1849 = vand.u32 %v1349, 4294901760
        %1850 = vmatpush.msra.mxu0 %v1849
        %v1851 = vand.u32 %v1348, 4294901760
        %1852 = vmatpush.msra.mxu0 %v1851
        %v1853 = vand.u32 %v1347, 4294901760
        %1854 = vmatpush.msra.mxu0 %v1853
        %v1855 = vand.u32 %v1346, 4294901760
        %1856 = vmatpush.msra.mxu0 %v1855
        %v1857 = vand.u32 %v1345, 4294901760
        %1858 = vmatpush.msra.mxu0 %v1857
        %v1859 = vand.u32 %v1344, 4294901760
        %1860 = vmatpush.msra.mxu0 %v1859
        %v1861 = vand.u32 %v1343, 4294901760
        %1862 = vmatpush.msra.mxu0 %v1861
        %v1863 = vand.u32 %v1342, 4294901760
        %1864 = vmatpush.msra.mxu0 %v1863
        %v1865 = vand.u32 %v1341, 4294901760
        %1866 = vmatpush.msra.mxu0 %v1865
        %v1867 = vand.u32 %v1340, 4294901760
        %1868 = vmatpush.msra.mxu0 %v1867
        %v1869 = vand.u32 %v1339, 4294901760
        %1870 = vmatpush.msra.mxu0 %v1869
        %v1871 = vand.u32 %v1338, 4294901760
        %1872 = vmatpush.msra.mxu0 %v1871
        %v1873 = vand.u32 %v1337, 4294901760
        %1874 = vmatpush.msra.mxu0 %v1873
        %v1875 = vand.u32 %v1336, 4294901760
        %1876 = vmatpush.msra.mxu0 %v1875
        %v1877 = vand.u32 %v1328, 4294901760
        %1878 = vmatmul.f32.gmra.mxu0 %v1877
        %v1879 = vpop.f32.mrf.mxu0
        %v1880 = vadd.f32 %v1815, %v1879
        %v1881 = vand.u32 %v1329, 4294901760
        %1882 = vmatmul.f32.gmra.mxu0 %v1881
        %v1883 = vpop.f32.mrf.mxu0
        %v1884 = vadd.f32 %v1819, %v1883
        %v1885 = vand.u32 %v1330, 4294901760
        %1886 = vmatmul.f32.gmra.mxu0 %v1885
        %v1887 = vpop.f32.mrf.mxu0
        %v1888 = vadd.f32 %v1823, %v1887
        %v1889 = vand.u32 %v1331, 4294901760
        %1890 = vmatmul.f32.gmra.mxu0 %v1889
        %v1891 = vpop.f32.mrf.mxu0
        %v1892 = vadd.f32 %v1827, %v1891
        %v1893 = vand.u32 %v1332, 4294901760
        %1894 = vmatmul.f32.gmra.mxu0 %v1893
        %v1895 = vpop.f32.mrf.mxu0
        %v1896 = vadd.f32 %v1831, %v1895
        %v1897 = vand.u32 %v1333, 4294901760
        %1898 = vmatmul.f32.gmra.mxu0 %v1897
        %v1899 = vpop.f32.mrf.mxu0
        %v1900 = vadd.f32 %v1835, %v1899
        %v1901 = vand.u32 %v1334, 4294901760
        %1902 = vmatmul.f32.gmra.mxu0 %v1901
        %v1903 = vpop.f32.mrf.mxu0
        %v1904 = vadd.f32 %v1839, %v1903
        %v1905 = vand.u32 %v1335, 4294901760
        %1906 = vmatmul.f32.gmra.mxu0 %v1905
        %v1907 = vpop.f32.mrf.mxu0
        %v1908 = vadd.f32 %v1843, %v1907
        %1909 = vdwg.mxu0
        %v1910 = vand.u32 %v1223, 4294901760
        %1911 = vmatpush.msra.mxu0 %v1910
        %v1912 = vand.u32 %v1222, 4294901760
        %1913 = vmatpush.msra.mxu0 %v1912
        %v1914 = vand.u32 %v1221, 4294901760
        %1915 = vmatpush.msra.mxu0 %v1914
        %v1916 = vand.u32 %v1220, 4294901760
        %1917 = vmatpush.msra.mxu0 %v1916
        %v1918 = vand.u32 %v1219, 4294901760
        %1919 = vmatpush.msra.mxu0 %v1918
        %v1920 = vand.u32 %v1218, 4294901760
        %1921 = vmatpush.msra.mxu0 %v1920
        %v1922 = vand.u32 %v1217, 4294901760
        %1923 = vmatpush.msra.mxu0 %v1922
        %v1924 = vand.u32 %v1216, 4294901760
        %1925 = vmatpush.msra.mxu0 %v1924
        %v1926 = vand.u32 %v1215, 4294901760
        %1927 = vmatpush.msra.mxu0 %v1926
        %v1928 = vand.u32 %v1214, 4294901760
        %1929 = vmatpush.msra.mxu0 %v1928
        %v1930 = vand.u32 %v1213, 4294901760
        %1931 = vmatpush.msra.mxu0 %v1930
        %v1932 = vand.u32 %v1212, 4294901760
        %1933 = vmatpush.msra.mxu0 %v1932
        %v1934 = vand.u32 %v1211, 4294901760
        %1935 = vmatpush.msra.mxu0 %v1934
        %v1936 = vand.u32 %v1210, 4294901760
        %1937 = vmatpush.msra.mxu0 %v1936
        %v1938 = vand.u32 %v1209, 4294901760
        %1939 = vmatpush.msra.mxu0 %v1938
        %v1940 = vand.u32 %v1208, 4294901760
        %1941 = vmatpush.msra.mxu0 %v1940
        %v1942 = vand.u32 %v1200, 4294901760
        %v1943 = vsub.f32 %v1200, %v1942
        %v1944 = vand.u32 %v1943, 4294901760
        %v1945 = vsub.f32 %v1943, %v1944
        %v1946 = vand.u32 %v1945, 4294901760
        %1947 = vmatmul.f32.gmra.mxu0 %v1946
        %v1948 = vpop.f32.mrf.mxu0
        %v1949 = vadd.f32 %v1880, %v1948
        %v1950 = vand.u32 %v1201, 4294901760
        %v1951 = vsub.f32 %v1201, %v1950
        %v1952 = vand.u32 %v1951, 4294901760
        %v1953 = vsub.f32 %v1951, %v1952
        %v1954 = vand.u32 %v1953, 4294901760
        %1955 = vmatmul.f32.gmra.mxu0 %v1954
        %v1956 = vpop.f32.mrf.mxu0
        %v1957 = vadd.f32 %v1884, %v1956
        %v1958 = vand.u32 %v1202, 4294901760
        %v1959 = vsub.f32 %v1202, %v1958
        %v1960 = vand.u32 %v1959, 4294901760
        %v1961 = vsub.f32 %v1959, %v1960
        %v1962 = vand.u32 %v1961, 4294901760
        %1963 = vmatmul.f32.gmra.mxu0 %v1962
        %v1964 = vpop.f32.mrf.mxu0
        %v1965 = vadd.f32 %v1888, %v1964
        %v1966 = vand.u32 %v1203, 4294901760
        %v1967 = vsub.f32 %v1203, %v1966
        %v1968 = vand.u32 %v1967, 4294901760
        %v1969 = vsub.f32 %v1967, %v1968
        %v1970 = vand.u32 %v1969, 4294901760
        %1971 = vmatmul.f32.gmra.mxu0 %v1970
        %v1972 = vpop.f32.mrf.mxu0
        %v1973 = vadd.f32 %v1892, %v1972
        %v1974 = vand.u32 %v1204, 4294901760
        %v1975 = vsub.f32 %v1204, %v1974
        %v1976 = vand.u32 %v1975, 4294901760
        %v1977 = vsub.f32 %v1975, %v1976
        %v1978 = vand.u32 %v1977, 4294901760
        %1979 = vmatmul.f32.gmra.mxu0 %v1978
        %v1980 = vpop.f32.mrf.mxu0
        %v1981 = vadd.f32 %v1896, %v1980
        %v1982 = vand.u32 %v1205, 4294901760
        %v1983 = vsub.f32 %v1205, %v1982
        %v1984 = vand.u32 %v1983, 4294901760
        %v1985 = vsub.f32 %v1983, %v1984
        %v1986 = vand.u32 %v1985, 4294901760
        %1987 = vmatmul.f32.gmra.mxu0 %v1986
        %v1988 = vpop.f32.mrf.mxu0
        %v1989 = vadd.f32 %v1900, %v1988
        %v1990 = vand.u32 %v1206, 4294901760
        %v1991 = vsub.f32 %v1206, %v1990
        %v1992 = vand.u32 %v1991, 4294901760
        %v1993 = vsub.f32 %v1991, %v1992
        %v1994 = vand.u32 %v1993, 4294901760
        %1995 = vmatmul.f32.gmra.mxu0 %v1994
        %v1996 = vpop.f32.mrf.mxu0
        %v1997 = vadd.f32 %v1904, %v1996
        %v1998 = vand.u32 %v1207, 4294901760
        %v1999 = vsub.f32 %v1207, %v1998
        %v2000 = vand.u32 %v1999, 4294901760
        %v2001 = vsub.f32 %v1999, %v2000
        %v2002 = vand.u32 %v2001, 4294901760
        %2003 = vmatmul.f32.gmra.mxu0 %v2002
        %v2004 = vpop.f32.mrf.mxu0
        %v2005 = vadd.f32 %v1908, %v2004
        %2006 = vdwg.mxu0
        %v2007 = vand.u32 %v1223, 4294901760
        %v2008 = vsub.f32 %v1223, %v2007
        %v2009 = vand.u32 %v2008, 4294901760
        %v2010 = vsub.f32 %v2008, %v2009
        %v2011 = vand.u32 %v2010, 4294901760
        %2012 = vmatpush.msra.mxu0 %v2011
        %v2013 = vand.u32 %v1222, 4294901760
        %v2014 = vsub.f32 %v1222, %v2013
        %v2015 = vand.u32 %v2014, 4294901760
        %v2016 = vsub.f32 %v2014, %v2015
        %v2017 = vand.u32 %v2016, 4294901760
        %2018 = vmatpush.msra.mxu0 %v2017
        %v2019 = vand.u32 %v1221, 4294901760
        %v2020 = vsub.f32 %v1221, %v2019
        %v2021 = vand.u32 %v2020, 4294901760
        %v2022 = vsub.f32 %v2020, %v2021
        %v2023 = vand.u32 %v2022, 4294901760
        %2024 = vmatpush.msra.mxu0 %v2023
        %v2025 = vand.u32 %v1220, 4294901760
        %v2026 = vsub.f32 %v1220, %v2025
        %v2027 = vand.u32 %v2026, 4294901760
        %v2028 = vsub.f32 %v2026, %v2027
        %v2029 = vand.u32 %v2028, 4294901760
        %2030 = vmatpush.msra.mxu0 %v2029
        %v2031 = vand.u32 %v1219, 4294901760
        %v2032 = vsub.f32 %v1219, %v2031
        %v2033 = vand.u32 %v2032, 4294901760
        %v2034 = vsub.f32 %v2032, %v2033
        %v2035 = vand.u32 %v2034, 4294901760
        %2036 = vmatpush.msra.mxu0 %v2035
        %v2037 = vand.u32 %v1218, 4294901760
        %v2038 = vsub.f32 %v1218, %v2037
        %v2039 = vand.u32 %v2038, 4294901760
        %v2040 = vsub.f32 %v2038, %v2039
        %v2041 = vand.u32 %v2040, 4294901760
        %2042 = vmatpush.msra.mxu0 %v2041
        %v2043 = vand.u32 %v1217, 4294901760
        %v2044 = vsub.f32 %v1217, %v2043
        %v2045 = vand.u32 %v2044, 4294901760
        %v2046 = vsub.f32 %v2044, %v2045
        %v2047 = vand.u32 %v2046, 4294901760
        %2048 = vmatpush.msra.mxu0 %v2047
        %v2049 = vand.u32 %v1216, 4294901760
        %v2050 = vsub.f32 %v1216, %v2049
        %v2051 = vand.u32 %v2050, 4294901760
        %v2052 = vsub.f32 %v2050, %v2051
        %v2053 = vand.u32 %v2052, 4294901760
        %2054 = vmatpush.msra.mxu0 %v2053
        %v2055 = vand.u32 %v1215, 4294901760
        %v2056 = vsub.f32 %v1215, %v2055
        %v2057 = vand.u32 %v2056, 4294901760
        %v2058 = vsub.f32 %v2056, %v2057
        %v2059 = vand.u32 %v2058, 4294901760
        %2060 = vmatpush.msra.mxu0 %v2059
        %v2061 = vand.u32 %v1214, 4294901760
        %v2062 = vsub.f32 %v1214, %v2061
        %v2063 = vand.u32 %v2062, 4294901760
        %v2064 = vsub.f32 %v2062, %v2063
        %v2065 = vand.u32 %v2064, 4294901760
        %2066 = vmatpush.msra.mxu0 %v2065
        %v2067 = vand.u32 %v1213, 4294901760
        %v2068 = vsub.f32 %v1213, %v2067
        %v2069 = vand.u32 %v2068, 4294901760
        %v2070 = vsub.f32 %v2068, %v2069
        %v2071 = vand.u32 %v2070, 4294901760
        %2072 = vmatpush.msra.mxu0 %v2071
        %v2073 = vand.u32 %v1212, 4294901760
        %v2074 = vsub.f32 %v1212, %v2073
        %v2075 = vand.u32 %v2074, 4294901760
        %v2076 = vsub.f32 %v2074, %v2075
        %v2077 = vand.u32 %v2076, 4294901760
        %2078 = vmatpush.msra.mxu0 %v2077
        %v2079 = vand.u32 %v1211, 4294901760
        %v2080 = vsub.f32 %v1211, %v2079
        %v2081 = vand.u32 %v2080, 4294901760
        %v2082 = vsub.f32 %v2080, %v2081
        %v2083 = vand.u32 %v2082, 4294901760
        %2084 = vmatpush.msra.mxu0 %v2083
        %v2085 = vand.u32 %v1210, 4294901760
        %v2086 = vsub.f32 %v1210, %v2085
        %v2087 = vand.u32 %v2086, 4294901760
        %v2088 = vsub.f32 %v2086, %v2087
        %v2089 = vand.u32 %v2088, 4294901760
        %2090 = vmatpush.msra.mxu0 %v2089
        %v2091 = vand.u32 %v1209, 4294901760
        %v2092 = vsub.f32 %v1209, %v2091
        %v2093 = vand.u32 %v2092, 4294901760
        %v2094 = vsub.f32 %v2092, %v2093
        %v2095 = vand.u32 %v2094, 4294901760
        %2096 = vmatpush.msra.mxu0 %v2095
        %v2097 = vand.u32 %v1208, 4294901760
        %v2098 = vsub.f32 %v1208, %v2097
        %v2099 = vand.u32 %v2098, 4294901760
        %v2100 = vsub.f32 %v2098, %v2099
        %v2101 = vand.u32 %v2100, 4294901760
        %2102 = vmatpush.msra.mxu0 %v2101
        %v2103 = vand.u32 %v1200, 4294901760
        %2104 = vmatmul.f32.gmra.mxu0 %v2103
        %v2105 = vpop.f32.mrf.mxu0
        %v2106 = vadd.f32 %v1949, %v2105
        %v2107 = vand.u32 %v1201, 4294901760
        %2108 = vmatmul.f32.gmra.mxu0 %v2107
        %v2109 = vpop.f32.mrf.mxu0
        %v2110 = vadd.f32 %v1957, %v2109
        %v2111 = vand.u32 %v1202, 4294901760
        %2112 = vmatmul.f32.gmra.mxu0 %v2111
        %v2113 = vpop.f32.mrf.mxu0
        %v2114 = vadd.f32 %v1965, %v2113
        %v2115 = vand.u32 %v1203, 4294901760
        %2116 = vmatmul.f32.gmra.mxu0 %v2115
        %v2117 = vpop.f32.mrf.mxu0
        %v2118 = vadd.f32 %v1973, %v2117
        %v2119 = vand.u32 %v1204, 4294901760
        %2120 = vmatmul.f32.gmra.mxu0 %v2119
        %v2121 = vpop.f32.mrf.mxu0
        %v2122 = vadd.f32 %v1981, %v2121
        %v2123 = vand.u32 %v1205, 4294901760
        %2124 = vmatmul.f32.gmra.mxu0 %v2123
        %v2125 = vpop.f32.mrf.mxu0
        %v2126 = vadd.f32 %v1989, %v2125
        %v2127 = vand.u32 %v1206, 4294901760
        %2128 = vmatmul.f32.gmra.mxu0 %v2127
        %v2129 = vpop.f32.mrf.mxu0
        %v2130 = vadd.f32 %v1997, %v2129
        %v2131 = vand.u32 %v1207, 4294901760
        %2132 = vmatmul.f32.gmra.mxu0 %v2131
        %v2133 = vpop.f32.mrf.mxu0
        %v2134 = vadd.f32 %v2005, %v2133
        %2135 = vdwg.mxu0
        %v2136 = vand.u32 %v1223, 4294901760
        %v2137 = vsub.f32 %v1223, %v2136
        %2138 = vmatpush.msra.mxu0 %v2137
        %v2139 = vand.u32 %v1222, 4294901760
        %v2140 = vsub.f32 %v1222, %v2139
        %2141 = vmatpush.msra.mxu0 %v2140
        %v2142 = vand.u32 %v1221, 4294901760
        %v2143 = vsub.f32 %v1221, %v2142
        %2144 = vmatpush.msra.mxu0 %v2143
        %v2145 = vand.u32 %v1220, 4294901760
        %v2146 = vsub.f32 %v1220, %v2145
        %2147 = vmatpush.msra.mxu0 %v2146
        %v2148 = vand.u32 %v1219, 4294901760
        %v2149 = vsub.f32 %v1219, %v2148
        %2150 = vmatpush.msra.mxu0 %v2149
        %v2151 = vand.u32 %v1218, 4294901760
        %v2152 = vsub.f32 %v1218, %v2151
        %2153 = vmatpush.msra.mxu0 %v2152
        %v2154 = vand.u32 %v1217, 4294901760
        %v2155 = vsub.f32 %v1217, %v2154
        %2156 = vmatpush.msra.mxu0 %v2155
        %v2157 = vand.u32 %v1216, 4294901760
        %v2158 = vsub.f32 %v1216, %v2157
        %2159 = vmatpush.msra.mxu0 %v2158
        %v2160 = vand.u32 %v1215, 4294901760
        %v2161 = vsub.f32 %v1215, %v2160
        %2162 = vmatpush.msra.mxu0 %v2161
        %v2163 = vand.u32 %v1214, 4294901760
        %v2164 = vsub.f32 %v1214, %v2163
        %2165 = vmatpush.msra.mxu0 %v2164
        %v2166 = vand.u32 %v1213, 4294901760
        %v2167 = vsub.f32 %v1213, %v2166
        %2168 = vmatpush.msra.mxu0 %v2167
        %v2169 = vand.u32 %v1212, 4294901760
        %v2170 = vsub.f32 %v1212, %v2169
        %2171 = vmatpush.msra.mxu0 %v2170
        %v2172 = vand.u32 %v1211, 4294901760
        %v2173 = vsub.f32 %v1211, %v2172
        %2174 = vmatpush.msra.mxu0 %v2173
        %v2175 = vand.u32 %v1210, 4294901760
        %v2176 = vsub.f32 %v1210, %v2175
        %2177 = vmatpush.msra.mxu0 %v2176
        %v2178 = vand.u32 %v1209, 4294901760
        %v2179 = vsub.f32 %v1209, %v2178
        %2180 = vmatpush.msra.mxu0 %v2179
        %v2181 = vand.u32 %v1208, 4294901760
        %v2182 = vsub.f32 %v1208, %v2181
        %2183 = vmatpush.msra.mxu0 %v2182
        %v2184 = vand.u32 %v1200, 4294901760
        %v2185 = vsub.f32 %v1200, %v2184
        %2186 = vmatmul.f32.gmra.mxu0 %v2185
        %v2187 = vpop.f32.mrf.mxu0
        %v2188 = vadd.f32 %v2106, %v2187
        %v2189 = vand.u32 %v1201, 4294901760
        %v2190 = vsub.f32 %v1201, %v2189
        %2191 = vmatmul.f32.gmra.mxu0 %v2190
        %v2192 = vpop.f32.mrf.mxu0
        %v2193 = vadd.f32 %v2110, %v2192
        %v2194 = vand.u32 %v1202, 4294901760
        %v2195 = vsub.f32 %v1202, %v2194
        %2196 = vmatmul.f32.gmra.mxu0 %v2195
        %v2197 = vpop.f32.mrf.mxu0
        %v2198 = vadd.f32 %v2114, %v2197
        %v2199 = vand.u32 %v1203, 4294901760
        %v2200 = vsub.f32 %v1203, %v2199
        %2201 = vmatmul.f32.gmra.mxu0 %v2200
        %v2202 = vpop.f32.mrf.mxu0
        %v2203 = vadd.f32 %v2118, %v2202
        %v2204 = vand.u32 %v1204, 4294901760
        %v2205 = vsub.f32 %v1204, %v2204
        %2206 = vmatmul.f32.gmra.mxu0 %v2205
        %v2207 = vpop.f32.mrf.mxu0
        %v2208 = vadd.f32 %v2122, %v2207
        %v2209 = vand.u32 %v1205, 4294901760
        %v2210 = vsub.f32 %v1205, %v2209
        %2211 = vmatmul.f32.gmra.mxu0 %v2210
        %v2212 = vpop.f32.mrf.mxu0
        %v2213 = vadd.f32 %v2126, %v2212
        %v2214 = vand.u32 %v1206, 4294901760
        %v2215 = vsub.f32 %v1206, %v2214
        %2216 = vmatmul.f32.gmra.mxu0 %v2215
        %v2217 = vpop.f32.mrf.mxu0
        %v2218 = vadd.f32 %v2130, %v2217
        %v2219 = vand.u32 %v1207, 4294901760
        %v2220 = vsub.f32 %v1207, %v2219
        %2221 = vmatmul.f32.gmra.mxu0 %v2220
        %v2222 = vpop.f32.mrf.mxu0
        %v2223 = vadd.f32 %v2134, %v2222
        %2224 = vdwg.mxu0
        %v2225 = vand.u32 %v1223, 4294901760
        %2226 = vmatpush.msra.mxu0 %v2225
        %v2227 = vand.u32 %v1222, 4294901760
        %2228 = vmatpush.msra.mxu0 %v2227
        %v2229 = vand.u32 %v1221, 4294901760
        %2230 = vmatpush.msra.mxu0 %v2229
        %v2231 = vand.u32 %v1220, 4294901760
        %2232 = vmatpush.msra.mxu0 %v2231
        %v2233 = vand.u32 %v1219, 4294901760
        %2234 = vmatpush.msra.mxu0 %v2233
        %v2235 = vand.u32 %v1218, 4294901760
        %2236 = vmatpush.msra.mxu0 %v2235
        %v2237 = vand.u32 %v1217, 4294901760
        %2238 = vmatpush.msra.mxu0 %v2237
        %v2239 = vand.u32 %v1216, 4294901760
        %2240 = vmatpush.msra.mxu0 %v2239
        %v2241 = vand.u32 %v1215, 4294901760
        %2242 = vmatpush.msra.mxu0 %v2241
        %v2243 = vand.u32 %v1214, 4294901760
        %2244 = vmatpush.msra.mxu0 %v2243
        %v2245 = vand.u32 %v1213, 4294901760
        %2246 = vmatpush.msra.mxu0 %v2245
        %v2247 = vand.u32 %v1212, 4294901760
        %2248 = vmatpush.msra.mxu0 %v2247
        %v2249 = vand.u32 %v1211, 4294901760
        %2250 = vmatpush.msra.mxu0 %v2249
        %v2251 = vand.u32 %v1210, 4294901760
        %2252 = vmatpush.msra.mxu0 %v2251
        %v2253 = vand.u32 %v1209, 4294901760
        %2254 = vmatpush.msra.mxu0 %v2253
        %v2255 = vand.u32 %v1208, 4294901760
        %2256 = vmatpush.msra.mxu0 %v2255
        %v2257 = vand.u32 %v1200, 4294901760
        %v2258 = vsub.f32 %v1200, %v2257
        %v2259 = vand.u32 %v2258, 4294901760
        %2260 = vmatmul.f32.gmra.mxu0 %v2259
        %v2261 = vpop.f32.mrf.mxu0
        %v2262 = vadd.f32 %v2188, %v2261
        %v2263 = vand.u32 %v1201, 4294901760
        %v2264 = vsub.f32 %v1201, %v2263
        %v2265 = vand.u32 %v2264, 4294901760
        %2266 = vmatmul.f32.gmra.mxu0 %v2265
        %v2267 = vpop.f32.mrf.mxu0
        %v2268 = vadd.f32 %v2193, %v2267
        %v2269 = vand.u32 %v1202, 4294901760
        %v2270 = vsub.f32 %v1202, %v2269
        %v2271 = vand.u32 %v2270, 4294901760
        %2272 = vmatmul.f32.gmra.mxu0 %v2271
        %v2273 = vpop.f32.mrf.mxu0
        %v2274 = vadd.f32 %v2198, %v2273
        %v2275 = vand.u32 %v1203, 4294901760
        %v2276 = vsub.f32 %v1203, %v2275
        %v2277 = vand.u32 %v2276, 4294901760
        %2278 = vmatmul.f32.gmra.mxu0 %v2277
        %v2279 = vpop.f32.mrf.mxu0
        %v2280 = vadd.f32 %v2203, %v2279
        %v2281 = vand.u32 %v1204, 4294901760
        %v2282 = vsub.f32 %v1204, %v2281
        %v2283 = vand.u32 %v2282, 4294901760
        %2284 = vmatmul.f32.gmra.mxu0 %v2283
        %v2285 = vpop.f32.mrf.mxu0
        %v2286 = vadd.f32 %v2208, %v2285
        %v2287 = vand.u32 %v1205, 4294901760
        %v2288 = vsub.f32 %v1205, %v2287
        %v2289 = vand.u32 %v2288, 4294901760
        %2290 = vmatmul.f32.gmra.mxu0 %v2289
        %v2291 = vpop.f32.mrf.mxu0
        %v2292 = vadd.f32 %v2213, %v2291
        %v2293 = vand.u32 %v1206, 4294901760
        %v2294 = vsub.f32 %v1206, %v2293
        %v2295 = vand.u32 %v2294, 4294901760
        %2296 = vmatmul.f32.gmra.mxu0 %v2295
        %v2297 = vpop.f32.mrf.mxu0
        %v2298 = vadd.f32 %v2218, %v2297
        %v2299 = vand.u32 %v1207, 4294901760
        %v2300 = vsub.f32 %v1207, %v2299
        %v2301 = vand.u32 %v2300, 4294901760
        %2302 = vmatmul.f32.gmra.mxu0 %v2301
        %v2303 = vpop.f32.mrf.mxu0
        %v2304 = vadd.f32 %v2223, %v2303
        %2305 = vdwg.mxu0
        %v2306 = vand.u32 %v1223, 4294901760
        %v2307 = vsub.f32 %v1223, %v2306
        %v2308 = vand.u32 %v2307, 4294901760
        %2309 = vmatpush.msra.mxu0 %v2308
        %v2310 = vand.u32 %v1222, 4294901760
        %v2311 = vsub.f32 %v1222, %v2310
        %v2312 = vand.u32 %v2311, 4294901760
        %2313 = vmatpush.msra.mxu0 %v2312
        %v2314 = vand.u32 %v1221, 4294901760
        %v2315 = vsub.f32 %v1221, %v2314
        %v2316 = vand.u32 %v2315, 4294901760
        %2317 = vmatpush.msra.mxu0 %v2316
        %v2318 = vand.u32 %v1220, 4294901760
        %v2319 = vsub.f32 %v1220, %v2318
        %v2320 = vand.u32 %v2319, 4294901760
        %2321 = vmatpush.msra.mxu0 %v2320
        %v2322 = vand.u32 %v1219, 4294901760
        %v2323 = vsub.f32 %v1219, %v2322
        %v2324 = vand.u32 %v2323, 4294901760
        %2325 = vmatpush.msra.mxu0 %v2324
        %v2326 = vand.u32 %v1218, 4294901760
        %v2327 = vsub.f32 %v1218, %v2326
        %v2328 = vand.u32 %v2327, 4294901760
        %2329 = vmatpush.msra.mxu0 %v2328
        %v2330 = vand.u32 %v1217, 4294901760
        %v2331 = vsub.f32 %v1217, %v2330
        %v2332 = vand.u32 %v2331, 4294901760
        %2333 = vmatpush.msra.mxu0 %v2332
        %v2334 = vand.u32 %v1216, 4294901760
        %v2335 = vsub.f32 %v1216, %v2334
        %v2336 = vand.u32 %v2335, 4294901760
        %2337 = vmatpush.msra.mxu0 %v2336
        %v2338 = vand.u32 %v1215, 4294901760
        %v2339 = vsub.f32 %v1215, %v2338
        %v2340 = vand.u32 %v2339, 4294901760
        %2341 = vmatpush.msra.mxu0 %v2340
        %v2342 = vand.u32 %v1214, 4294901760
        %v2343 = vsub.f32 %v1214, %v2342
        %v2344 = vand.u32 %v2343, 4294901760
        %2345 = vmatpush.msra.mxu0 %v2344
        %v2346 = vand.u32 %v1213, 4294901760
        %v2347 = vsub.f32 %v1213, %v2346
        %v2348 = vand.u32 %v2347, 4294901760
        %2349 = vmatpush.msra.mxu0 %v2348
        %v2350 = vand.u32 %v1212, 4294901760
        %v2351 = vsub.f32 %v1212, %v2350
        %v2352 = vand.u32 %v2351, 4294901760
        %2353 = vmatpush.msra.mxu0 %v2352
        %v2354 = vand.u32 %v1211, 4294901760
        %v2355 = vsub.f32 %v1211, %v2354
        %v2356 = vand.u32 %v2355, 4294901760
        %2357 = vmatpush.msra.mxu0 %v2356
        %v2358 = vand.u32 %v1210, 4294901760
        %v2359 = vsub.f32 %v1210, %v2358
        %v2360 = vand.u32 %v2359, 4294901760
        %2361 = vmatpush.msra.mxu0 %v2360
        %v2362 = vand.u32 %v1209, 4294901760
        %v2363 = vsub.f32 %v1209, %v2362
        %v2364 = vand.u32 %v2363, 4294901760
        %2365 = vmatpush.msra.mxu0 %v2364
        %v2366 = vand.u32 %v1208, 4294901760
        %v2367 = vsub.f32 %v1208, %v2366
        %v2368 = vand.u32 %v2367, 4294901760
        %2369 = vmatpush.msra.mxu0 %v2368
        %v2370 = vand.u32 %v1200, 4294901760
        %2371 = vmatmul.f32.gmra.mxu0 %v2370
        %v2372 = vpop.f32.mrf.mxu0
        %v2373 = vadd.f32 %v2262, %v2372
        %v2374 = vand.u32 %v1201, 4294901760
        %2375 = vmatmul.f32.gmra.mxu0 %v2374
        %v2376 = vpop.f32.mrf.mxu0
        %v2377 = vadd.f32 %v2268, %v2376
        %v2378 = vand.u32 %v1202, 4294901760
        %2379 = vmatmul.f32.gmra.mxu0 %v2378
        %v2380 = vpop.f32.mrf.mxu0
        %v2381 = vadd.f32 %v2274, %v2380
        %v2382 = vand.u32 %v1203, 4294901760
        %2383 = vmatmul.f32.gmra.mxu0 %v2382
        %v2384 = vpop.f32.mrf.mxu0
        %v2385 = vadd.f32 %v2280, %v2384
        %v2386 = vand.u32 %v1204, 4294901760
        %2387 = vmatmul.f32.gmra.mxu0 %v2386
        %v2388 = vpop.f32.mrf.mxu0
        %v2389 = vadd.f32 %v2286, %v2388
        %v2390 = vand.u32 %v1205, 4294901760
        %2391 = vmatmul.f32.gmra.mxu0 %v2390
        %v2392 = vpop.f32.mrf.mxu0
        %v2393 = vadd.f32 %v2292, %v2392
        %v2394 = vand.u32 %v1206, 4294901760
        %2395 = vmatmul.f32.gmra.mxu0 %v2394
        %v2396 = vpop.f32.mrf.mxu0
        %v2397 = vadd.f32 %v2298, %v2396
        %v2398 = vand.u32 %v1207, 4294901760
        %2399 = vmatmul.f32.gmra.mxu0 %v2398
        %v2400 = vpop.f32.mrf.mxu0
        %v2401 = vadd.f32 %v2304, %v2400
        %2402 = vdwg.mxu0
        %v2403 = vand.u32 %v1223, 4294901760
        %2404 = vmatpush.msra.mxu0 %v2403
        %v2405 = vand.u32 %v1222, 4294901760
        %2406 = vmatpush.msra.mxu0 %v2405
        %v2407 = vand.u32 %v1221, 4294901760
        %2408 = vmatpush.msra.mxu0 %v2407
        %v2409 = vand.u32 %v1220, 4294901760
        %2410 = vmatpush.msra.mxu0 %v2409
        %v2411 = vand.u32 %v1219, 4294901760
        %2412 = vmatpush.msra.mxu0 %v2411
        %v2413 = vand.u32 %v1218, 4294901760
        %2414 = vmatpush.msra.mxu0 %v2413
        %v2415 = vand.u32 %v1217, 4294901760
        %2416 = vmatpush.msra.mxu0 %v2415
        %v2417 = vand.u32 %v1216, 4294901760
        %2418 = vmatpush.msra.mxu0 %v2417
        %v2419 = vand.u32 %v1215, 4294901760
        %2420 = vmatpush.msra.mxu0 %v2419
        %v2421 = vand.u32 %v1214, 4294901760
        %2422 = vmatpush.msra.mxu0 %v2421
        %v2423 = vand.u32 %v1213, 4294901760
        %2424 = vmatpush.msra.mxu0 %v2423
        %v2425 = vand.u32 %v1212, 4294901760
        %2426 = vmatpush.msra.mxu0 %v2425
        %v2427 = vand.u32 %v1211, 4294901760
        %2428 = vmatpush.msra.mxu0 %v2427
        %v2429 = vand.u32 %v1210, 4294901760
        %2430 = vmatpush.msra.mxu0 %v2429
        %v2431 = vand.u32 %v1209, 4294901760
        %2432 = vmatpush.msra.mxu0 %v2431
        %v2433 = vand.u32 %v1208, 4294901760
        %2434 = vmatpush.msra.mxu0 %v2433
        %v2435 = vand.u32 %v1200, 4294901760
        %2436 = vmatmul.f32.gmra.mxu0 %v2435
        %v2437 = vpop.f32.mrf.mxu0
        %v2438 = vadd.f32 %v2373, %v2437
        %v2439 = vand.u32 %v1201, 4294901760
        %2440 = vmatmul.f32.gmra.mxu0 %v2439
        %v2441 = vpop.f32.mrf.mxu0
        %v2442 = vadd.f32 %v2377, %v2441
        %v2443 = vand.u32 %v1202, 4294901760
        %2444 = vmatmul.f32.gmra.mxu0 %v2443
        %v2445 = vpop.f32.mrf.mxu0
        %v2446 = vadd.f32 %v2381, %v2445
        %v2447 = vand.u32 %v1203, 4294901760
        %2448 = vmatmul.f32.gmra.mxu0 %v2447
        %v2449 = vpop.f32.mrf.mxu0
        %v2450 = vadd.f32 %v2385, %v2449
        %v2451 = vand.u32 %v1204, 4294901760
        %2452 = vmatmul.f32.gmra.mxu0 %v2451
        %v2453 = vpop.f32.mrf.mxu0
        %v2454 = vadd.f32 %v2389, %v2453
        %v2455 = vand.u32 %v1205, 4294901760
        %2456 = vmatmul.f32.gmra.mxu0 %v2455
        %v2457 = vpop.f32.mrf.mxu0
        %v2458 = vadd.f32 %v2393, %v2457
        %v2459 = vand.u32 %v1206, 4294901760
        %2460 = vmatmul.f32.gmra.mxu0 %v2459
        %v2461 = vpop.f32.mrf.mxu0
        %v2462 = vadd.f32 %v2397, %v2461
        %v2463 = vand.u32 %v1207, 4294901760
        %2464 = vmatmul.f32.gmra.mxu0 %v2463
        %v2465 = vpop.f32.mrf.mxu0
        %v2466 = vadd.f32 %v2401, %v2465
        %2467 = vdwg.mxu0
        %v2468 = vld [vmem:[%s7 + $0x10] sm:$0xff]
        %v2469 = vld [vmem:[%s7 + $0x28] sm:$0xff]
        %v2470 = vld [vmem:[%s7 + $0x40] sm:$0xff]
        %v2471 = vld [vmem:[%s7 + $0x58] sm:$0xff]
        %v2472 = vld [vmem:[%s7 + $0x70] sm:$0xff]
        %v2473 = vld [vmem:[%s7 + $0x88] sm:$0xff]
        %v2474 = vld [vmem:[%s7 + $0xa0] sm:$0xff]
        %v2475 = vld [vmem:[%s7 + $0xb8] sm:$0xff]
        %v2476 = vmul.f32 %v1067, %v2468
        %v2477 = vmul.f32 %v1066, %v2469
        %v2478 = vmul.f32 %v1065, %v2470
        %v2479 = vmul.f32 %v1064, %v2471
        %v2480 = vmul.f32 %v1063, %v2472
        %v2481 = vmul.f32 %v1062, %v2473
        %v2482 = vmul.f32 %v1069, %v2474
        %v2483 = vmul.f32 %v1068, %v2475
        %v2484 = vld [vmem:[%s2 + $0x100] sm:$0xff]
        %v2485 = vld [vmem:[%s2 + $0x108] sm:$0xff]
        %v2486 = vld [vmem:[%s2 + $0x110] sm:$0xff]
        %v2487 = vld [vmem:[%s2 + $0x118] sm:$0xff]
        %v2489 = vsel %vm741, %v2476, 0
        %v2492 = vsel %vm741, %v2477, 0
        %v2495 = vsel %vm741, %v2478, 0
        %v2498 = vsel %vm741, %v2479, 0
        %v2501 = vsel %vm741, %v2480, 0
        %v2504 = vsel %vm741, %v2481, 0
        %v2507 = vsel %vm741, %v2482, 0
        %v2510 = vsel %vm741, %v2483, 0
        %2512 = vmatpush.msra.mxu0 0.0
        %2513 = vmatpush.msra.mxu0 0.0
        %2514 = vmatpush.msra.mxu0 0.0
        %2515 = vmatpush.msra.mxu0 0.0
        %2516 = vmatpush.msra.mxu0 0.0
        %2517 = vmatpush.msra.mxu0 0.0
        %2518 = vmatpush.msra.mxu0 0.0
        %2519 = vmatpush.msra.mxu0 0.0
        %2520 = vmatpush.msra.mxu0 0.0
        %2521 = vmatpush.msra.mxu0 0.0
        %2522 = vmatpush.msra.mxu0 0.0
        %2523 = vmatpush.msra.mxu0 0.0
        %v2524 = vand.u32 %v2487, 4294901760
        %2525 = vmatpush.msra.mxu0 %v2524
        %v2526 = vand.u32 %v2486, 4294901760
        %2527 = vmatpush.msra.mxu0 %v2526
        %v2528 = vand.u32 %v2485, 4294901760
        %2529 = vmatpush.msra.mxu0 %v2528
        %v2530 = vand.u32 %v2484, 4294901760
        %2531 = vmatpush.msra.mxu0 %v2530
        %v2532 = vand.u32 %v2489, 4294901760
        %v2533 = vsub.f32 %v2489, %v2532
        %v2534 = vand.u32 %v2533, 4294901760
        %v2535 = vsub.f32 %v2533, %v2534
        %v2536 = vand.u32 %v2535, 4294901760
        %2537 = vmatmul.f32.gmra.mxu0 %v2536
        %v2538 = vpop.f32.mrf.mxu0
        %v2539 = vadd.f32 0.0, %v2538
        %v2540 = vand.u32 %v2492, 4294901760
        %v2541 = vsub.f32 %v2492, %v2540
        %v2542 = vand.u32 %v2541, 4294901760
        %v2543 = vsub.f32 %v2541, %v2542
        %v2544 = vand.u32 %v2543, 4294901760
        %2545 = vmatmul.f32.gmra.mxu0 %v2544
        %v2546 = vpop.f32.mrf.mxu0
        %v2547 = vadd.f32 0.0, %v2546
        %v2548 = vand.u32 %v2495, 4294901760
        %v2549 = vsub.f32 %v2495, %v2548
        %v2550 = vand.u32 %v2549, 4294901760
        %v2551 = vsub.f32 %v2549, %v2550
        %v2552 = vand.u32 %v2551, 4294901760
        %2553 = vmatmul.f32.gmra.mxu0 %v2552
        %v2554 = vpop.f32.mrf.mxu0
        %v2555 = vadd.f32 0.0, %v2554
        %v2556 = vand.u32 %v2498, 4294901760
        %v2557 = vsub.f32 %v2498, %v2556
        %v2558 = vand.u32 %v2557, 4294901760
        %v2559 = vsub.f32 %v2557, %v2558
        %v2560 = vand.u32 %v2559, 4294901760
        %2561 = vmatmul.f32.gmra.mxu0 %v2560
        %v2562 = vpop.f32.mrf.mxu0
        %v2563 = vadd.f32 0.0, %v2562
        %v2564 = vand.u32 %v2501, 4294901760
        %v2565 = vsub.f32 %v2501, %v2564
        %v2566 = vand.u32 %v2565, 4294901760
        %v2567 = vsub.f32 %v2565, %v2566
        %v2568 = vand.u32 %v2567, 4294901760
        %2569 = vmatmul.f32.gmra.mxu0 %v2568
        %v2570 = vpop.f32.mrf.mxu0
        %v2571 = vadd.f32 0.0, %v2570
        %v2572 = vand.u32 %v2504, 4294901760
        %v2573 = vsub.f32 %v2504, %v2572
        %v2574 = vand.u32 %v2573, 4294901760
        %v2575 = vsub.f32 %v2573, %v2574
        %v2576 = vand.u32 %v2575, 4294901760
        %2577 = vmatmul.f32.gmra.mxu0 %v2576
        %v2578 = vpop.f32.mrf.mxu0
        %v2579 = vadd.f32 0.0, %v2578
        %v2580 = vand.u32 %v2507, 4294901760
        %v2581 = vsub.f32 %v2507, %v2580
        %v2582 = vand.u32 %v2581, 4294901760
        %v2583 = vsub.f32 %v2581, %v2582
        %v2584 = vand.u32 %v2583, 4294901760
        %2585 = vmatmul.f32.gmra.mxu0 %v2584
        %v2586 = vpop.f32.mrf.mxu0
        %v2587 = vadd.f32 0.0, %v2586
        %v2588 = vand.u32 %v2510, 4294901760
        %v2589 = vsub.f32 %v2510, %v2588
        %v2590 = vand.u32 %v2589, 4294901760
        %v2591 = vsub.f32 %v2589, %v2590
        %v2592 = vand.u32 %v2591, 4294901760
        %2593 = vmatmul.f32.gmra.mxu0 %v2592
        %v2594 = vpop.f32.mrf.mxu0
        %v2595 = vadd.f32 0.0, %v2594
        %2596 = vdwg.mxu0
        %2597 = vmatpush.msra.mxu0 0.0
        %2598 = vmatpush.msra.mxu0 0.0
        %2599 = vmatpush.msra.mxu0 0.0
        %2600 = vmatpush.msra.mxu0 0.0
        %2601 = vmatpush.msra.mxu0 0.0
        %2602 = vmatpush.msra.mxu0 0.0
        %2603 = vmatpush.msra.mxu0 0.0
        %2604 = vmatpush.msra.mxu0 0.0
        %2605 = vmatpush.msra.mxu0 0.0
        %2606 = vmatpush.msra.mxu0 0.0
        %2607 = vmatpush.msra.mxu0 0.0
        %2608 = vmatpush.msra.mxu0 0.0
        %v2609 = vand.u32 %v2487, 4294901760
        %v2610 = vsub.f32 %v2487, %v2609
        %v2611 = vand.u32 %v2610, 4294901760
        %v2612 = vsub.f32 %v2610, %v2611
        %v2613 = vand.u32 %v2612, 4294901760
        %2614 = vmatpush.msra.mxu0 %v2613
        %v2615 = vand.u32 %v2486, 4294901760
        %v2616 = vsub.f32 %v2486, %v2615
        %v2617 = vand.u32 %v2616, 4294901760
        %v2618 = vsub.f32 %v2616, %v2617
        %v2619 = vand.u32 %v2618, 4294901760
        %2620 = vmatpush.msra.mxu0 %v2619
        %v2621 = vand.u32 %v2485, 4294901760
        %v2622 = vsub.f32 %v2485, %v2621
        %v2623 = vand.u32 %v2622, 4294901760
        %v2624 = vsub.f32 %v2622, %v2623
        %v2625 = vand.u32 %v2624, 4294901760
        %2626 = vmatpush.msra.mxu0 %v2625
        %v2627 = vand.u32 %v2484, 4294901760
        %v2628 = vsub.f32 %v2484, %v2627
        %v2629 = vand.u32 %v2628, 4294901760
        %v2630 = vsub.f32 %v2628, %v2629
        %v2631 = vand.u32 %v2630, 4294901760
        %2632 = vmatpush.msra.mxu0 %v2631
        %v2633 = vand.u32 %v2489, 4294901760
        %2634 = vmatmul.f32.gmra.mxu0 %v2633
        %v2635 = vpop.f32.mrf.mxu0
        %v2636 = vadd.f32 %v2539, %v2635
        %v2637 = vand.u32 %v2492, 4294901760
        %2638 = vmatmul.f32.gmra.mxu0 %v2637
        %v2639 = vpop.f32.mrf.mxu0
        %v2640 = vadd.f32 %v2547, %v2639
        %v2641 = vand.u32 %v2495, 4294901760
        %2642 = vmatmul.f32.gmra.mxu0 %v2641
        %v2643 = vpop.f32.mrf.mxu0
        %v2644 = vadd.f32 %v2555, %v2643
        %v2645 = vand.u32 %v2498, 4294901760
        %2646 = vmatmul.f32.gmra.mxu0 %v2645
        %v2647 = vpop.f32.mrf.mxu0
        %v2648 = vadd.f32 %v2563, %v2647
        %v2649 = vand.u32 %v2501, 4294901760
        %2650 = vmatmul.f32.gmra.mxu0 %v2649
        %v2651 = vpop.f32.mrf.mxu0
        %v2652 = vadd.f32 %v2571, %v2651
        %v2653 = vand.u32 %v2504, 4294901760
        %2654 = vmatmul.f32.gmra.mxu0 %v2653
        %v2655 = vpop.f32.mrf.mxu0
        %v2656 = vadd.f32 %v2579, %v2655
        %v2657 = vand.u32 %v2507, 4294901760
        %2658 = vmatmul.f32.gmra.mxu0 %v2657
        %v2659 = vpop.f32.mrf.mxu0
        %v2660 = vadd.f32 %v2587, %v2659
        %v2661 = vand.u32 %v2510, 4294901760
        %2662 = vmatmul.f32.gmra.mxu0 %v2661
        %v2663 = vpop.f32.mrf.mxu0
        %v2664 = vadd.f32 %v2595, %v2663
        %2665 = vdwg.mxu0
        %2666 = vmatpush.msra.mxu0 0.0
        %2667 = vmatpush.msra.mxu0 0.0
        %2668 = vmatpush.msra.mxu0 0.0
        %2669 = vmatpush.msra.mxu0 0.0
        %2670 = vmatpush.msra.mxu0 0.0
        %2671 = vmatpush.msra.mxu0 0.0
        %2672 = vmatpush.msra.mxu0 0.0
        %2673 = vmatpush.msra.mxu0 0.0
        %2674 = vmatpush.msra.mxu0 0.0
        %2675 = vmatpush.msra.mxu0 0.0
        %2676 = vmatpush.msra.mxu0 0.0
        %2677 = vmatpush.msra.mxu0 0.0
        %v2678 = vand.u32 %v2487, 4294901760
        %v2679 = vsub.f32 %v2487, %v2678
        %2680 = vmatpush.msra.mxu0 %v2679
        %v2681 = vand.u32 %v2486, 4294901760
        %v2682 = vsub.f32 %v2486, %v2681
        %2683 = vmatpush.msra.mxu0 %v2682
        %v2684 = vand.u32 %v2485, 4294901760
        %v2685 = vsub.f32 %v2485, %v2684
        %2686 = vmatpush.msra.mxu0 %v2685
        %v2687 = vand.u32 %v2484, 4294901760
        %v2688 = vsub.f32 %v2484, %v2687
        %2689 = vmatpush.msra.mxu0 %v2688
        %v2690 = vand.u32 %v2489, 4294901760
        %v2691 = vsub.f32 %v2489, %v2690
        %2692 = vmatmul.f32.gmra.mxu0 %v2691
        %v2693 = vpop.f32.mrf.mxu0
        %v2694 = vadd.f32 %v2636, %v2693
        %v2695 = vand.u32 %v2492, 4294901760
        %v2696 = vsub.f32 %v2492, %v2695
        %2697 = vmatmul.f32.gmra.mxu0 %v2696
        %v2698 = vpop.f32.mrf.mxu0
        %v2699 = vadd.f32 %v2640, %v2698
        %v2700 = vand.u32 %v2495, 4294901760
        %v2701 = vsub.f32 %v2495, %v2700
        %2702 = vmatmul.f32.gmra.mxu0 %v2701
        %v2703 = vpop.f32.mrf.mxu0
        %v2704 = vadd.f32 %v2644, %v2703
        %v2705 = vand.u32 %v2498, 4294901760
        %v2706 = vsub.f32 %v2498, %v2705
        %2707 = vmatmul.f32.gmra.mxu0 %v2706
        %v2708 = vpop.f32.mrf.mxu0
        %v2709 = vadd.f32 %v2648, %v2708
        %v2710 = vand.u32 %v2501, 4294901760
        %v2711 = vsub.f32 %v2501, %v2710
        %2712 = vmatmul.f32.gmra.mxu0 %v2711
        %v2713 = vpop.f32.mrf.mxu0
        %v2714 = vadd.f32 %v2652, %v2713
        %v2715 = vand.u32 %v2504, 4294901760
        %v2716 = vsub.f32 %v2504, %v2715
        %2717 = vmatmul.f32.gmra.mxu0 %v2716
        %v2718 = vpop.f32.mrf.mxu0
        %v2719 = vadd.f32 %v2656, %v2718
        %v2720 = vand.u32 %v2507, 4294901760
        %v2721 = vsub.f32 %v2507, %v2720
        %2722 = vmatmul.f32.gmra.mxu0 %v2721
        %v2723 = vpop.f32.mrf.mxu0
        %v2724 = vadd.f32 %v2660, %v2723
        %v2725 = vand.u32 %v2510, 4294901760
        %v2726 = vsub.f32 %v2510, %v2725
        %2727 = vmatmul.f32.gmra.mxu0 %v2726
        %v2728 = vpop.f32.mrf.mxu0
        %v2729 = vadd.f32 %v2664, %v2728
        %2730 = vdwg.mxu0
        %2731 = vmatpush.msra.mxu0 0.0
        %2732 = vmatpush.msra.mxu0 0.0
        %2733 = vmatpush.msra.mxu0 0.0
        %2734 = vmatpush.msra.mxu0 0.0
        %2735 = vmatpush.msra.mxu0 0.0
        %2736 = vmatpush.msra.mxu0 0.0
        %2737 = vmatpush.msra.mxu0 0.0
        %2738 = vmatpush.msra.mxu0 0.0
        %2739 = vmatpush.msra.mxu0 0.0
        %2740 = vmatpush.msra.mxu0 0.0
        %2741 = vmatpush.msra.mxu0 0.0
        %2742 = vmatpush.msra.mxu0 0.0
        %v2743 = vand.u32 %v2487, 4294901760
        %2744 = vmatpush.msra.mxu0 %v2743
        %v2745 = vand.u32 %v2486, 4294901760
        %2746 = vmatpush.msra.mxu0 %v2745
        %v2747 = vand.u32 %v2485, 4294901760
        %2748 = vmatpush.msra.mxu0 %v2747
        %v2749 = vand.u32 %v2484, 4294901760
        %2750 = vmatpush.msra.mxu0 %v2749
        %v2751 = vand.u32 %v2489, 4294901760
        %v2752 = vsub.f32 %v2489, %v2751
        %v2753 = vand.u32 %v2752, 4294901760
        %2754 = vmatmul.f32.gmra.mxu0 %v2753
        %v2755 = vpop.f32.mrf.mxu0
        %v2756 = vadd.f32 %v2694, %v2755
        %v2757 = vand.u32 %v2492, 4294901760
        %v2758 = vsub.f32 %v2492, %v2757
        %v2759 = vand.u32 %v2758, 4294901760
        %2760 = vmatmul.f32.gmra.mxu0 %v2759
        %v2761 = vpop.f32.mrf.mxu0
        %v2762 = vadd.f32 %v2699, %v2761
        %v2763 = vand.u32 %v2495, 4294901760
        %v2764 = vsub.f32 %v2495, %v2763
        %v2765 = vand.u32 %v2764, 4294901760
        %2766 = vmatmul.f32.gmra.mxu0 %v2765
        %v2767 = vpop.f32.mrf.mxu0
        %v2768 = vadd.f32 %v2704, %v2767
        %v2769 = vand.u32 %v2498, 4294901760
        %v2770 = vsub.f32 %v2498, %v2769
        %v2771 = vand.u32 %v2770, 4294901760
        %2772 = vmatmul.f32.gmra.mxu0 %v2771
        %v2773 = vpop.f32.mrf.mxu0
        %v2774 = vadd.f32 %v2709, %v2773
        %v2775 = vand.u32 %v2501, 4294901760
        %v2776 = vsub.f32 %v2501, %v2775
        %v2777 = vand.u32 %v2776, 4294901760
        %2778 = vmatmul.f32.gmra.mxu0 %v2777
        %v2779 = vpop.f32.mrf.mxu0
        %v2780 = vadd.f32 %v2714, %v2779
        %v2781 = vand.u32 %v2504, 4294901760
        %v2782 = vsub.f32 %v2504, %v2781
        %v2783 = vand.u32 %v2782, 4294901760
        %2784 = vmatmul.f32.gmra.mxu0 %v2783
        %v2785 = vpop.f32.mrf.mxu0
        %v2786 = vadd.f32 %v2719, %v2785
        %v2787 = vand.u32 %v2507, 4294901760
        %v2788 = vsub.f32 %v2507, %v2787
        %v2789 = vand.u32 %v2788, 4294901760
        %2790 = vmatmul.f32.gmra.mxu0 %v2789
        %v2791 = vpop.f32.mrf.mxu0
        %v2792 = vadd.f32 %v2724, %v2791
        %v2793 = vand.u32 %v2510, 4294901760
        %v2794 = vsub.f32 %v2510, %v2793
        %v2795 = vand.u32 %v2794, 4294901760
        %2796 = vmatmul.f32.gmra.mxu0 %v2795
        %v2797 = vpop.f32.mrf.mxu0
        %v2798 = vadd.f32 %v2729, %v2797
        %2799 = vdwg.mxu0
        %2800 = vmatpush.msra.mxu0 0.0
        %2801 = vmatpush.msra.mxu0 0.0
        %2802 = vmatpush.msra.mxu0 0.0
        %2803 = vmatpush.msra.mxu0 0.0
        %2804 = vmatpush.msra.mxu0 0.0
        %2805 = vmatpush.msra.mxu0 0.0
        %2806 = vmatpush.msra.mxu0 0.0
        %2807 = vmatpush.msra.mxu0 0.0
        %2808 = vmatpush.msra.mxu0 0.0
        %2809 = vmatpush.msra.mxu0 0.0
        %2810 = vmatpush.msra.mxu0 0.0
        %2811 = vmatpush.msra.mxu0 0.0
        %v2812 = vand.u32 %v2487, 4294901760
        %v2813 = vsub.f32 %v2487, %v2812
        %v2814 = vand.u32 %v2813, 4294901760
        %2815 = vmatpush.msra.mxu0 %v2814
        %v2816 = vand.u32 %v2486, 4294901760
        %v2817 = vsub.f32 %v2486, %v2816
        %v2818 = vand.u32 %v2817, 4294901760
        %2819 = vmatpush.msra.mxu0 %v2818
        %v2820 = vand.u32 %v2485, 4294901760
        %v2821 = vsub.f32 %v2485, %v2820
        %v2822 = vand.u32 %v2821, 4294901760
        %2823 = vmatpush.msra.mxu0 %v2822
        %v2824 = vand.u32 %v2484, 4294901760
        %v2825 = vsub.f32 %v2484, %v2824
        %v2826 = vand.u32 %v2825, 4294901760
        %2827 = vmatpush.msra.mxu0 %v2826
        %v2828 = vand.u32 %v2489, 4294901760
        %2829 = vmatmul.f32.gmra.mxu0 %v2828
        %v2830 = vpop.f32.mrf.mxu0
        %v2831 = vadd.f32 %v2756, %v2830
        %v2832 = vand.u32 %v2492, 4294901760
        %2833 = vmatmul.f32.gmra.mxu0 %v2832
        %v2834 = vpop.f32.mrf.mxu0
        %v2835 = vadd.f32 %v2762, %v2834
        %v2836 = vand.u32 %v2495, 4294901760
        %2837 = vmatmul.f32.gmra.mxu0 %v2836
        %v2838 = vpop.f32.mrf.mxu0
        %v2839 = vadd.f32 %v2768, %v2838
        %v2840 = vand.u32 %v2498, 4294901760
        %2841 = vmatmul.f32.gmra.mxu0 %v2840
        %v2842 = vpop.f32.mrf.mxu0
        %v2843 = vadd.f32 %v2774, %v2842
        %v2844 = vand.u32 %v2501, 4294901760
        %2845 = vmatmul.f32.gmra.mxu0 %v2844
        %v2846 = vpop.f32.mrf.mxu0
        %v2847 = vadd.f32 %v2780, %v2846
        %v2848 = vand.u32 %v2504, 4294901760
        %2849 = vmatmul.f32.gmra.mxu0 %v2848
        %v2850 = vpop.f32.mrf.mxu0
        %v2851 = vadd.f32 %v2786, %v2850
        %v2852 = vand.u32 %v2507, 4294901760
        %2853 = vmatmul.f32.gmra.mxu0 %v2852
        %v2854 = vpop.f32.mrf.mxu0
        %v2855 = vadd.f32 %v2792, %v2854
        %v2856 = vand.u32 %v2510, 4294901760
        %2857 = vmatmul.f32.gmra.mxu0 %v2856
        %v2858 = vpop.f32.mrf.mxu0
        %v2859 = vadd.f32 %v2798, %v2858
        %2860 = vdwg.mxu0
        %2861 = vmatpush.msra.mxu0 0.0
        %2862 = vmatpush.msra.mxu0 0.0
        %2863 = vmatpush.msra.mxu0 0.0
        %2864 = vmatpush.msra.mxu0 0.0
        %2865 = vmatpush.msra.mxu0 0.0
        %2866 = vmatpush.msra.mxu0 0.0
        %2867 = vmatpush.msra.mxu0 0.0
        %2868 = vmatpush.msra.mxu0 0.0
        %2869 = vmatpush.msra.mxu0 0.0
        %2870 = vmatpush.msra.mxu0 0.0
        %2871 = vmatpush.msra.mxu0 0.0
        %2872 = vmatpush.msra.mxu0 0.0
        %v2873 = vand.u32 %v2487, 4294901760
        %2874 = vmatpush.msra.mxu0 %v2873
        %v2875 = vand.u32 %v2486, 4294901760
        %2876 = vmatpush.msra.mxu0 %v2875
        %v2877 = vand.u32 %v2485, 4294901760
        %2878 = vmatpush.msra.mxu0 %v2877
        %v2879 = vand.u32 %v2484, 4294901760
        %2880 = vmatpush.msra.mxu0 %v2879
        %v2881 = vand.u32 %v2489, 4294901760
        %2882 = vmatmul.f32.gmra.mxu0 %v2881
        %v2883 = vpop.f32.mrf.mxu0
        %v2884 = vadd.f32 %v2831, %v2883
        %v2885 = vand.u32 %v2492, 4294901760
        %2886 = vmatmul.f32.gmra.mxu0 %v2885
        %v2887 = vpop.f32.mrf.mxu0
        %v2888 = vadd.f32 %v2835, %v2887
        %v2889 = vand.u32 %v2495, 4294901760
        %2890 = vmatmul.f32.gmra.mxu0 %v2889
        %v2891 = vpop.f32.mrf.mxu0
        %v2892 = vadd.f32 %v2839, %v2891
        %v2893 = vand.u32 %v2498, 4294901760
        %2894 = vmatmul.f32.gmra.mxu0 %v2893
        %v2895 = vpop.f32.mrf.mxu0
        %v2896 = vadd.f32 %v2843, %v2895
        %v2897 = vand.u32 %v2501, 4294901760
        %2898 = vmatmul.f32.gmra.mxu0 %v2897
        %v2899 = vpop.f32.mrf.mxu0
        %v2900 = vadd.f32 %v2847, %v2899
        %v2901 = vand.u32 %v2504, 4294901760
        %2902 = vmatmul.f32.gmra.mxu0 %v2901
        %v2903 = vpop.f32.mrf.mxu0
        %v2904 = vadd.f32 %v2851, %v2903
        %v2905 = vand.u32 %v2507, 4294901760
        %2906 = vmatmul.f32.gmra.mxu0 %v2905
        %v2907 = vpop.f32.mrf.mxu0
        %v2908 = vadd.f32 %v2855, %v2907
        %v2909 = vand.u32 %v2510, 4294901760
        %2910 = vmatmul.f32.gmra.mxu0 %v2909
        %v2911 = vpop.f32.mrf.mxu0
        %v2912 = vadd.f32 %v2859, %v2911
        %2913 = vdwg.mxu0
        %v2914 = vadd.f32 %v2438, %v2884
        %v2915 = vadd.f32 %v2442, %v2888
        %v2916 = vadd.f32 %v2446, %v2892
        %v2917 = vadd.f32 %v2450, %v2896
        %v2918 = vadd.f32 %v2454, %v2900
        %v2919 = vadd.f32 %v2458, %v2904
        %v2920 = vadd.f32 %v2462, %v2908
        %v2921 = vadd.f32 %v2466, %v2912
        %v2922 = vperm.slane %v315, 3
        %v2923 = vadd.f32 %v2914, %v2922
        %v2924 = vadd.f32 %v2915, %v2922
        %v2925 = vadd.f32 %v2916, %v2922
        %v2926 = vadd.f32 %v2917, %v2922
        %v2927 = vadd.f32 %v2918, %v2922
        %v2928 = vadd.f32 %v2919, %v2922
        %v2929 = vadd.f32 %v2920, %v2922
        %v2930 = vadd.f32 %v2921, %v2922
        %v2931 = vsel %vm741, %v2923, 0.0
        %v2932 = vsel %vm741, %v2924, 0.0
        %v2933 = vadd.f32 %v2931, %v2932
        %v2934 = vsel %vm741, %v2925, 0.0
        %v2935 = vadd.f32 %v2933, %v2934
        %v2936 = vsel %vm741, %v2926, 0.0
        %v2937 = vadd.f32 %v2935, %v2936
        %v2938 = vsel %vm741, %v2927, 0.0
        %v2939 = vadd.f32 %v2937, %v2938
        %v2940 = vsel %vm741, %v2928, 0.0
        %v2941 = vadd.f32 %v2939, %v2940
        %v2942 = vsel %vm741, %v2929, 0.0
        %v2943 = vadd.f32 %v2941, %v2942
        %v2944 = vsel %vm741, %v2930, 0.0
        %v2945 = vadd.f32 %v2943, %v2944
        %v2946 = vrot.slane %v2945, 4
        %v2947 = vadd.f32 %v2945, %v2946
        %v2948 = vrot.slane %v2947, 2
        %v2949 = vadd.f32 %v2947, %v2948
        %v2950 = vrot.slane %v2949, 1
        %v2951 = vadd.f32 %v2949, %v2950
        %v2952 = vmul.f32 %v2923, %v2923
        %v2953 = vmul.f32 %v2924, %v2924
        %v2954 = vmul.f32 %v2925, %v2925
        %v2955 = vmul.f32 %v2926, %v2926
        %v2956 = vmul.f32 %v2927, %v2927
        %v2957 = vmul.f32 %v2928, %v2928
        %v2958 = vmul.f32 %v2929, %v2929
        %v2959 = vmul.f32 %v2930, %v2930
        %v2960 = vsel %vm741, %v2952, 0.0
        %v2961 = vsel %vm741, %v2953, 0.0
        %v2962 = vadd.f32 %v2960, %v2961
        %v2963 = vsel %vm741, %v2954, 0.0
        %v2964 = vadd.f32 %v2962, %v2963
        %v2965 = vsel %vm741, %v2955, 0.0
        %v2966 = vadd.f32 %v2964, %v2965
        %v2967 = vsel %vm741, %v2956, 0.0
        %v2968 = vadd.f32 %v2966, %v2967
        %v2969 = vsel %vm741, %v2957, 0.0
        %v2970 = vadd.f32 %v2968, %v2969
        %v2971 = vsel %vm741, %v2958, 0.0
        %v2972 = vadd.f32 %v2970, %v2971
        %v2973 = vsel %vm741, %v2959, 0.0
        %v2974 = vadd.f32 %v2972, %v2973
        %v2975 = vrot.slane %v2974, 4
        %v2976 = vadd.f32 %v2974, %v2975
        %v2977 = vrot.slane %v2976, 2
        %v2978 = vadd.f32 %v2976, %v2977
        %v2979 = vrot.slane %v2978, 1
        %v2980 = vadd.f32 %v2978, %v2979
        %v2981 = vsel %vm792, %v2951, %v2980
        %v2983 = vsel %vm741, %v2981, 0
        %2985 = vmatpush.msra.mxu0 0.0
        %2986 = vmatpush.msra.mxu0 0.0
        %2987 = vmatpush.msra.mxu0 0.0
        %2988 = vmatpush.msra.mxu0 0.0
        %2989 = vmatpush.msra.mxu0 0.0
        %2990 = vmatpush.msra.mxu0 0.0
        %2991 = vmatpush.msra.mxu0 0.0
        %2992 = vmatpush.msra.mxu0 0.0
        %2993 = vmatpush.msra.mxu0 0.0
        %2994 = vmatpush.msra.mxu0 0.0
        %2995 = vmatpush.msra.mxu0 0.0
        %2996 = vmatpush.msra.mxu0 0.0
        %v2997 = vand.u32 %v320, 4294901760
        %2998 = vmatpush.msra.mxu0 %v2997
        %v2999 = vand.u32 %v319, 4294901760
        %3000 = vmatpush.msra.mxu0 %v2999
        %v3001 = vand.u32 %v318, 4294901760
        %3002 = vmatpush.msra.mxu0 %v3001
        %v3003 = vand.u32 %v317, 4294901760
        %3004 = vmatpush.msra.mxu0 %v3003
        %v3005 = vand.u32 %v2983, 4294901760
        %v3006 = vsub.f32 %v2983, %v3005
        %v3007 = vand.u32 %v3006, 4294901760
        %v3008 = vsub.f32 %v3006, %v3007
        %v3009 = vand.u32 %v3008, 4294901760
        %3010 = vmatmul.f32.gmra.mxu0 %v3009
        %v3011 = vpop.f32.mrf.mxu0
        %v3012 = vadd.f32 0.0, %v3011
        %3013 = vdwg.mxu0
        %3014 = vmatpush.msra.mxu0 0.0
        %3015 = vmatpush.msra.mxu0 0.0
        %3016 = vmatpush.msra.mxu0 0.0
        %3017 = vmatpush.msra.mxu0 0.0
        %3018 = vmatpush.msra.mxu0 0.0
        %3019 = vmatpush.msra.mxu0 0.0
        %3020 = vmatpush.msra.mxu0 0.0
        %3021 = vmatpush.msra.mxu0 0.0
        %3022 = vmatpush.msra.mxu0 0.0
        %3023 = vmatpush.msra.mxu0 0.0
        %3024 = vmatpush.msra.mxu0 0.0
        %3025 = vmatpush.msra.mxu0 0.0
        %v3026 = vand.u32 %v320, 4294901760
        %v3027 = vsub.f32 %v320, %v3026
        %v3028 = vand.u32 %v3027, 4294901760
        %v3029 = vsub.f32 %v3027, %v3028
        %v3030 = vand.u32 %v3029, 4294901760
        %3031 = vmatpush.msra.mxu0 %v3030
        %v3032 = vand.u32 %v319, 4294901760
        %v3033 = vsub.f32 %v319, %v3032
        %v3034 = vand.u32 %v3033, 4294901760
        %v3035 = vsub.f32 %v3033, %v3034
        %v3036 = vand.u32 %v3035, 4294901760
        %3037 = vmatpush.msra.mxu0 %v3036
        %v3038 = vand.u32 %v318, 4294901760
        %v3039 = vsub.f32 %v318, %v3038
        %v3040 = vand.u32 %v3039, 4294901760
        %v3041 = vsub.f32 %v3039, %v3040
        %v3042 = vand.u32 %v3041, 4294901760
        %3043 = vmatpush.msra.mxu0 %v3042
        %v3044 = vand.u32 %v317, 4294901760
        %v3045 = vsub.f32 %v317, %v3044
        %v3046 = vand.u32 %v3045, 4294901760
        %v3047 = vsub.f32 %v3045, %v3046
        %v3048 = vand.u32 %v3047, 4294901760
        %3049 = vmatpush.msra.mxu0 %v3048
        %v3050 = vand.u32 %v2983, 4294901760
        %3051 = vmatmul.f32.gmra.mxu0 %v3050
        %v3052 = vpop.f32.mrf.mxu0
        %v3053 = vadd.f32 %v3012, %v3052
        %3054 = vdwg.mxu0
        %3055 = vmatpush.msra.mxu0 0.0
        %3056 = vmatpush.msra.mxu0 0.0
        %3057 = vmatpush.msra.mxu0 0.0
        %3058 = vmatpush.msra.mxu0 0.0
        %3059 = vmatpush.msra.mxu0 0.0
        %3060 = vmatpush.msra.mxu0 0.0
        %3061 = vmatpush.msra.mxu0 0.0
        %3062 = vmatpush.msra.mxu0 0.0
        %3063 = vmatpush.msra.mxu0 0.0
        %3064 = vmatpush.msra.mxu0 0.0
        %3065 = vmatpush.msra.mxu0 0.0
        %3066 = vmatpush.msra.mxu0 0.0
        %v3067 = vand.u32 %v320, 4294901760
        %v3068 = vsub.f32 %v320, %v3067
        %3069 = vmatpush.msra.mxu0 %v3068
        %v3070 = vand.u32 %v319, 4294901760
        %v3071 = vsub.f32 %v319, %v3070
        %3072 = vmatpush.msra.mxu0 %v3071
        %v3073 = vand.u32 %v318, 4294901760
        %v3074 = vsub.f32 %v318, %v3073
        %3075 = vmatpush.msra.mxu0 %v3074
        %v3076 = vand.u32 %v317, 4294901760
        %v3077 = vsub.f32 %v317, %v3076
        %3078 = vmatpush.msra.mxu0 %v3077
        %v3079 = vand.u32 %v2983, 4294901760
        %v3080 = vsub.f32 %v2983, %v3079
        %3081 = vmatmul.f32.gmra.mxu0 %v3080
        %v3082 = vpop.f32.mrf.mxu0
        %v3083 = vadd.f32 %v3053, %v3082
        %3084 = vdwg.mxu0
        %3085 = vmatpush.msra.mxu0 0.0
        %3086 = vmatpush.msra.mxu0 0.0
        %3087 = vmatpush.msra.mxu0 0.0
        %3088 = vmatpush.msra.mxu0 0.0
        %3089 = vmatpush.msra.mxu0 0.0
        %3090 = vmatpush.msra.mxu0 0.0
        %3091 = vmatpush.msra.mxu0 0.0
        %3092 = vmatpush.msra.mxu0 0.0
        %3093 = vmatpush.msra.mxu0 0.0
        %3094 = vmatpush.msra.mxu0 0.0
        %3095 = vmatpush.msra.mxu0 0.0
        %3096 = vmatpush.msra.mxu0 0.0
        %v3097 = vand.u32 %v320, 4294901760
        %3098 = vmatpush.msra.mxu0 %v3097
        %v3099 = vand.u32 %v319, 4294901760
        %3100 = vmatpush.msra.mxu0 %v3099
        %v3101 = vand.u32 %v318, 4294901760
        %3102 = vmatpush.msra.mxu0 %v3101
        %v3103 = vand.u32 %v317, 4294901760
        %3104 = vmatpush.msra.mxu0 %v3103
        %v3105 = vand.u32 %v2983, 4294901760
        %v3106 = vsub.f32 %v2983, %v3105
        %v3107 = vand.u32 %v3106, 4294901760
        %3108 = vmatmul.f32.gmra.mxu0 %v3107
        %v3109 = vpop.f32.mrf.mxu0
        %v3110 = vadd.f32 %v3083, %v3109
        %3111 = vdwg.mxu0
        %3112 = vmatpush.msra.mxu0 0.0
        %3113 = vmatpush.msra.mxu0 0.0
        %3114 = vmatpush.msra.mxu0 0.0
        %3115 = vmatpush.msra.mxu0 0.0
        %3116 = vmatpush.msra.mxu0 0.0
        %3117 = vmatpush.msra.mxu0 0.0
        %3118 = vmatpush.msra.mxu0 0.0
        %3119 = vmatpush.msra.mxu0 0.0
        %3120 = vmatpush.msra.mxu0 0.0
        %3121 = vmatpush.msra.mxu0 0.0
        %3122 = vmatpush.msra.mxu0 0.0
        %3123 = vmatpush.msra.mxu0 0.0
        %v3124 = vand.u32 %v320, 4294901760
        %v3125 = vsub.f32 %v320, %v3124
        %v3126 = vand.u32 %v3125, 4294901760
        %3127 = vmatpush.msra.mxu0 %v3126
        %v3128 = vand.u32 %v319, 4294901760
        %v3129 = vsub.f32 %v319, %v3128
        %v3130 = vand.u32 %v3129, 4294901760
        %3131 = vmatpush.msra.mxu0 %v3130
        %v3132 = vand.u32 %v318, 4294901760
        %v3133 = vsub.f32 %v318, %v3132
        %v3134 = vand.u32 %v3133, 4294901760
        %3135 = vmatpush.msra.mxu0 %v3134
        %v3136 = vand.u32 %v317, 4294901760
        %v3137 = vsub.f32 %v317, %v3136
        %v3138 = vand.u32 %v3137, 4294901760
        %3139 = vmatpush.msra.mxu0 %v3138
        %v3140 = vand.u32 %v2983, 4294901760
        %3141 = vmatmul.f32.gmra.mxu0 %v3140
        %v3142 = vpop.f32.mrf.mxu0
        %v3143 = vadd.f32 %v3110, %v3142
        %3144 = vdwg.mxu0
        %3145 = vmatpush.msra.mxu0 0.0
        %3146 = vmatpush.msra.mxu0 0.0
        %3147 = vmatpush.msra.mxu0 0.0
        %3148 = vmatpush.msra.mxu0 0.0
        %3149 = vmatpush.msra.mxu0 0.0
        %3150 = vmatpush.msra.mxu0 0.0
        %3151 = vmatpush.msra.mxu0 0.0
        %3152 = vmatpush.msra.mxu0 0.0
        %3153 = vmatpush.msra.mxu0 0.0
        %3154 = vmatpush.msra.mxu0 0.0
        %3155 = vmatpush.msra.mxu0 0.0
        %3156 = vmatpush.msra.mxu0 0.0
        %v3157 = vand.u32 %v320, 4294901760
        %3158 = vmatpush.msra.mxu0 %v3157
        %v3159 = vand.u32 %v319, 4294901760
        %3160 = vmatpush.msra.mxu0 %v3159
        %v3161 = vand.u32 %v318, 4294901760
        %3162 = vmatpush.msra.mxu0 %v3161
        %v3163 = vand.u32 %v317, 4294901760
        %3164 = vmatpush.msra.mxu0 %v3163
        %v3165 = vand.u32 %v2983, 4294901760
        %3166 = vmatmul.f32.gmra.mxu0 %v3165
        %v3167 = vpop.f32.mrf.mxu0
        %v3168 = vadd.f32 %v3143, %v3167
        %3169 = vdwg.mxu0
        %v3170 = vmul.f32 %v3168, %v3168
        %v3172 = vrot.slane %v3170, 7
        %v3174 = vsub.f32 %v3168, %v3172
        %v3175 = vadd.f32 %v3174, 1e-05
        %v3176 = vrsqrt.pop %v3175
        %v3177 = vmul.f32 %v3176, %v3175
        %v3178 = vmul.f32 %v3177, %v3176
        %v3179 = vmul.f32 0.5, %v3178
        %v3180 = vsub.f32 1.5, %v3179
        %v3181 = vmul.f32 %v3176, %v3180
        %vm3182 = vweird.f32 %v3175
        %vm3183 = vweird.f32 %v3176
        %vm3184 = vmor %vm3182, %vm3183
        %v3185 = vsel %vm3184, %v3176, %v3181
        %v3186 = vperm.slane %v3168, 0
        %v3187 = vsub.f32 %v2923, %v3186
        %v3188 = vsub.f32 %v2924, %v3186
        %v3189 = vsub.f32 %v2925, %v3186
        %v3190 = vsub.f32 %v2926, %v3186
        %v3191 = vsub.f32 %v2927, %v3186
        %v3192 = vsub.f32 %v2928, %v3186
        %v3193 = vsub.f32 %v2929, %v3186
        %v3194 = vsub.f32 %v2930, %v3186
        %v3195 = vperm.slane %v3185, 1
        %v3196 = vmul.f32 %v3187, %v3195
        %v3197 = vmul.f32 %v3188, %v3195
        %v3198 = vmul.f32 %v3189, %v3195
        %v3199 = vmul.f32 %v3190, %v3195
        %v3200 = vmul.f32 %v3191, %v3195
        %v3201 = vmul.f32 %v3192, %v3195
        %v3202 = vmul.f32 %v3193, %v3195
        %v3203 = vmul.f32 %v3194, %v3195
        %v3204 = vperm.slane %v315, 4
        %v3205 = vmul.f32 %v3196, %v3204
        %v3206 = vmul.f32 %v3197, %v3204
        %v3207 = vmul.f32 %v3198, %v3204
        %v3208 = vmul.f32 %v3199, %v3204
        %v3209 = vmul.f32 %v3200, %v3204
        %v3210 = vmul.f32 %v3201, %v3204
        %v3211 = vmul.f32 %v3202, %v3204
        %v3212 = vmul.f32 %v3203, %v3204
        %v3213 = vperm.slane %v315, 5
        %v3214 = vadd.f32 %v3205, %v3213
        %v3215 = vadd.f32 %v3206, %v3213
        %v3216 = vadd.f32 %v3207, %v3213
        %v3217 = vadd.f32 %v3208, %v3213
        %v3218 = vadd.f32 %v3209, %v3213
        %v3219 = vadd.f32 %v3210, %v3213
        %v3220 = vadd.f32 %v3211, %v3213
        %v3221 = vadd.f32 %v3212, %v3213
        %v3222 = vmul.f32 %v3214, 0.5
        %v3223 = vmul.f32 %v3215, 0.5
        %v3224 = vmul.f32 %v3216, 0.5
        %v3225 = vmul.f32 %v3217, 0.5
        %v3226 = vmul.f32 %v3218, 0.5
        %v3227 = vmul.f32 %v3219, 0.5
        %v3228 = vmul.f32 %v3220, 0.5
        %v3229 = vmul.f32 %v3221, 0.5
        %v3230 = vmul.f32 %v3214, 0.70710677
        %v3231 = vmul.f32 %v3215, 0.70710677
        %v3232 = vmul.f32 %v3216, 0.70710677
        %v3233 = vmul.f32 %v3217, 0.70710677
        %v3234 = vmul.f32 %v3218, 0.70710677
        %v3235 = vmul.f32 %v3219, 0.70710677
        %v3236 = vmul.f32 %v3220, 0.70710677
        %v3237 = vmul.f32 %v3221, 0.70710677
        %v3238 = vand.u32 2147483647, %v3230
        %v3239 = vand.u32 2147483647, %v3231
        %v3240 = vand.u32 2147483647, %v3232
        %v3241 = vand.u32 2147483647, %v3233
        %v3242 = vand.u32 2147483647, %v3234
        %v3243 = vand.u32 2147483647, %v3235
        %v3244 = vand.u32 2147483647, %v3236
        %v3245 = vand.u32 2147483647, %v3237
        %v3246 = vmul.f32 %v3238, 0.5
        %v3247 = vmul.f32 %v3239, 0.5
        %v3248 = vmul.f32 %v3240, 0.5
        %v3249 = vmul.f32 %v3241, 0.5
        %v3250 = vmul.f32 %v3242, 0.5
        %v3251 = vmul.f32 %v3243, 0.5
        %v3252 = vmul.f32 %v3244, 0.5
        %v3253 = vmul.f32 %v3245, 0.5
        %v3254 = vadd.f32 %v3246, 1.0
        %v3255 = vadd.f32 %v3247, 1.0
        %v3256 = vadd.f32 %v3248, 1.0
        %v3257 = vadd.f32 %v3249, 1.0
        %v3258 = vadd.f32 %v3250, 1.0
        %v3259 = vadd.f32 %v3251, 1.0
        %v3260 = vadd.f32 %v3252, 1.0
        %v3261 = vadd.f32 %v3253, 1.0
        %v3262 = vrcp.pop %v3254
        %v3263 = vmul.f32 %v3254, %v3262
        %v3264 = vsub.f32 1.0, %v3263
        %v3265 = vmul.f32 %v3262, %v3264
        %v3266 = vadd.f32 %v3262, %v3265
        %vm3267 = vweird.f32 %v3254
        %vm3268 = vweird.f32 %v3262
        %vm3269 = vmor %vm3267, %vm3268
        %v3270 = vsel %vm3269, %v3262, %v3266
        %v3271 = vand.u32 2147483647, %v3254
        %vm3272 = vcmp.eq.f32.partialorder %v3271, 8.507059e+37
        %v3273 = vand.u32 %v3254, 2147483648
        %v3274 = vor.u32 1.1754944e-38, %v3273
        %v3275 = vsel %vm3272, %v3274, %v3270
        %v3276 = vmul.f32 1.0, %v3275
        %v3277 = vrcp.pop %v3255
        %v3278 = vmul.f32 %v3255, %v3277
        %v3279 = vsub.f32 1.0, %v3278
        %v3280 = vmul.f32 %v3277, %v3279
        %v3281 = vadd.f32 %v3277, %v3280
        %vm3282 = vweird.f32 %v3255
        %vm3283 = vweird.f32 %v3277
        %vm3284 = vmor %vm3282, %vm3283
        %v3285 = vsel %vm3284, %v3277, %v3281
        %v3286 = vand.u32 2147483647, %v3255
        %vm3287 = vcmp.eq.f32.partialorder %v3286, 8.507059e+37
        %v3288 = vand.u32 %v3255, 2147483648
        %v3289 = vor.u32 1.1754944e-38, %v3288
        %v3290 = vsel %vm3287, %v3289, %v3285
        %v3291 = vmul.f32 1.0, %v3290
        %v3292 = vrcp.pop %v3256
        %v3293 = vmul.f32 %v3256, %v3292
        %v3294 = vsub.f32 1.0, %v3293
        %v3295 = vmul.f32 %v3292, %v3294
        %v3296 = vadd.f32 %v3292, %v3295
        %vm3297 = vweird.f32 %v3256
        %vm3298 = vweird.f32 %v3292
        %vm3299 = vmor %vm3297, %vm3298
        %v3300 = vsel %vm3299, %v3292, %v3296
        %v3301 = vand.u32 2147483647, %v3256
        %vm3302 = vcmp.eq.f32.partialorder %v3301, 8.507059e+37
        %v3303 = vand.u32 %v3256, 2147483648
        %v3304 = vor.u32 1.1754944e-38, %v3303
        %v3305 = vsel %vm3302, %v3304, %v3300
        %v3306 = vmul.f32 1.0, %v3305
        %v3307 = vrcp.pop %v3257
        %v3308 = vmul.f32 %v3257, %v3307
        %v3309 = vsub.f32 1.0, %v3308
        %v3310 = vmul.f32 %v3307, %v3309
        %v3311 = vadd.f32 %v3307, %v3310
        %vm3312 = vweird.f32 %v3257
        %vm3313 = vweird.f32 %v3307
        %vm3314 = vmor %vm3312, %vm3313
        %v3315 = vsel %vm3314, %v3307, %v3311
        %v3316 = vand.u32 2147483647, %v3257
        %vm3317 = vcmp.eq.f32.partialorder %v3316, 8.507059e+37
        %v3318 = vand.u32 %v3257, 2147483648
        %v3319 = vor.u32 1.1754944e-38, %v3318
        %v3320 = vsel %vm3317, %v3319, %v3315
        %v3321 = vmul.f32 1.0, %v3320
        %v3322 = vrcp.pop %v3258
        %v3323 = vmul.f32 %v3258, %v3322
        %v3324 = vsub.f32 1.0, %v3323
        %v3325 = vmul.f32 %v3322, %v3324
        %v3326 = vadd.f32 %v3322, %v3325
        %vm3327 = vweird.f32 %v3258
        %vm3328 = vweird.f32 %v3322
        %vm3329 = vmor %vm3327, %vm3328
        %v3330 = vsel %vm3329, %v3322, %v3326
        %v3331 = vand.u32 2147483647, %v3258
        %vm3332 = vcmp.eq.f32.partialorder %v3331, 8.507059e+37
        %v3333 = vand.u32 %v3258, 2147483648
        %v3334 = vor.u32 1.1754944e-38, %v3333
        %v3335 = vsel %vm3332, %v3334, %v3330
        %v3336 = vmul.f32 1.0, %v3335
        %v3337 = vrcp.pop %v3259
        %v3338 = vmul.f32 %v3259, %v3337
        %v3339 = vsub.f32 1.0, %v3338
        %v3340 = vmul.f32 %v3337, %v3339
        %v3341 = vadd.f32 %v3337, %v3340
        %vm3342 = vweird.f32 %v3259
        %vm3343 = vweird.f32 %v3337
        %vm3344 = vmor %vm3342, %vm3343
        %v3345 = vsel %vm3344, %v3337, %v3341
        %v3346 = vand.u32 2147483647, %v3259
        %vm3347 = vcmp.eq.f32.partialorder %v3346, 8.507059e+37
        %v3348 = vand.u32 %v3259, 2147483648
        %v3349 = vor.u32 1.1754944e-38, %v3348
        %v3350 = vsel %vm3347, %v3349, %v3345
        %v3351 = vmul.f32 1.0, %v3350
        %v3352 = vrcp.pop %v3260
        %v3353 = vmul.f32 %v3260, %v3352
        %v3354 = vsub.f32 1.0, %v3353
        %v3355 = vmul.f32 %v3352, %v3354
        %v3356 = vadd.f32 %v3352, %v3355
        %vm3357 = vweird.f32 %v3260
        %vm3358 = vweird.f32 %v3352
        %vm3359 = vmor %vm3357, %vm3358
        %v3360 = vsel %vm3359, %v3352, %v3356
        %v3361 = vand.u32 2147483647, %v3260
        %vm3362 = vcmp.eq.f32.partialorder %v3361, 8.507059e+37
        %v3363 = vand.u32 %v3260, 2147483648
        %v3364 = vor.u32 1.1754944e-38, %v3363
        %v3365 = vsel %vm3362, %v3364, %v3360
        %v3366 = vmul.f32 1.0, %v3365
        %v3367 = vrcp.pop %v3261
        %v3368 = vmul.f32 %v3261, %v3367
        %v3369 = vsub.f32 1.0, %v3368
        %v3370 = vmul.f32 %v3367, %v3369
        %v3371 = vadd.f32 %v3367, %v3370
        %vm3372 = vweird.f32 %v3261
        %vm3373 = vweird.f32 %v3367
        %vm3374 = vmor %vm3372, %vm3373
        %v3375 = vsel %vm3374, %v3367, %v3371
        %v3376 = vand.u32 2147483647, %v3261
        %vm3377 = vcmp.eq.f32.partialorder %v3376, 8.507059e+37
        %v3378 = vand.u32 %v3261, 2147483648
        %v3379 = vor.u32 1.1754944e-38, %v3378
        %v3380 = vsel %vm3377, %v3379, %v3375
        %v3381 = vmul.f32 1.0, %v3380
        %v3382 = vmul.f32 %v3276, 0.17087276
        %v3383 = vmul.f32 %v3291, 0.17087276
        %v3384 = vmul.f32 %v3306, 0.17087276
        %v3385 = vmul.f32 %v3321, 0.17087276
        %v3386 = vmul.f32 %v3336, 0.17087276
        %v3387 = vmul.f32 %v3351, 0.17087276
        %v3388 = vmul.f32 %v3366, 0.17087276
        %v3389 = vmul.f32 %v3381, 0.17087276
        %v3390 = vadd.f32 %v3382, -0.82215226
        %v3391 = vadd.f32 %v3383, -0.82215226
        %v3392 = vadd.f32 %v3384, -0.82215226
        %v3393 = vadd.f32 %v3385, -0.82215226
        %v3394 = vadd.f32 %v3386, -0.82215226
        %v3395 = vadd.f32 %v3387, -0.82215226
        %v3396 = vadd.f32 %v3388, -0.82215226
        %v3397 = vadd.f32 %v3389, -0.82215226
        %v3398 = vmul.f32 %v3276, %v3390
        %v3399 = vmul.f32 %v3291, %v3391
        %v3400 = vmul.f32 %v3306, %v3392
        %v3401 = vmul.f32 %v3321, %v3393
        %v3402 = vmul.f32 %v3336, %v3394
        %v3403 = vmul.f32 %v3351, %v3395
        %v3404 = vmul.f32 %v3366, %v3396
        %v3405 = vmul.f32 %v3381, %v3397
        %v3406 = vadd.f32 %v3398, 1.4885159
        %v3407 = vadd.f32 %v3399, 1.4885159
        %v3408 = vadd.f32 %v3400, 1.4885159
        %v3409 = vadd.f32 %v3401, 1.4885159
        %v3410 = vadd.f32 %v3402, 1.4885159
        %v3411 = vadd.f32 %v3403, 1.4885159
        %v3412 = vadd.f32 %v3404, 1.4885159
        %v3413 = vadd.f32 %v3405, 1.4885159
        %v3414 = vmul.f32 %v3276, %v3406
        %v3415 = vmul.f32 %v3291, %v3407
        %v3416 = vmul.f32 %v3306, %v3408
        %v3417 = vmul.f32 %v3321, %v3409
        %v3418 = vmul.f32 %v3336, %v3410
        %v3419 = vmul.f32 %v3351, %v3411
        %v3420 = vmul.f32 %v3366, %v3412
        %v3421 = vmul.f32 %v3381, %v3413
        %v3422 = vadd.f32 %v3414, -1.135204
        %v3423 = vadd.f32 %v3415, -1.135204
        %v3424 = vadd.f32 %v3416, -1.135204
        %v3425 = vadd.f32 %v3417, -1.135204
        %v3426 = vadd.f32 %v3418, -1.135204
        %v3427 = vadd.f32 %v3419, -1.135204
        %v3428 = vadd.f32 %v3420, -1.135204
        %v3429 = vadd.f32 %v3421, -1.135204
        %v3430 = vmul.f32 %v3276, %v3422
        %v3431 = vmul.f32 %v3291, %v3423
        %v3432 = vmul.f32 %v3306, %v3424
        %v3433 = vmul.f32 %v3321, %v3425
        %v3434 = vmul.f32 %v3336, %v3426
        %v3435 = vmul.f32 %v3351, %v3427
        %v3436 = vmul.f32 %v3366, %v3428
        %v3437 = vmul.f32 %v3381, %v3429
        %v3438 = vadd.f32 %v3430, 0.27886808
        %v3439 = vadd.f32 %v3431, 0.27886808
        %v3440 = vadd.f32 %v3432, 0.27886808
        %v3441 = vadd.f32 %v3433, 0.27886808
        %v3442 = vadd.f32 %v3434, 0.27886808
        %v3443 = vadd.f32 %v3435, 0.27886808
        %v3444 = vadd.f32 %v3436, 0.27886808
        %v3445 = vadd.f32 %v3437, 0.27886808
        %v3446 = vmul.f32 %v3276, %v3438
        %v3447 = vmul.f32 %v3291, %v3439
        %v3448 = vmul.f32 %v3306, %v3440
        %v3449 = vmul.f32 %v3321, %v3441
        %v3450 = vmul.f32 %v3336, %v3442
        %v3451 = vmul.f32 %v3351, %v3443
        %v3452 = vmul.f32 %v3366, %v3444
        %v3453 = vmul.f32 %v3381, %v3445
        %v3454 = vadd.f32 %v3446, -0.18628806
        %v3455 = vadd.f32 %v3447, -0.18628806
        %v3456 = vadd.f32 %v3448, -0.18628806
        %v3457 = vadd.f32 %v3449, -0.18628806
        %v3458 = vadd.f32 %v3450, -0.18628806
        %v3459 = vadd.f32 %v3451, -0.18628806
        %v3460 = vadd.f32 %v3452, -0.18628806
        %v3461 = vadd.f32 %v3453, -0.18628806
        %v3462 = vmul.f32 %v3276, %v3454
        %v3463 = vmul.f32 %v3291, %v3455
        %v3464 = vmul.f32 %v3306, %v3456
        %v3465 = vmul.f32 %v3321, %v3457
        %v3466 = vmul.f32 %v3336, %v3458
        %v3467 = vmul.f32 %v3351, %v3459
        %v3468 = vmul.f32 %v3366, %v3460
        %v3469 = vmul.f32 %v3381, %v3461
        %v3470 = vadd.f32 %v3462, 0.09678418
        %v3471 = vadd.f32 %v3463, 0.09678418
        %v3472 = vadd.f32 %v3464, 0.09678418
        %v3473 = vadd.f32 %v3465, 0.09678418
        %v3474 = vadd.f32 %v3466, 0.09678418
        %v3475 = vadd.f32 %v3467, 0.09678418
        %v3476 = vadd.f32 %v3468, 0.09678418
        %v3477 = vadd.f32 %v3469, 0.09678418
        %v3478 = vmul.f32 %v3276, %v3470
        %v3479 = vmul.f32 %v3291, %v3471
        %v3480 = vmul.f32 %v3306, %v3472
        %v3481 = vmul.f32 %v3321, %v3473
        %v3482 = vmul.f32 %v3336, %v3474
        %v3483 = vmul.f32 %v3351, %v3475
        %v3484 = vmul.f32 %v3366, %v3476
        %v3485 = vmul.f32 %v3381, %v3477
        %v3486 = vadd.f32 %v3478, 0.37409195
        %v3487 = vadd.f32 %v3479, 0.37409195
        %v3488 = vadd.f32 %v3480, 0.37409195
        %v3489 = vadd.f32 %v3481, 0.37409195
        %v3490 = vadd.f32 %v3482, 0.37409195
        %v3491 = vadd.f32 %v3483, 0.37409195
        %v3492 = vadd.f32 %v3484, 0.37409195
        %v3493 = vadd.f32 %v3485, 0.37409195
        %v3494 = vmul.f32 %v3276, %v3486
        %v3495 = vmul.f32 %v3291, %v3487
        %v3496 = vmul.f32 %v3306, %v3488
        %v3497 = vmul.f32 %v3321, %v3489
        %v3498 = vmul.f32 %v3336, %v3490
        %v3499 = vmul.f32 %v3351, %v3491
        %v3500 = vmul.f32 %v3366, %v3492
        %v3501 = vmul.f32 %v3381, %v3493
        %v3502 = vadd.f32 %v3494, 1.0000237
        %v3503 = vadd.f32 %v3495, 1.0000237
        %v3504 = vadd.f32 %v3496, 1.0000237
        %v3505 = vadd.f32 %v3497, 1.0000237
        %v3506 = vadd.f32 %v3498, 1.0000237
        %v3507 = vadd.f32 %v3499, 1.0000237
        %v3508 = vadd.f32 %v3500, 1.0000237
        %v3509 = vadd.f32 %v3501, 1.0000237
        %v3510 = vmul.f32 %v3276, %v3502
        %v3511 = vmul.f32 %v3291, %v3503
        %v3512 = vmul.f32 %v3306, %v3504
        %v3513 = vmul.f32 %v3321, %v3505
        %v3514 = vmul.f32 %v3336, %v3506
        %v3515 = vmul.f32 %v3351, %v3507
        %v3516 = vmul.f32 %v3366, %v3508
        %v3517 = vmul.f32 %v3381, %v3509
        %v3518 = vadd.f32 %v3510, -1.2655122
        %v3519 = vadd.f32 %v3511, -1.2655122
        %v3520 = vadd.f32 %v3512, -1.2655122
        %v3521 = vadd.f32 %v3513, -1.2655122
        %v3522 = vadd.f32 %v3514, -1.2655122
        %v3523 = vadd.f32 %v3515, -1.2655122
        %v3524 = vadd.f32 %v3516, -1.2655122
        %v3525 = vadd.f32 %v3517, -1.2655122
        %v3526 = vsub.f32 0.0, %v3238
        %v3527 = vsub.f32 0.0, %v3239
        %v3528 = vsub.f32 0.0, %v3240
        %v3529 = vsub.f32 0.0, %v3241
        %v3530 = vsub.f32 0.0, %v3242
        %v3531 = vsub.f32 0.0, %v3243
        %v3532 = vsub.f32 0.0, %v3244
        %v3533 = vsub.f32 0.0, %v3245
        %v3534 = vmul.f32 %v3526, %v3238
        %v3535 = vmul.f32 %v3527, %v3239
        %v3536 = vmul.f32 %v3528, %v3240
        %v3537 = vmul.f32 %v3529, %v3241
        %v3538 = vmul.f32 %v3530, %v3242
        %v3539 = vmul.f32 %v3531, %v3243
        %v3540 = vmul.f32 %v3532, %v3244
        %v3541 = vmul.f32 %v3533, %v3245
        %v3542 = vadd.f32 %v3534, %v3518
        %v3543 = vadd.f32 %v3535, %v3519
        %v3544 = vadd.f32 %v3536, %v3520
        %v3545 = vadd.f32 %v3537, %v3521
        %v3546 = vadd.f32 %v3538, %v3522
        %v3547 = vadd.f32 %v3539, %v3523
        %v3548 = vadd.f32 %v3540, %v3524
        %v3549 = vadd.f32 %v3541, %v3525
        %v3550 = vmul.f32 %v3542, 1.442695
        %v3551 = vpow.pop %v3550
        %v3552 = vmul.f32 %v3543, 1.442695
        %v3553 = vpow.pop %v3552
        %v3554 = vmul.f32 %v3544, 1.442695
        %v3555 = vpow.pop %v3554
        %v3556 = vmul.f32 %v3545, 1.442695
        %v3557 = vpow.pop %v3556
        %v3558 = vmul.f32 %v3546, 1.442695
        %v3559 = vpow.pop %v3558
        %v3560 = vmul.f32 %v3547, 1.442695
        %v3561 = vpow.pop %v3560
        %v3562 = vmul.f32 %v3548, 1.442695
        %v3563 = vpow.pop %v3562
        %v3564 = vmul.f32 %v3549, 1.442695
        %v3565 = vpow.pop %v3564
        %v3566 = vmul.f32 %v3276, %v3551
        %v3567 = vmul.f32 %v3291, %v3553
        %v3568 = vmul.f32 %v3306, %v3555
        %v3569 = vmul.f32 %v3321, %v3557
        %v3570 = vmul.f32 %v3336, %v3559
        %v3571 = vmul.f32 %v3351, %v3561
        %v3572 = vmul.f32 %v3366, %v3563
        %v3573 = vmul.f32 %v3381, %v3565
        %vm3574 = vcmp.ge.f32.partialorder %v3230, 0.0
        %vm3575 = vcmp.ge.f32.partialorder %v3231, 0.0
        %vm3576 = vcmp.ge.f32.partialorder %v3232, 0.0
        %vm3577 = vcmp.ge.f32.partialorder %v3233, 0.0
        %vm3578 = vcmp.ge.f32.partialorder %v3234, 0.0
        %vm3579 = vcmp.ge.f32.partialorder %v3235, 0.0
        %vm3580 = vcmp.ge.f32.partialorder %v3236, 0.0
        %vm3581 = vcmp.ge.f32.partialorder %v3237, 0.0
        %v3582 = vsub.f32 1.0, %v3566
        %v3583 = vsub.f32 1.0, %v3567
        %v3584 = vsub.f32 1.0, %v3568
        %v3585 = vsub.f32 1.0, %v3569
        %v3586 = vsub.f32 1.0, %v3570
        %v3587 = vsub.f32 1.0, %v3571
        %v3588 = vsub.f32 1.0, %v3572
        %v3589 = vsub.f32 1.0, %v3573
        %v3590 = vsub.f32 %v3566, 1.0
        %v3591 = vsub.f32 %v3567, 1.0
        %v3592 = vsub.f32 %v3568, 1.0
        %v3593 = vsub.f32 %v3569, 1.0
        %v3594 = vsub.f32 %v3570, 1.0
        %v3595 = vsub.f32 %v3571, 1.0
        %v3596 = vsub.f32 %v3572, 1.0
        %v3597 = vsub.f32 %v3573, 1.0
        %v3598 = vsel %vm3574, %v3582, %v3590
        %v3599 = vsel %vm3575, %v3583, %v3591
        %v3600 = vsel %vm3576, %v3584, %v3592
        %v3601 = vsel %vm3577, %v3585, %v3593
        %v3602 = vsel %vm3578, %v3586, %v3594
        %v3603 = vsel %vm3579, %v3587, %v3595
        %v3604 = vsel %vm3580, %v3588, %v3596
        %v3605 = vsel %vm3581, %v3589, %v3597
        %v3606 = vadd.f32 %v3598, 1.0
        %v3607 = vadd.f32 %v3599, 1.0
        %v3608 = vadd.f32 %v3600, 1.0
        %v3609 = vadd.f32 %v3601, 1.0
        %v3610 = vadd.f32 %v3602, 1.0
        %v3611 = vadd.f32 %v3603, 1.0
        %v3612 = vadd.f32 %v3604, 1.0
        %v3613 = vadd.f32 %v3605, 1.0
        %v3614 = vmul.f32 %v3222, %v3606
        %v3615 = vmul.f32 %v3223, %v3607
        %v3616 = vmul.f32 %v3224, %v3608
        %v3617 = vmul.f32 %v3225, %v3609
        %v3618 = vmul.f32 %v3226, %v3610
        %v3619 = vmul.f32 %v3227, %v3611
        %v3620 = vmul.f32 %v3228, %v3612
        %v3621 = vmul.f32 %v3229, %v3613
        %v3622 = vld [vmem:[%s3] sm:$0xff]
        %v3623 = vld [vmem:[%s3 + $0x8] sm:$0xff]
        %v3624 = vld [vmem:[%s3 + $0x10] sm:$0xff]
        %v3625 = vld [vmem:[%s3 + $0x18] sm:$0xff]
        %v3626 = vperm.slane %v315, 6
        %v3628 = vsel %vm741, %v3614, 0
        %v3631 = vsel %vm741, %v3615, 0
        %v3634 = vsel %vm741, %v3616, 0
        %v3637 = vsel %vm741, %v3617, 0
        %v3640 = vsel %vm741, %v3618, 0
        %v3643 = vsel %vm741, %v3619, 0
        %v3646 = vsel %vm741, %v3620, 0
        %v3649 = vsel %vm741, %v3621, 0
        %3651 = vmatpush.msra.mxu0 0.0
        %3652 = vmatpush.msra.mxu0 0.0
        %3653 = vmatpush.msra.mxu0 0.0
        %3654 = vmatpush.msra.mxu0 0.0
        %3655 = vmatpush.msra.mxu0 0.0
        %3656 = vmatpush.msra.mxu0 0.0
        %3657 = vmatpush.msra.mxu0 0.0
        %3658 = vmatpush.msra.mxu0 0.0
        %3659 = vmatpush.msra.mxu0 0.0
        %3660 = vmatpush.msra.mxu0 0.0
        %3661 = vmatpush.msra.mxu0 0.0
        %3662 = vmatpush.msra.mxu0 0.0
        %v3663 = vand.u32 %v3625, 4294901760
        %3664 = vmatpush.msra.mxu0 %v3663
        %v3665 = vand.u32 %v3624, 4294901760
        %3666 = vmatpush.msra.mxu0 %v3665
        %v3667 = vand.u32 %v3623, 4294901760
        %3668 = vmatpush.msra.mxu0 %v3667
        %v3669 = vand.u32 %v3622, 4294901760
        %3670 = vmatpush.msra.mxu0 %v3669
        %v3671 = vand.u32 %v3628, 4294901760
        %v3672 = vsub.f32 %v3628, %v3671
        %v3673 = vand.u32 %v3672, 4294901760
        %v3674 = vsub.f32 %v3672, %v3673
        %v3675 = vand.u32 %v3674, 4294901760
        %3676 = vmatmul.f32.gmra.mxu0 %v3675
        %v3677 = vpop.f32.mrf.mxu0
        %v3678 = vadd.f32 %v3626, %v3677
        %v3679 = vand.u32 %v3631, 4294901760
        %v3680 = vsub.f32 %v3631, %v3679
        %v3681 = vand.u32 %v3680, 4294901760
        %v3682 = vsub.f32 %v3680, %v3681
        %v3683 = vand.u32 %v3682, 4294901760
        %3684 = vmatmul.f32.gmra.mxu0 %v3683
        %v3685 = vpop.f32.mrf.mxu0
        %v3686 = vadd.f32 %v3626, %v3685
        %v3687 = vand.u32 %v3634, 4294901760
        %v3688 = vsub.f32 %v3634, %v3687
        %v3689 = vand.u32 %v3688, 4294901760
        %v3690 = vsub.f32 %v3688, %v3689
        %v3691 = vand.u32 %v3690, 4294901760
        %3692 = vmatmul.f32.gmra.mxu0 %v3691
        %v3693 = vpop.f32.mrf.mxu0
        %v3694 = vadd.f32 %v3626, %v3693
        %v3695 = vand.u32 %v3637, 4294901760
        %v3696 = vsub.f32 %v3637, %v3695
        %v3697 = vand.u32 %v3696, 4294901760
        %v3698 = vsub.f32 %v3696, %v3697
        %v3699 = vand.u32 %v3698, 4294901760
        %3700 = vmatmul.f32.gmra.mxu0 %v3699
        %v3701 = vpop.f32.mrf.mxu0
        %v3702 = vadd.f32 %v3626, %v3701
        %v3703 = vand.u32 %v3640, 4294901760
        %v3704 = vsub.f32 %v3640, %v3703
        %v3705 = vand.u32 %v3704, 4294901760
        %v3706 = vsub.f32 %v3704, %v3705
        %v3707 = vand.u32 %v3706, 4294901760
        %3708 = vmatmul.f32.gmra.mxu0 %v3707
        %v3709 = vpop.f32.mrf.mxu0
        %v3710 = vadd.f32 %v3626, %v3709
        %v3711 = vand.u32 %v3643, 4294901760
        %v3712 = vsub.f32 %v3643, %v3711
        %v3713 = vand.u32 %v3712, 4294901760
        %v3714 = vsub.f32 %v3712, %v3713
        %v3715 = vand.u32 %v3714, 4294901760
        %3716 = vmatmul.f32.gmra.mxu0 %v3715
        %v3717 = vpop.f32.mrf.mxu0
        %v3718 = vadd.f32 %v3626, %v3717
        %v3719 = vand.u32 %v3646, 4294901760
        %v3720 = vsub.f32 %v3646, %v3719
        %v3721 = vand.u32 %v3720, 4294901760
        %v3722 = vsub.f32 %v3720, %v3721
        %v3723 = vand.u32 %v3722, 4294901760
        %3724 = vmatmul.f32.gmra.mxu0 %v3723
        %v3725 = vpop.f32.mrf.mxu0
        %v3726 = vadd.f32 %v3626, %v3725
        %v3727 = vand.u32 %v3649, 4294901760
        %v3728 = vsub.f32 %v3649, %v3727
        %v3729 = vand.u32 %v3728, 4294901760
        %v3730 = vsub.f32 %v3728, %v3729
        %v3731 = vand.u32 %v3730, 4294901760
        %3732 = vmatmul.f32.gmra.mxu0 %v3731
        %v3733 = vpop.f32.mrf.mxu0
        %v3734 = vadd.f32 %v3626, %v3733
        %3735 = vdwg.mxu0
        %3736 = vmatpush.msra.mxu0 0.0
        %3737 = vmatpush.msra.mxu0 0.0
        %3738 = vmatpush.msra.mxu0 0.0
        %3739 = vmatpush.msra.mxu0 0.0
        %3740 = vmatpush.msra.mxu0 0.0
        %3741 = vmatpush.msra.mxu0 0.0
        %3742 = vmatpush.msra.mxu0 0.0
        %3743 = vmatpush.msra.mxu0 0.0
        %3744 = vmatpush.msra.mxu0 0.0
        %3745 = vmatpush.msra.mxu0 0.0
        %3746 = vmatpush.msra.mxu0 0.0
        %3747 = vmatpush.msra.mxu0 0.0
        %v3748 = vand.u32 %v3625, 4294901760
        %v3749 = vsub.f32 %v3625, %v3748
        %v3750 = vand.u32 %v3749, 4294901760
        %v3751 = vsub.f32 %v3749, %v3750
        %v3752 = vand.u32 %v3751, 4294901760
        %3753 = vmatpush.msra.mxu0 %v3752
        %v3754 = vand.u32 %v3624, 4294901760
        %v3755 = vsub.f32 %v3624, %v3754
        %v3756 = vand.u32 %v3755, 4294901760
        %v3757 = vsub.f32 %v3755, %v3756
        %v3758 = vand.u32 %v3757, 4294901760
        %3759 = vmatpush.msra.mxu0 %v3758
        %v3760 = vand.u32 %v3623, 4294901760
        %v3761 = vsub.f32 %v3623, %v3760
        %v3762 = vand.u32 %v3761, 4294901760
        %v3763 = vsub.f32 %v3761, %v3762
        %v3764 = vand.u32 %v3763, 4294901760
        %3765 = vmatpush.msra.mxu0 %v3764
        %v3766 = vand.u32 %v3622, 4294901760
        %v3767 = vsub.f32 %v3622, %v3766
        %v3768 = vand.u32 %v3767, 4294901760
        %v3769 = vsub.f32 %v3767, %v3768
        %v3770 = vand.u32 %v3769, 4294901760
        %3771 = vmatpush.msra.mxu0 %v3770
        %v3772 = vand.u32 %v3628, 4294901760
        %3773 = vmatmul.f32.gmra.mxu0 %v3772
        %v3774 = vpop.f32.mrf.mxu0
        %v3775 = vadd.f32 %v3678, %v3774
        %v3776 = vand.u32 %v3631, 4294901760
        %3777 = vmatmul.f32.gmra.mxu0 %v3776
        %v3778 = vpop.f32.mrf.mxu0
        %v3779 = vadd.f32 %v3686, %v3778
        %v3780 = vand.u32 %v3634, 4294901760
        %3781 = vmatmul.f32.gmra.mxu0 %v3780
        %v3782 = vpop.f32.mrf.mxu0
        %v3783 = vadd.f32 %v3694, %v3782
        %v3784 = vand.u32 %v3637, 4294901760
        %3785 = vmatmul.f32.gmra.mxu0 %v3784
        %v3786 = vpop.f32.mrf.mxu0
        %v3787 = vadd.f32 %v3702, %v3786
        %v3788 = vand.u32 %v3640, 4294901760
        %3789 = vmatmul.f32.gmra.mxu0 %v3788
        %v3790 = vpop.f32.mrf.mxu0
        %v3791 = vadd.f32 %v3710, %v3790
        %v3792 = vand.u32 %v3643, 4294901760
        %3793 = vmatmul.f32.gmra.mxu0 %v3792
        %v3794 = vpop.f32.mrf.mxu0
        %v3795 = vadd.f32 %v3718, %v3794
        %v3796 = vand.u32 %v3646, 4294901760
        %3797 = vmatmul.f32.gmra.mxu0 %v3796
        %v3798 = vpop.f32.mrf.mxu0
        %v3799 = vadd.f32 %v3726, %v3798
        %v3800 = vand.u32 %v3649, 4294901760
        %3801 = vmatmul.f32.gmra.mxu0 %v3800
        %v3802 = vpop.f32.mrf.mxu0
        %v3803 = vadd.f32 %v3734, %v3802
        %3804 = vdwg.mxu0
        %3805 = vmatpush.msra.mxu0 0.0
        %3806 = vmatpush.msra.mxu0 0.0
        %3807 = vmatpush.msra.mxu0 0.0
        %3808 = vmatpush.msra.mxu0 0.0
        %3809 = vmatpush.msra.mxu0 0.0
        %3810 = vmatpush.msra.mxu0 0.0
        %3811 = vmatpush.msra.mxu0 0.0
        %3812 = vmatpush.msra.mxu0 0.0
        %3813 = vmatpush.msra.mxu0 0.0
        %3814 = vmatpush.msra.mxu0 0.0
        %3815 = vmatpush.msra.mxu0 0.0
        %3816 = vmatpush.msra.mxu0 0.0
        %v3817 = vand.u32 %v3625, 4294901760
        %v3818 = vsub.f32 %v3625, %v3817
        %3819 = vmatpush.msra.mxu0 %v3818
        %v3820 = vand.u32 %v3624, 4294901760
        %v3821 = vsub.f32 %v3624, %v3820
        %3822 = vmatpush.msra.mxu0 %v3821
        %v3823 = vand.u32 %v3623, 4294901760
        %v3824 = vsub.f32 %v3623, %v3823
        %3825 = vmatpush.msra.mxu0 %v3824
        %v3826 = vand.u32 %v3622, 4294901760
        %v3827 = vsub.f32 %v3622, %v3826
        %3828 = vmatpush.msra.mxu0 %v3827
        %v3829 = vand.u32 %v3628, 4294901760
        %v3830 = vsub.f32 %v3628, %v3829
        %3831 = vmatmul.f32.gmra.mxu0 %v3830
        %v3832 = vpop.f32.mrf.mxu0
        %v3833 = vadd.f32 %v3775, %v3832
        %v3834 = vand.u32 %v3631, 4294901760
        %v3835 = vsub.f32 %v3631, %v3834
        %3836 = vmatmul.f32.gmra.mxu0 %v3835
        %v3837 = vpop.f32.mrf.mxu0
        %v3838 = vadd.f32 %v3779, %v3837
        %v3839 = vand.u32 %v3634, 4294901760
        %v3840 = vsub.f32 %v3634, %v3839
        %3841 = vmatmul.f32.gmra.mxu0 %v3840
        %v3842 = vpop.f32.mrf.mxu0
        %v3843 = vadd.f32 %v3783, %v3842
        %v3844 = vand.u32 %v3637, 4294901760
        %v3845 = vsub.f32 %v3637, %v3844
        %3846 = vmatmul.f32.gmra.mxu0 %v3845
        %v3847 = vpop.f32.mrf.mxu0
        %v3848 = vadd.f32 %v3787, %v3847
        %v3849 = vand.u32 %v3640, 4294901760
        %v3850 = vsub.f32 %v3640, %v3849
        %3851 = vmatmul.f32.gmra.mxu0 %v3850
        %v3852 = vpop.f32.mrf.mxu0
        %v3853 = vadd.f32 %v3791, %v3852
        %v3854 = vand.u32 %v3643, 4294901760
        %v3855 = vsub.f32 %v3643, %v3854
        %3856 = vmatmul.f32.gmra.mxu0 %v3855
        %v3857 = vpop.f32.mrf.mxu0
        %v3858 = vadd.f32 %v3795, %v3857
        %v3859 = vand.u32 %v3646, 4294901760
        %v3860 = vsub.f32 %v3646, %v3859
        %3861 = vmatmul.f32.gmra.mxu0 %v3860
        %v3862 = vpop.f32.mrf.mxu0
        %v3863 = vadd.f32 %v3799, %v3862
        %v3864 = vand.u32 %v3649, 4294901760
        %v3865 = vsub.f32 %v3649, %v3864
        %3866 = vmatmul.f32.gmra.mxu0 %v3865
        %v3867 = vpop.f32.mrf.mxu0
        %v3868 = vadd.f32 %v3803, %v3867
        %3869 = vdwg.mxu0
        %3870 = vmatpush.msra.mxu0 0.0
        %3871 = vmatpush.msra.mxu0 0.0
        %3872 = vmatpush.msra.mxu0 0.0
        %3873 = vmatpush.msra.mxu0 0.0
        %3874 = vmatpush.msra.mxu0 0.0
        %3875 = vmatpush.msra.mxu0 0.0
        %3876 = vmatpush.msra.mxu0 0.0
        %3877 = vmatpush.msra.mxu0 0.0
        %3878 = vmatpush.msra.mxu0 0.0
        %3879 = vmatpush.msra.mxu0 0.0
        %3880 = vmatpush.msra.mxu0 0.0
        %3881 = vmatpush.msra.mxu0 0.0
        %v3882 = vand.u32 %v3625, 4294901760
        %3883 = vmatpush.msra.mxu0 %v3882
        %v3884 = vand.u32 %v3624, 4294901760
        %3885 = vmatpush.msra.mxu0 %v3884
        %v3886 = vand.u32 %v3623, 4294901760
        %3887 = vmatpush.msra.mxu0 %v3886
        %v3888 = vand.u32 %v3622, 4294901760
        %3889 = vmatpush.msra.mxu0 %v3888
        %v3890 = vand.u32 %v3628, 4294901760
        %v3891 = vsub.f32 %v3628, %v3890
        %v3892 = vand.u32 %v3891, 4294901760
        %3893 = vmatmul.f32.gmra.mxu0 %v3892
        %v3894 = vpop.f32.mrf.mxu0
        %v3895 = vadd.f32 %v3833, %v3894
        %v3896 = vand.u32 %v3631, 4294901760
        %v3897 = vsub.f32 %v3631, %v3896
        %v3898 = vand.u32 %v3897, 4294901760
        %3899 = vmatmul.f32.gmra.mxu0 %v3898
        %v3900 = vpop.f32.mrf.mxu0
        %v3901 = vadd.f32 %v3838, %v3900
        %v3902 = vand.u32 %v3634, 4294901760
        %v3903 = vsub.f32 %v3634, %v3902
        %v3904 = vand.u32 %v3903, 4294901760
        %3905 = vmatmul.f32.gmra.mxu0 %v3904
        %v3906 = vpop.f32.mrf.mxu0
        %v3907 = vadd.f32 %v3843, %v3906
        %v3908 = vand.u32 %v3637, 4294901760
        %v3909 = vsub.f32 %v3637, %v3908
        %v3910 = vand.u32 %v3909, 4294901760
        %3911 = vmatmul.f32.gmra.mxu0 %v3910
        %v3912 = vpop.f32.mrf.mxu0
        %v3913 = vadd.f32 %v3848, %v3912
        %v3914 = vand.u32 %v3640, 4294901760
        %v3915 = vsub.f32 %v3640, %v3914
        %v3916 = vand.u32 %v3915, 4294901760
        %3917 = vmatmul.f32.gmra.mxu0 %v3916
        %v3918 = vpop.f32.mrf.mxu0
        %v3919 = vadd.f32 %v3853, %v3918
        %v3920 = vand.u32 %v3643, 4294901760
        %v3921 = vsub.f32 %v3643, %v3920
        %v3922 = vand.u32 %v3921, 4294901760
        %3923 = vmatmul.f32.gmra.mxu0 %v3922
        %v3924 = vpop.f32.mrf.mxu0
        %v3925 = vadd.f32 %v3858, %v3924
        %v3926 = vand.u32 %v3646, 4294901760
        %v3927 = vsub.f32 %v3646, %v3926
        %v3928 = vand.u32 %v3927, 4294901760
        %3929 = vmatmul.f32.gmra.mxu0 %v3928
        %v3930 = vpop.f32.mrf.mxu0
        %v3931 = vadd.f32 %v3863, %v3930
        %v3932 = vand.u32 %v3649, 4294901760
        %v3933 = vsub.f32 %v3649, %v3932
        %v3934 = vand.u32 %v3933, 4294901760
        %3935 = vmatmul.f32.gmra.mxu0 %v3934
        %v3936 = vpop.f32.mrf.mxu0
        %v3937 = vadd.f32 %v3868, %v3936
        %3938 = vdwg.mxu0
        %3939 = vmatpush.msra.mxu0 0.0
        %3940 = vmatpush.msra.mxu0 0.0
        %3941 = vmatpush.msra.mxu0 0.0
        %3942 = vmatpush.msra.mxu0 0.0
        %3943 = vmatpush.msra.mxu0 0.0
        %3944 = vmatpush.msra.mxu0 0.0
        %3945 = vmatpush.msra.mxu0 0.0
        %3946 = vmatpush.msra.mxu0 0.0
        %3947 = vmatpush.msra.mxu0 0.0
        %3948 = vmatpush.msra.mxu0 0.0
        %3949 = vmatpush.msra.mxu0 0.0
        %3950 = vmatpush.msra.mxu0 0.0
        %v3951 = vand.u32 %v3625, 4294901760
        %v3952 = vsub.f32 %v3625, %v3951
        %v3953 = vand.u32 %v3952, 4294901760
        %3954 = vmatpush.msra.mxu0 %v3953
        %v3955 = vand.u32 %v3624, 4294901760
        %v3956 = vsub.f32 %v3624, %v3955
        %v3957 = vand.u32 %v3956, 4294901760
        %3958 = vmatpush.msra.mxu0 %v3957
        %v3959 = vand.u32 %v3623, 4294901760
        %v3960 = vsub.f32 %v3623, %v3959
        %v3961 = vand.u32 %v3960, 4294901760
        %3962 = vmatpush.msra.mxu0 %v3961
        %v3963 = vand.u32 %v3622, 4294901760
        %v3964 = vsub.f32 %v3622, %v3963
        %v3965 = vand.u32 %v3964, 4294901760
        %3966 = vmatpush.msra.mxu0 %v3965
        %v3967 = vand.u32 %v3628, 4294901760
        %3968 = vmatmul.f32.gmra.mxu0 %v3967
        %v3969 = vpop.f32.mrf.mxu0
        %v3970 = vadd.f32 %v3895, %v3969
        %v3971 = vand.u32 %v3631, 4294901760
        %3972 = vmatmul.f32.gmra.mxu0 %v3971
        %v3973 = vpop.f32.mrf.mxu0
        %v3974 = vadd.f32 %v3901, %v3973
        %v3975 = vand.u32 %v3634, 4294901760
        %3976 = vmatmul.f32.gmra.mxu0 %v3975
        %v3977 = vpop.f32.mrf.mxu0
        %v3978 = vadd.f32 %v3907, %v3977
        %v3979 = vand.u32 %v3637, 4294901760
        %3980 = vmatmul.f32.gmra.mxu0 %v3979
        %v3981 = vpop.f32.mrf.mxu0
        %v3982 = vadd.f32 %v3913, %v3981
        %v3983 = vand.u32 %v3640, 4294901760
        %3984 = vmatmul.f32.gmra.mxu0 %v3983
        %v3985 = vpop.f32.mrf.mxu0
        %v3986 = vadd.f32 %v3919, %v3985
        %v3987 = vand.u32 %v3643, 4294901760
        %3988 = vmatmul.f32.gmra.mxu0 %v3987
        %v3989 = vpop.f32.mrf.mxu0
        %v3990 = vadd.f32 %v3925, %v3989
        %v3991 = vand.u32 %v3646, 4294901760
        %3992 = vmatmul.f32.gmra.mxu0 %v3991
        %v3993 = vpop.f32.mrf.mxu0
        %v3994 = vadd.f32 %v3931, %v3993
        %v3995 = vand.u32 %v3649, 4294901760
        %3996 = vmatmul.f32.gmra.mxu0 %v3995
        %v3997 = vpop.f32.mrf.mxu0
        %v3998 = vadd.f32 %v3937, %v3997
        %3999 = vdwg.mxu0
        %4000 = vmatpush.msra.mxu0 0.0
        %4001 = vmatpush.msra.mxu0 0.0
        %4002 = vmatpush.msra.mxu0 0.0
        %4003 = vmatpush.msra.mxu0 0.0
        %4004 = vmatpush.msra.mxu0 0.0
        %4005 = vmatpush.msra.mxu0 0.0
        %4006 = vmatpush.msra.mxu0 0.0
        %4007 = vmatpush.msra.mxu0 0.0
        %4008 = vmatpush.msra.mxu0 0.0
        %4009 = vmatpush.msra.mxu0 0.0
        %4010 = vmatpush.msra.mxu0 0.0
        %4011 = vmatpush.msra.mxu0 0.0
        %v4012 = vand.u32 %v3625, 4294901760
        %4013 = vmatpush.msra.mxu0 %v4012
        %v4014 = vand.u32 %v3624, 4294901760
        %4015 = vmatpush.msra.mxu0 %v4014
        %v4016 = vand.u32 %v3623, 4294901760
        %4017 = vmatpush.msra.mxu0 %v4016
        %v4018 = vand.u32 %v3622, 4294901760
        %4019 = vmatpush.msra.mxu0 %v4018
        %v4020 = vand.u32 %v3628, 4294901760
        %4021 = vmatmul.f32.gmra.mxu0 %v4020
        %v4022 = vpop.f32.mrf.mxu0
        %v4023 = vadd.f32 %v3970, %v4022
        %v4024 = vand.u32 %v3631, 4294901760
        %4025 = vmatmul.f32.gmra.mxu0 %v4024
        %v4026 = vpop.f32.mrf.mxu0
        %v4027 = vadd.f32 %v3974, %v4026
        %v4028 = vand.u32 %v3634, 4294901760
        %4029 = vmatmul.f32.gmra.mxu0 %v4028
        %v4030 = vpop.f32.mrf.mxu0
        %v4031 = vadd.f32 %v3978, %v4030
        %v4032 = vand.u32 %v3637, 4294901760
        %4033 = vmatmul.f32.gmra.mxu0 %v4032
        %v4034 = vpop.f32.mrf.mxu0
        %v4035 = vadd.f32 %v3982, %v4034
        %v4036 = vand.u32 %v3640, 4294901760
        %4037 = vmatmul.f32.gmra.mxu0 %v4036
        %v4038 = vpop.f32.mrf.mxu0
        %v4039 = vadd.f32 %v3986, %v4038
        %v4040 = vand.u32 %v3643, 4294901760
        %4041 = vmatmul.f32.gmra.mxu0 %v4040
        %v4042 = vpop.f32.mrf.mxu0
        %v4043 = vadd.f32 %v3990, %v4042
        %v4044 = vand.u32 %v3646, 4294901760
        %4045 = vmatmul.f32.gmra.mxu0 %v4044
        %v4046 = vpop.f32.mrf.mxu0
        %v4047 = vadd.f32 %v3994, %v4046
        %v4048 = vand.u32 %v3649, 4294901760
        %4049 = vmatmul.f32.gmra.mxu0 %v4048
        %v4050 = vpop.f32.mrf.mxu0
        %v4051 = vadd.f32 %v3998, %v4050
        %4052 = vdwg.mxu0
        %v4053 = vadd.f32 %v4023, %v4027
        %v4054 = vadd.f32 %v4053, %v4031
        %v4055 = vadd.f32 %v4054, %v4035
        %v4056 = vadd.f32 %v4055, %v4039
        %v4057 = vadd.f32 %v4056, %v4043
        %v4058 = vadd.f32 %v4057, %v4047
        %v4059 = vadd.f32 %v4058, %v4051
        %v4060 = vrot.slane %v4059, 4
        %v4061 = vadd.f32 %v4059, %v4060
        %v4062 = vrot.slane %v4061, 2
        %v4063 = vadd.f32 %v4061, %v4062
        %v4064 = vrot.slane %v4063, 1
        %v4065 = vadd.f32 %v4063, %v4064
        %v4066 = vmul.f32 %v4023, %v4023
        %v4067 = vmul.f32 %v4027, %v4027
        %v4068 = vmul.f32 %v4031, %v4031
        %v4069 = vmul.f32 %v4035, %v4035
        %v4070 = vmul.f32 %v4039, %v4039
        %v4071 = vmul.f32 %v4043, %v4043
        %v4072 = vmul.f32 %v4047, %v4047
        %v4073 = vmul.f32 %v4051, %v4051
        %v4074 = vadd.f32 %v4066, %v4067
        %v4075 = vadd.f32 %v4074, %v4068
        %v4076 = vadd.f32 %v4075, %v4069
        %v4077 = vadd.f32 %v4076, %v4070
        %v4078 = vadd.f32 %v4077, %v4071
        %v4079 = vadd.f32 %v4078, %v4072
        %v4080 = vadd.f32 %v4079, %v4073
        %v4081 = vrot.slane %v4080, 4
        %v4082 = vadd.f32 %v4080, %v4081
        %v4083 = vrot.slane %v4082, 2
        %v4084 = vadd.f32 %v4082, %v4083
        %v4085 = vrot.slane %v4084, 1
        %v4086 = vadd.f32 %v4084, %v4085
        %v4087 = vsel %vm792, %v4065, %v4086
        %v4088 = vand.u32 %v336, 4294901760
        %4089 = vmatpush.msra.mxu0 %v4088
        %v4090 = vand.u32 %v335, 4294901760
        %4091 = vmatpush.msra.mxu0 %v4090
        %v4092 = vand.u32 %v334, 4294901760
        %4093 = vmatpush.msra.mxu0 %v4092
        %v4094 = vand.u32 %v333, 4294901760
        %4095 = vmatpush.msra.mxu0 %v4094
        %v4096 = vand.u32 %v332, 4294901760
        %4097 = vmatpush.msra.mxu0 %v4096
        %v4098 = vand.u32 %v331, 4294901760
        %4099 = vmatpush.msra.mxu0 %v4098
        %v4100 = vand.u32 %v330, 4294901760
        %4101 = vmatpush.msra.mxu0 %v4100
        %v4102 = vand.u32 %v329, 4294901760
        %4103 = vmatpush.msra.mxu0 %v4102
        %v4104 = vand.u32 %v328, 4294901760
        %4105 = vmatpush.msra.mxu0 %v4104
        %v4106 = vand.u32 %v327, 4294901760
        %4107 = vmatpush.msra.mxu0 %v4106
        %v4108 = vand.u32 %v326, 4294901760
        %4109 = vmatpush.msra.mxu0 %v4108
        %v4110 = vand.u32 %v325, 4294901760
        %4111 = vmatpush.msra.mxu0 %v4110
        %v4112 = vand.u32 %v324, 4294901760
        %4113 = vmatpush.msra.mxu0 %v4112
        %v4114 = vand.u32 %v323, 4294901760
        %4115 = vmatpush.msra.mxu0 %v4114
        %v4116 = vand.u32 %v322, 4294901760
        %4117 = vmatpush.msra.mxu0 %v4116
        %v4118 = vand.u32 %v321, 4294901760
        %4119 = vmatpush.msra.mxu0 %v4118
        %v4120 = vand.u32 %v4087, 4294901760
        %v4121 = vsub.f32 %v4087, %v4120
        %v4122 = vand.u32 %v4121, 4294901760
        %v4123 = vsub.f32 %v4121, %v4122
        %v4124 = vand.u32 %v4123, 4294901760
        %4125 = vmatmul.f32.gmra.mxu0 %v4124
        %v4126 = vpop.f32.mrf.mxu0
        %v4127 = vadd.f32 0.0, %v4126
        %4128 = vdwg.mxu0
        %v4129 = vand.u32 %v336, 4294901760
        %v4130 = vsub.f32 %v336, %v4129
        %v4131 = vand.u32 %v4130, 4294901760
        %v4132 = vsub.f32 %v4130, %v4131
        %v4133 = vand.u32 %v4132, 4294901760
        %4134 = vmatpush.msra.mxu0 %v4133
        %v4135 = vand.u32 %v335, 4294901760
        %v4136 = vsub.f32 %v335, %v4135
        %v4137 = vand.u32 %v4136, 4294901760
        %v4138 = vsub.f32 %v4136, %v4137
        %v4139 = vand.u32 %v4138, 4294901760
        %4140 = vmatpush.msra.mxu0 %v4139
        %v4141 = vand.u32 %v334, 4294901760
        %v4142 = vsub.f32 %v334, %v4141
        %v4143 = vand.u32 %v4142, 4294901760
        %v4144 = vsub.f32 %v4142, %v4143
        %v4145 = vand.u32 %v4144, 4294901760
        %4146 = vmatpush.msra.mxu0 %v4145
        %v4147 = vand.u32 %v333, 4294901760
        %v4148 = vsub.f32 %v333, %v4147
        %v4149 = vand.u32 %v4148, 4294901760
        %v4150 = vsub.f32 %v4148, %v4149
        %v4151 = vand.u32 %v4150, 4294901760
        %4152 = vmatpush.msra.mxu0 %v4151
        %v4153 = vand.u32 %v332, 4294901760
        %v4154 = vsub.f32 %v332, %v4153
        %v4155 = vand.u32 %v4154, 4294901760
        %v4156 = vsub.f32 %v4154, %v4155
        %v4157 = vand.u32 %v4156, 4294901760
        %4158 = vmatpush.msra.mxu0 %v4157
        %v4159 = vand.u32 %v331, 4294901760
        %v4160 = vsub.f32 %v331, %v4159
        %v4161 = vand.u32 %v4160, 4294901760
        %v4162 = vsub.f32 %v4160, %v4161
        %v4163 = vand.u32 %v4162, 4294901760
        %4164 = vmatpush.msra.mxu0 %v4163
        %v4165 = vand.u32 %v330, 4294901760
        %v4166 = vsub.f32 %v330, %v4165
        %v4167 = vand.u32 %v4166, 4294901760
        %v4168 = vsub.f32 %v4166, %v4167
        %v4169 = vand.u32 %v4168, 4294901760
        %4170 = vmatpush.msra.mxu0 %v4169
        %v4171 = vand.u32 %v329, 4294901760
        %v4172 = vsub.f32 %v329, %v4171
        %v4173 = vand.u32 %v4172, 4294901760
        %v4174 = vsub.f32 %v4172, %v4173
        %v4175 = vand.u32 %v4174, 4294901760
        %4176 = vmatpush.msra.mxu0 %v4175
        %v4177 = vand.u32 %v328, 4294901760
        %v4178 = vsub.f32 %v328, %v4177
        %v4179 = vand.u32 %v4178, 4294901760
        %v4180 = vsub.f32 %v4178, %v4179
        %v4181 = vand.u32 %v4180, 4294901760
        %4182 = vmatpush.msra.mxu0 %v4181
        %v4183 = vand.u32 %v327, 4294901760
        %v4184 = vsub.f32 %v327, %v4183
        %v4185 = vand.u32 %v4184, 4294901760
        %v4186 = vsub.f32 %v4184, %v4185
        %v4187 = vand.u32 %v4186, 4294901760
        %4188 = vmatpush.msra.mxu0 %v4187
        %v4189 = vand.u32 %v326, 4294901760
        %v4190 = vsub.f32 %v326, %v4189
        %v4191 = vand.u32 %v4190, 4294901760
        %v4192 = vsub.f32 %v4190, %v4191
        %v4193 = vand.u32 %v4192, 4294901760
        %4194 = vmatpush.msra.mxu0 %v4193
        %v4195 = vand.u32 %v325, 4294901760
        %v4196 = vsub.f32 %v325, %v4195
        %v4197 = vand.u32 %v4196, 4294901760
        %v4198 = vsub.f32 %v4196, %v4197
        %v4199 = vand.u32 %v4198, 4294901760
        %4200 = vmatpush.msra.mxu0 %v4199
        %v4201 = vand.u32 %v324, 4294901760
        %v4202 = vsub.f32 %v324, %v4201
        %v4203 = vand.u32 %v4202, 4294901760
        %v4204 = vsub.f32 %v4202, %v4203
        %v4205 = vand.u32 %v4204, 4294901760
        %4206 = vmatpush.msra.mxu0 %v4205
        %v4207 = vand.u32 %v323, 4294901760
        %v4208 = vsub.f32 %v323, %v4207
        %v4209 = vand.u32 %v4208, 4294901760
        %v4210 = vsub.f32 %v4208, %v4209
        %v4211 = vand.u32 %v4210, 4294901760
        %4212 = vmatpush.msra.mxu0 %v4211
        %v4213 = vand.u32 %v322, 4294901760
        %v4214 = vsub.f32 %v322, %v4213
        %v4215 = vand.u32 %v4214, 4294901760
        %v4216 = vsub.f32 %v4214, %v4215
        %v4217 = vand.u32 %v4216, 4294901760
        %4218 = vmatpush.msra.mxu0 %v4217
        %v4219 = vand.u32 %v321, 4294901760
        %v4220 = vsub.f32 %v321, %v4219
        %v4221 = vand.u32 %v4220, 4294901760
        %v4222 = vsub.f32 %v4220, %v4221
        %v4223 = vand.u32 %v4222, 4294901760
        %4224 = vmatpush.msra.mxu0 %v4223
        %v4225 = vand.u32 %v4087, 4294901760
        %4226 = vmatmul.f32.gmra.mxu0 %v4225
        %v4227 = vpop.f32.mrf.mxu0
        %v4228 = vadd.f32 %v4127, %v4227
        %4229 = vdwg.mxu0
        %v4230 = vand.u32 %v336, 4294901760
        %v4231 = vsub.f32 %v336, %v4230
        %4232 = vmatpush.msra.mxu0 %v4231
        %v4233 = vand.u32 %v335, 4294901760
        %v4234 = vsub.f32 %v335, %v4233
        %4235 = vmatpush.msra.mxu0 %v4234
        %v4236 = vand.u32 %v334, 4294901760
        %v4237 = vsub.f32 %v334, %v4236
        %4238 = vmatpush.msra.mxu0 %v4237
        %v4239 = vand.u32 %v333, 4294901760
        %v4240 = vsub.f32 %v333, %v4239
        %4241 = vmatpush.msra.mxu0 %v4240
        %v4242 = vand.u32 %v332, 4294901760
        %v4243 = vsub.f32 %v332, %v4242
        %4244 = vmatpush.msra.mxu0 %v4243
        %v4245 = vand.u32 %v331, 4294901760
        %v4246 = vsub.f32 %v331, %v4245
        %4247 = vmatpush.msra.mxu0 %v4246
        %v4248 = vand.u32 %v330, 4294901760
        %v4249 = vsub.f32 %v330, %v4248
        %4250 = vmatpush.msra.mxu0 %v4249
        %v4251 = vand.u32 %v329, 4294901760
        %v4252 = vsub.f32 %v329, %v4251
        %4253 = vmatpush.msra.mxu0 %v4252
        %v4254 = vand.u32 %v328, 4294901760
        %v4255 = vsub.f32 %v328, %v4254
        %4256 = vmatpush.msra.mxu0 %v4255
        %v4257 = vand.u32 %v327, 4294901760
        %v4258 = vsub.f32 %v327, %v4257
        %4259 = vmatpush.msra.mxu0 %v4258
        %v4260 = vand.u32 %v326, 4294901760
        %v4261 = vsub.f32 %v326, %v4260
        %4262 = vmatpush.msra.mxu0 %v4261
        %v4263 = vand.u32 %v325, 4294901760
        %v4264 = vsub.f32 %v325, %v4263
        %4265 = vmatpush.msra.mxu0 %v4264
        %v4266 = vand.u32 %v324, 4294901760
        %v4267 = vsub.f32 %v324, %v4266
        %4268 = vmatpush.msra.mxu0 %v4267
        %v4269 = vand.u32 %v323, 4294901760
        %v4270 = vsub.f32 %v323, %v4269
        %4271 = vmatpush.msra.mxu0 %v4270
        %v4272 = vand.u32 %v322, 4294901760
        %v4273 = vsub.f32 %v322, %v4272
        %4274 = vmatpush.msra.mxu0 %v4273
        %v4275 = vand.u32 %v321, 4294901760
        %v4276 = vsub.f32 %v321, %v4275
        %4277 = vmatpush.msra.mxu0 %v4276
        %v4278 = vand.u32 %v4087, 4294901760
        %v4279 = vsub.f32 %v4087, %v4278
        %4280 = vmatmul.f32.gmra.mxu0 %v4279
        %v4281 = vpop.f32.mrf.mxu0
        %v4282 = vadd.f32 %v4228, %v4281
        %4283 = vdwg.mxu0
        %v4284 = vand.u32 %v336, 4294901760
        %4285 = vmatpush.msra.mxu0 %v4284
        %v4286 = vand.u32 %v335, 4294901760
        %4287 = vmatpush.msra.mxu0 %v4286
        %v4288 = vand.u32 %v334, 4294901760
        %4289 = vmatpush.msra.mxu0 %v4288
        %v4290 = vand.u32 %v333, 4294901760
        %4291 = vmatpush.msra.mxu0 %v4290
        %v4292 = vand.u32 %v332, 4294901760
        %4293 = vmatpush.msra.mxu0 %v4292
        %v4294 = vand.u32 %v331, 4294901760
        %4295 = vmatpush.msra.mxu0 %v4294
        %v4296 = vand.u32 %v330, 4294901760
        %4297 = vmatpush.msra.mxu0 %v4296
        %v4298 = vand.u32 %v329, 4294901760
        %4299 = vmatpush.msra.mxu0 %v4298
        %v4300 = vand.u32 %v328, 4294901760
        %4301 = vmatpush.msra.mxu0 %v4300
        %v4302 = vand.u32 %v327, 4294901760
        %4303 = vmatpush.msra.mxu0 %v4302
        %v4304 = vand.u32 %v326, 4294901760
        %4305 = vmatpush.msra.mxu0 %v4304
        %v4306 = vand.u32 %v325, 4294901760
        %4307 = vmatpush.msra.mxu0 %v4306
        %v4308 = vand.u32 %v324, 4294901760
        %4309 = vmatpush.msra.mxu0 %v4308
        %v4310 = vand.u32 %v323, 4294901760
        %4311 = vmatpush.msra.mxu0 %v4310
        %v4312 = vand.u32 %v322, 4294901760
        %4313 = vmatpush.msra.mxu0 %v4312
        %v4314 = vand.u32 %v321, 4294901760
        %4315 = vmatpush.msra.mxu0 %v4314
        %v4316 = vand.u32 %v4087, 4294901760
        %v4317 = vsub.f32 %v4087, %v4316
        %v4318 = vand.u32 %v4317, 4294901760
        %4319 = vmatmul.f32.gmra.mxu0 %v4318
        %v4320 = vpop.f32.mrf.mxu0
        %v4321 = vadd.f32 %v4282, %v4320
        %4322 = vdwg.mxu0
        %v4323 = vand.u32 %v336, 4294901760
        %v4324 = vsub.f32 %v336, %v4323
        %v4325 = vand.u32 %v4324, 4294901760
        %4326 = vmatpush.msra.mxu0 %v4325
        %v4327 = vand.u32 %v335, 4294901760
        %v4328 = vsub.f32 %v335, %v4327
        %v4329 = vand.u32 %v4328, 4294901760
        %4330 = vmatpush.msra.mxu0 %v4329
        %v4331 = vand.u32 %v334, 4294901760
        %v4332 = vsub.f32 %v334, %v4331
        %v4333 = vand.u32 %v4332, 4294901760
        %4334 = vmatpush.msra.mxu0 %v4333
        %v4335 = vand.u32 %v333, 4294901760
        %v4336 = vsub.f32 %v333, %v4335
        %v4337 = vand.u32 %v4336, 4294901760
        %4338 = vmatpush.msra.mxu0 %v4337
        %v4339 = vand.u32 %v332, 4294901760
        %v4340 = vsub.f32 %v332, %v4339
        %v4341 = vand.u32 %v4340, 4294901760
        %4342 = vmatpush.msra.mxu0 %v4341
        %v4343 = vand.u32 %v331, 4294901760
        %v4344 = vsub.f32 %v331, %v4343
        %v4345 = vand.u32 %v4344, 4294901760
        %4346 = vmatpush.msra.mxu0 %v4345
        %v4347 = vand.u32 %v330, 4294901760
        %v4348 = vsub.f32 %v330, %v4347
        %v4349 = vand.u32 %v4348, 4294901760
        %4350 = vmatpush.msra.mxu0 %v4349
        %v4351 = vand.u32 %v329, 4294901760
        %v4352 = vsub.f32 %v329, %v4351
        %v4353 = vand.u32 %v4352, 4294901760
        %4354 = vmatpush.msra.mxu0 %v4353
        %v4355 = vand.u32 %v328, 4294901760
        %v4356 = vsub.f32 %v328, %v4355
        %v4357 = vand.u32 %v4356, 4294901760
        %4358 = vmatpush.msra.mxu0 %v4357
        %v4359 = vand.u32 %v327, 4294901760
        %v4360 = vsub.f32 %v327, %v4359
        %v4361 = vand.u32 %v4360, 4294901760
        %4362 = vmatpush.msra.mxu0 %v4361
        %v4363 = vand.u32 %v326, 4294901760
        %v4364 = vsub.f32 %v326, %v4363
        %v4365 = vand.u32 %v4364, 4294901760
        %4366 = vmatpush.msra.mxu0 %v4365
        %v4367 = vand.u32 %v325, 4294901760
        %v4368 = vsub.f32 %v325, %v4367
        %v4369 = vand.u32 %v4368, 4294901760
        %4370 = vmatpush.msra.mxu0 %v4369
        %v4371 = vand.u32 %v324, 4294901760
        %v4372 = vsub.f32 %v324, %v4371
        %v4373 = vand.u32 %v4372, 4294901760
        %4374 = vmatpush.msra.mxu0 %v4373
        %v4375 = vand.u32 %v323, 4294901760
        %v4376 = vsub.f32 %v323, %v4375
        %v4377 = vand.u32 %v4376, 4294901760
        %4378 = vmatpush.msra.mxu0 %v4377
        %v4379 = vand.u32 %v322, 4294901760
        %v4380 = vsub.f32 %v322, %v4379
        %v4381 = vand.u32 %v4380, 4294901760
        %4382 = vmatpush.msra.mxu0 %v4381
        %v4383 = vand.u32 %v321, 4294901760
        %v4384 = vsub.f32 %v321, %v4383
        %v4385 = vand.u32 %v4384, 4294901760
        %4386 = vmatpush.msra.mxu0 %v4385
        %v4387 = vand.u32 %v4087, 4294901760
        %4388 = vmatmul.f32.gmra.mxu0 %v4387
        %v4389 = vpop.f32.mrf.mxu0
        %v4390 = vadd.f32 %v4321, %v4389
        %4391 = vdwg.mxu0
        %v4392 = vand.u32 %v336, 4294901760
        %4393 = vmatpush.msra.mxu0 %v4392
        %v4394 = vand.u32 %v335, 4294901760
        %4395 = vmatpush.msra.mxu0 %v4394
        %v4396 = vand.u32 %v334, 4294901760
        %4397 = vmatpush.msra.mxu0 %v4396
        %v4398 = vand.u32 %v333, 4294901760
        %4399 = vmatpush.msra.mxu0 %v4398
        %v4400 = vand.u32 %v332, 4294901760
        %4401 = vmatpush.msra.mxu0 %v4400
        %v4402 = vand.u32 %v331, 4294901760
        %4403 = vmatpush.msra.mxu0 %v4402
        %v4404 = vand.u32 %v330, 4294901760
        %4405 = vmatpush.msra.mxu0 %v4404
        %v4406 = vand.u32 %v329, 4294901760
        %4407 = vmatpush.msra.mxu0 %v4406
        %v4408 = vand.u32 %v328, 4294901760
        %4409 = vmatpush.msra.mxu0 %v4408
        %v4410 = vand.u32 %v327, 4294901760
        %4411 = vmatpush.msra.mxu0 %v4410
        %v4412 = vand.u32 %v326, 4294901760
        %4413 = vmatpush.msra.mxu0 %v4412
        %v4414 = vand.u32 %v325, 4294901760
        %4415 = vmatpush.msra.mxu0 %v4414
        %v4416 = vand.u32 %v324, 4294901760
        %4417 = vmatpush.msra.mxu0 %v4416
        %v4418 = vand.u32 %v323, 4294901760
        %4419 = vmatpush.msra.mxu0 %v4418
        %v4420 = vand.u32 %v322, 4294901760
        %4421 = vmatpush.msra.mxu0 %v4420
        %v4422 = vand.u32 %v321, 4294901760
        %4423 = vmatpush.msra.mxu0 %v4422
        %v4424 = vand.u32 %v4087, 4294901760
        %4425 = vmatmul.f32.gmra.mxu0 %v4424
        %v4426 = vpop.f32.mrf.mxu0
        %v4427 = vadd.f32 %v4390, %v4426
        %4428 = vdwg.mxu0
        %v4429 = vmul.f32 %v4427, %v4427
        %v4431 = vrot.slane %v4429, 7
        %v4433 = vsub.f32 %v4427, %v4431
        %v4434 = vadd.f32 %v4433, 1e-05
        %v4435 = vrsqrt.pop %v4434
        %v4436 = vmul.f32 %v4435, %v4434
        %v4437 = vmul.f32 %v4436, %v4435
        %v4438 = vmul.f32 0.5, %v4437
        %v4439 = vsub.f32 1.5, %v4438
        %v4440 = vmul.f32 %v4435, %v4439
        %vm4441 = vweird.f32 %v4434
        %vm4442 = vweird.f32 %v4435
        %vm4443 = vmor %vm4441, %vm4442
        %v4444 = vsel %vm4443, %v4435, %v4440
        %v4445 = vperm.slane %v4427, 0
        %v4446 = vsub.f32 %v4023, %v4445
        %v4447 = vsub.f32 %v4027, %v4445
        %v4448 = vsub.f32 %v4031, %v4445
        %v4449 = vsub.f32 %v4035, %v4445
        %v4450 = vsub.f32 %v4039, %v4445
        %v4451 = vsub.f32 %v4043, %v4445
        %v4452 = vsub.f32 %v4047, %v4445
        %v4453 = vsub.f32 %v4051, %v4445
        %v4454 = vperm.slane %v4444, 1
        %v4455 = vmul.f32 %v4446, %v4454
        %v4456 = vmul.f32 %v4447, %v4454
        %v4457 = vmul.f32 %v4448, %v4454
        %v4458 = vmul.f32 %v4449, %v4454
        %v4459 = vmul.f32 %v4450, %v4454
        %v4460 = vmul.f32 %v4451, %v4454
        %v4461 = vmul.f32 %v4452, %v4454
        %v4462 = vmul.f32 %v4453, %v4454
        %v4463 = vperm.slane %v315, 7
        %v4464 = vmul.f32 %v4455, %v4463
        %v4465 = vmul.f32 %v4456, %v4463
        %v4466 = vmul.f32 %v4457, %v4463
        %v4467 = vmul.f32 %v4458, %v4463
        %v4468 = vmul.f32 %v4459, %v4463
        %v4469 = vmul.f32 %v4460, %v4463
        %v4470 = vmul.f32 %v4461, %v4463
        %v4471 = vmul.f32 %v4462, %v4463
        %v4472 = vperm.slane %v316, 0
        %v4473 = vadd.f32 %v4464, %v4472
        %v4474 = vadd.f32 %v4465, %v4472
        %v4475 = vadd.f32 %v4466, %v4472
        %v4476 = vadd.f32 %v4467, %v4472
        %v4477 = vadd.f32 %v4468, %v4472
        %v4478 = vadd.f32 %v4469, %v4472
        %v4479 = vadd.f32 %v4470, %v4472
        %v4480 = vadd.f32 %v4471, %v4472
        %4481 = vst [vmem:[%s299] sm:$0xff] %v4473
        %4482 = vst [vmem:[%s299 + $0x8] sm:$0xff] %v4474
        %4483 = vst [vmem:[%s299 + $0x10] sm:$0xff] %v4475
        %4484 = vst [vmem:[%s299 + $0x18] sm:$0xff] %v4476
        %4485 = vst [vmem:[%s299 + $0x20] sm:$0xff] %v4477
        %4486 = vst [vmem:[%s299 + $0x28] sm:$0xff] %v4478
        %4487 = vst [vmem:[%s299 + $0x30] sm:$0xff] %v4479
        %4488 = vst [vmem:[%s299 + $0x38] sm:$0xff] %v4480
        %s4489 = sand.u32 %s203, 1
        %s4490 = scalar_lea.sflag [#allocation3], %s4489
        %s4491 = sand.u32 %s203, 1
        %s4492 = smul.addr %s4491, 64
        %s4493 = scalar_lea.vmem [#allocation2], %s4492
        // Predicated region
        $region53: #{tpu_custom_call.1} parent=51 // pred_check
          %p4494 = pneg %p213
        $region54: #{tpu_custom_call.1} parent=51 // pred_check_branch
          %4496 = sbr.rel (%p4494) target = $region56
        $region55: #{tpu_custom_call.1} parent=51 // pred_region
          %s4497 = smul.u32 8, %s22
          %4499 = vsyncadd %s4490, 0
          %s4500 = smul.addr %s4497, 8
          %s4501 = scalar_lea.hbm %s8, %s4500
          %s4502 = sshll.u32 %s4493, 4
          %s4503 = int_to_ptr.vmem [resolvable:$true] %s4502
          %s4504 = sshll.u32 %s4501, 4
          %s4505 = int_to_ptr.hbm [resolvable:$true] %s4504
          %4510 = dma.vmem_to_hbm [thread:$0]  %s4503, 1024, %s4505, %s4490, 128, 128, 8
        $region56: #{tpu_custom_call.1} parent=51 // pred_fallthru
          _
      $region52: #{tpu_custom_call.1} parent=5 // pred_fallthru
        _
      %p4511 = scmp.le.s32.totalorder 2, %s17
      // Predicated region
      $region57: #{tpu_custom_call.1} parent=5 // pred_check
        %p4512 = pneg %p4511
      $region58: #{tpu_custom_call.1} parent=5 // pred_check_branch
        %4514 = sbr.rel (%p4512) target = $region60
      $region59: #{tpu_custom_call.1} parent=5 // pred_region
        %s4515 = ssub.s32 %s17, 2
        // Predicated region
        $region61: #{tpu_custom_call.1} parent=59 // pred_check
          %p4516 = pneg %p219
        $region62: #{tpu_custom_call.1} parent=59 // pred_check_branch
          %4518 = sbr.rel (%p4516) target = $region64
        $region63: #{tpu_custom_call.1} parent=59 // pred_region
          %s4519 = sand.u32 %s204, 1
          %s4520 = scalar_lea.sflag [#allocation3], %s4519
          %s4521 = sand.u32 %s204, 1
          %s4522 = smul.addr %s4521, 64
          %s4523 = scalar_lea.vmem [#allocation2], %s4522
          %4525 = dma.done %s4520, 1024
        $region64: #{tpu_custom_call.1} parent=59 // pred_fallthru
          _
      $region60: #{tpu_custom_call.1} parent=5 // pred_fallthru
        _
    $region6: #{tpu_custom_call.1} parent=1 // loop_footer
      %s21 = sadd.s32 1, %s17
    $region7: #{tpu_custom_call.1} parent=1 // loop_footer_branch
      %16 = sbr.rel target = $region3
    $region8: #{tpu_custom_call.1} parent=1 // loop_exit
      _
    %4526 = vsyncpa [#allocation3], 1
    %s4527 = scalar_lea.sflag [#allocation3], 1
    %4528 = vsyncpa %s4527, 1

</llo_original>
